<compile_context>
chip_gen: v6e
topology: v6e:2x2x1
jax: 0.10.0
libtpu: 0.0.40
codegen_flags: <defaults>
</compile_context>

<pallas_src>
import functools

import jax
import jax.numpy as jnp
from jax import lax
from jax.experimental import pallas as pl
from jax.experimental.pallas import tpu as pltpu
import numpy as np

WIN = 4               # win = [4, 4, 4]
PAD = 1               # Conv3d padding=1
WIN_SIZE = float(WIN * WIN * WIN)
EPS = 1e-5


def _round_up(x, m):
    return ((x + m - 1) // m) * m


def _band(n_in, n_out):
    """Banded all-ones matrix B (n_in, n_out): B[i, o] = 1 iff input index i
    falls inside the conv window of output o (zero padding folded in)."""
    i = np.arange(n_in)[:, None]
    o = np.arange(n_out)[None, :]
    d = i - o
    return ((d >= -PAD) & (d <= WIN - 1 - PAD)).astype(np.float32)


@functools.lru_cache(maxsize=None)
def _build_operators(N, D, H, W):
    """Build the two int8 band operators (cached per shape)."""
    oD = D + 2 * PAD - WIN + 1
    oH = H + 2 * PAD - WIN + 1
    oW = W + 2 * PAD - WIN + 1
    HW, OHW = H * W, oH * oW
    ND, NOD = N * D, N * oD
    OHW_pad = _round_up(OHW, 128)      # lane-dense output tiles
    NOD_pad = _round_up(NOD, 8)        # sublane-aligned output rows

    # (H, W) window-sum operator; zero columns appended for lane padding.
    k_hw = np.zeros((HW, OHW_pad), np.float32)
    k_hw[:, :OHW] = np.kron(_band(H, oH), _band(W, oW))

    # D window-sum operator, block-diag over batch, zero rows appended for
    # sublane padding; replicated block-diag over the 5 stacked statistics so
    # the entire second pass is one matmul.
    b_nd = np.zeros((NOD_pad, ND), np.float32)
    b_nd[:NOD, :] = np.kron(np.eye(N, dtype=np.float32), _band(D, oD).T)
    big = np.kron(np.eye(5, dtype=np.float32), b_nd)        # (5*NOD_pad, 5*ND)

    total = N * oD * oH * oW
    return (k_hw.astype(np.int8), big.astype(np.int8),
            OHW_pad, NOD_pad, total)


def _make_cc_kernel(nod_pad, inv_total):
    inv_ws = 1.0 / WIN_SIZE

    def cc_kernel(i_ref, j_ref, khw_ref, big_ref, out_ref):
        I = i_ref[...]                                  # (N*D, H*W) f32
        J = j_ref[...]
        khw = khw_ref[...].astype(jnp.float32)          # (H*W, OHW_pad)  0/1
        big = big_ref[...].astype(jnp.float32)          # (5*NOD_pad, 5*N*D)

        # Stack the five statistics along sublanes -> the whole 4x4x4
        # window-sum reduction is exactly two MXU matmuls.
        lhs = jnp.concatenate([I, J, I * I, J * J, I * J], axis=0)
        s1 = jnp.dot(lhs, khw, preferred_element_type=jnp.float32)
        s2 = jnp.dot(big, s1, preferred_element_type=jnp.float32)

        # Consume statistics as slices; keep live ranges short.
        i_sum = s2[0 * nod_pad:1 * nod_pad]
        j_sum = s2[1 * nod_pad:2 * nod_pad]
        cross = s2[4 * nod_pad:5 * nod_pad] - i_sum * j_sum * inv_ws
        num = cross * cross
        i_var = s2[2 * nod_pad:3 * nod_pad] - i_sum * i_sum * inv_ws
        j_var = s2[3 * nod_pad:4 * nod_pad] - j_sum * j_sum * inv_ws
        denom = i_var * j_var + EPS

        r = pl.reciprocal(denom, approx=True)           # EUP slot (free-ish)
        r = r * (2.0 - denom * r)                       # one Newton-Raphson step
        cc = num * r                                    # padded entries == 0

        # Scalar loss straight to SMEM (no masked single-lane vector store).
        out_ref[0, 0] = -jnp.sum(cc) * inv_total

    return cc_kernel


@jax.jit
def cc_loss_pallas(I, J):
    """I, J: (N, 1, D, H, W) float32.  Returns scalar loss."""
    N, C, D, H, W = I.shape
    assert C == 1
    k_hw_i8, big_i8, OHW_pad, NOD_pad, total = _build_operators(N, D, H, W)
    ND, HW = N * D, H * W

    # Free reshapes only: squeeze channel, flatten (N,D) rows and (H,W) lanes.
    Ix = I[:, 0].reshape(ND, HW).astype(jnp.float32)
    Jx = J[:, 0].reshape(ND, HW).astype(jnp.float32)

    kernel = _make_cc_kernel(NOD_pad, 1.0 / float(total))

    out = pl.pallas_call(
        kernel,
        out_shape=jax.ShapeDtypeStruct((1, 1), jnp.float32),
        grid=(1,),  # tiny problem in one step; see TODO(synk) for slab tiling
        in_specs=[pl.BlockSpec((ND, HW), lambda i: (0, 0)),
                  pl.BlockSpec((ND, HW), lambda i: (0, 0)),
                  pl.BlockSpec((HW, OHW_pad), lambda i: (0, 0)),
                  pl.BlockSpec((5 * NOD_pad, 5 * ND), lambda i: (0, 0))],
        out_specs=pl.BlockSpec(memory_space=pltpu.MemorySpace.SMEM),
        compiler_params=pltpu.CompilerParams(
            dimension_semantics=("arbitrary",)),
    )(Ix, Jx, jnp.asarray(k_hw_i8), jnp.asarray(big_i8))
    return out[0, 0]


def cc_loss_ref(I, J):
    """Pure-JAX reference with lax.reduce_window (ones 4x4x4 conv, pad=1)."""
    def wsum(x):
        return lax.reduce_window(
            x, 0.0, lax.add,
            window_dimensions=(1, 1, WIN, WIN, WIN),
            window_strides=(1, 1, 1, 1, 1),
            padding=[(0, 0), (0, 0), (PAD, PAD), (PAD, PAD), (PAD, PAD)])

    I2, J2, IJ = I * I, J * J, I * J
    I_sum, J_sum = wsum(I), wsum(J)
    I2_sum, J2_sum, IJ_sum = wsum(I2), wsum(J2), wsum(IJ)
    u_I, u_J = I_sum / WIN_SIZE, J_sum / WIN_SIZE
    cross = IJ_sum - u_J * I_sum - u_I * J_sum + u_I * u_J * WIN_SIZE
    I_var = I2_sum - 2.0 * u_I * I_sum + u_I * u_I * WIN_SIZE
    J_var = J2_sum - 2.0 * u_J * J_sum + u_J * u_J * WIN_SIZE
    cc = cross * cross / (I_var * J_var + EPS)
    return -1.0 * jnp.mean(cc)


if __name__ == "__main__":
    key = jax.random.PRNGKey(0)
    k1, k2 = jax.random.split(key)
    # fix['img'] and reg['img'] : small 3-D volumes, NCDHW with C=1.
    I = jax.random.uniform(k1, (2, 1, 16, 16, 16), dtype=jnp.float32)
    J = jax.random.uniform(k2, (2, 1, 16, 16, 16), dtype=jnp.float32)

    loss = jax.block_until_ready(cc_loss_pallas(I, J))
    loss_ref = jax.block_until_ready(cc_loss_ref(I, J))

    assert np.allclose(np.asarray(loss), np.asarray(loss_ref),
                       rtol=1e-4, atol=1e-5), (loss, loss_ref)
    print("KERNEL_OK")
</pallas_src>

<mosaic_0001>
module attributes {stable_mosaic.version = 11 : i64} {
  func.func @cc_kernel(%arg0: i32, %arg1: memref<32x256xf32, #tpu.memory_space<vmem>>, %arg2: memref<32x256xf32, #tpu.memory_space<vmem>>, %arg3: memref<256x256xi8, #tpu.memory_space<vmem>>, %arg4: memref<160x160xi8, #tpu.memory_space<vmem>>, %arg5: memref<1x1xf32, #tpu.memory_space<smem>>) attributes {dimension_semantics = [#tpu.dimension_semantics<arbitrary>], iteration_bounds = array<i64: 1>, scalar_prefetch = 0 : i64, scratch_operands = 0 : i64, tpu.core_type = #tpu.core_type<tc>, window_params = [{pipeline_mode = #tpu.pipeline_mode<synchronous>, transform_indices = @transform_0, window_bounds = array<i64: 32, 256>}, {pipeline_mode = #tpu.pipeline_mode<synchronous>, transform_indices = @transform_1, window_bounds = array<i64: 32, 256>}, {pipeline_mode = #tpu.pipeline_mode<synchronous>, transform_indices = @transform_2, window_bounds = array<i64: 256, 256>}, {pipeline_mode = #tpu.pipeline_mode<synchronous>, transform_indices = @transform_3, window_bounds = array<i64: 160, 160>}, {transform_indices = @transform_4, window_bounds = array<i64: 1, 1>}]} {
    %c0 = arith.constant 0 : index
    %c0_0 = arith.constant 0 : index
    %0 = vector.load %arg1[%c0, %c0_0] : memref<32x256xf32, #tpu.memory_space<vmem>>, vector<32x256xf32>
    %c0_1 = arith.constant 0 : index
    %c0_2 = arith.constant 0 : index
    %1 = vector.load %arg2[%c0_1, %c0_2] : memref<32x256xf32, #tpu.memory_space<vmem>>, vector<32x256xf32>
    %c0_3 = arith.constant 0 : index
    %c0_4 = arith.constant 0 : index
    %2 = vector.load %arg3[%c0_3, %c0_4] : memref<256x256xi8, #tpu.memory_space<vmem>>, vector<256x256xi8>
    %3 = arith.sitofp %2 : vector<256x256xi8> to vector<256x256xf32>
    %c0_5 = arith.constant 0 : index
    %c0_6 = arith.constant 0 : index
    %4 = vector.load %arg4[%c0_5, %c0_6] : memref<160x160xi8, #tpu.memory_space<vmem>>, vector<160x160xi8>
    %5 = arith.sitofp %4 : vector<160x160xi8> to vector<160x160xf32>
    %6 = arith.mulf %0, %0 : vector<32x256xf32>
    %7 = arith.mulf %1, %1 : vector<32x256xf32>
    %8 = arith.mulf %0, %1 : vector<32x256xf32>
    %9 = tpu.concatenate %0, %1, %6, %7, %8 in 0 : vector<32x256xf32>, vector<32x256xf32>, vector<32x256xf32>, vector<32x256xf32>, vector<32x256xf32> -> vector<160x256xf32>
    %cst = arith.constant dense<0.000000e+00> : vector<160x256xf32>
    %10 = tpu.matmul %9, %3, %cst {dimension_numbers = #tpu.dot_dimension_numbers<[1], [0], [0], [1], [0, 0, 1, 1], [], []>} : vector<160x256xf32>, vector<256x256xf32>, vector<160x256xf32> -> vector<160x256xf32>
    %cst_7 = arith.constant dense<0.000000e+00> : vector<160x256xf32>
    %11 = tpu.matmul %5, %10, %cst_7 {dimension_numbers = #tpu.dot_dimension_numbers<[1], [0], [0], [1], [0, 0, 1, 1], [], []>} : vector<160x160xf32>, vector<160x256xf32>, vector<160x256xf32> -> vector<160x256xf32>
    %12 = vector.extract_strided_slice %11 {offsets = [0, 0], sizes = [32, 256], strides = [1, 1]} : vector<160x256xf32> to vector<32x256xf32>
    %13 = vector.extract_strided_slice %11 {offsets = [32, 0], sizes = [32, 256], strides = [1, 1]} : vector<160x256xf32> to vector<32x256xf32>
    %14 = vector.extract_strided_slice %11 {offsets = [128, 0], sizes = [32, 256], strides = [1, 1]} : vector<160x256xf32> to vector<32x256xf32>
    %15 = arith.mulf %12, %13 : vector<32x256xf32>
    %cst_8 = arith.constant 1.562500e-02 : f32
    %16 = vector.broadcast %cst_8 : f32 to vector<32x256xf32>
    %17 = arith.mulf %15, %16 : vector<32x256xf32>
    %18 = arith.subf %14, %17 : vector<32x256xf32>
    %19 = arith.mulf %18, %18 : vector<32x256xf32>
    %20 = vector.extract_strided_slice %11 {offsets = [64, 0], sizes = [32, 256], strides = [1, 1]} : vector<160x256xf32> to vector<32x256xf32>
    %21 = arith.mulf %12, %12 : vector<32x256xf32>
    %cst_9 = arith.constant 1.562500e-02 : f32
    %22 = vector.broadcast %cst_9 : f32 to vector<32x256xf32>
    %23 = arith.mulf %21, %22 : vector<32x256xf32>
    %24 = arith.subf %20, %23 : vector<32x256xf32>
    %25 = vector.extract_strided_slice %11 {offsets = [96, 0], sizes = [32, 256], strides = [1, 1]} : vector<160x256xf32> to vector<32x256xf32>
    %26 = arith.mulf %13, %13 : vector<32x256xf32>
    %cst_10 = arith.constant 1.562500e-02 : f32
    %27 = vector.broadcast %cst_10 : f32 to vector<32x256xf32>
    %28 = arith.mulf %26, %27 : vector<32x256xf32>
    %29 = arith.subf %25, %28 : vector<32x256xf32>
    %30 = arith.mulf %24, %29 : vector<32x256xf32>
    %cst_11 = arith.constant 9.99999974E-6 : f32
    %31 = vector.broadcast %cst_11 : f32 to vector<32x256xf32>
    %32 = arith.addf %30, %31 : vector<32x256xf32>
    %33 = tpu.reciprocal %32 {approx = true} : vector<32x256xf32> -> vector<32x256xf32>
    %34 = arith.mulf %32, %33 : vector<32x256xf32>
    %cst_12 = arith.constant 2.000000e+00 : f32
    %35 = vector.broadcast %cst_12 : f32 to vector<32x256xf32>
    %36 = arith.subf %35, %34 : vector<32x256xf32>
    %37 = arith.mulf %33, %36 : vector<32x256xf32>
    %38 = arith.mulf %19, %37 : vector<32x256xf32>
    %39 = vector.shape_cast %38 : vector<32x256xf32> to vector<1x32x256xf32>
    %cst_13 = arith.constant dense<0.000000e+00> : vector<1xf32>
    %40 = vector.multi_reduction <add>, %39, %cst_13 [1, 2] : vector<1x32x256xf32> to vector<1xf32>
    %41 = vector.shape_cast %40 : vector<1xf32> to vector<1x1x1xf32>
    %42 = vector.extract %41[0, 0, 0] : f32 from vector<1x1x1xf32>
    %cst_14 = arith.constant 0.000000e+00 : f32
    %43 = arith.subf %cst_14, %42 : f32
    %cst_15 = arith.constant 1.48148145E-4 : f32
    %44 = arith.mulf %43, %cst_15 : f32
    %c0_16 = arith.constant 0 : index
    %c0_17 = arith.constant 0 : index
    %45 = memref.load %arg5[%c0_16, %c0_17] : memref<1x1xf32, #tpu.memory_space<smem>>
    memref.store %44, %arg5[%c0_16, %c0_17] : memref<1x1xf32, #tpu.memory_space<smem>>
    return
  }
  func.func @transform_0(%arg0: i32) -> (i32, i32) {
    %c0_i32 = arith.constant 0 : i32
    %c0_i32_0 = arith.constant 0 : i32
    %c0_i32_1 = arith.constant 0 : i32
    return %c0_i32, %c0_i32_0 : i32, i32
  }
  func.func @transform_1(%arg0: i32) -> (i32, i32) {
    %c0_i32 = arith.constant 0 : i32
    %c0_i32_0 = arith.constant 0 : i32
    %c0_i32_1 = arith.constant 0 : i32
    return %c0_i32, %c0_i32_0 : i32, i32
  }
  func.func @transform_2(%arg0: i32) -> (i32, i32) {
    %c0_i32 = arith.constant 0 : i32
    %c0_i32_0 = arith.constant 0 : i32
    %c0_i32_1 = arith.constant 0 : i32
    return %c0_i32, %c0_i32_0 : i32, i32
  }
  func.func @transform_3(%arg0: i32) -> (i32, i32) {
    %c0_i32 = arith.constant 0 : i32
    %c0_i32_0 = arith.constant 0 : i32
    %c0_i32_1 = arith.constant 0 : i32
    return %c0_i32, %c0_i32_0 : i32, i32
  }
  func.func @transform_4(%arg0: i32) -> (i32, i32) {
    %c0_i32 = arith.constant 0 : i32
    %c0_i32_0 = arith.constant 0 : i32
    %c0_i32_1 = arith.constant 0 : i32
    return %c0_i32, %c0_i32_0 : i32, i32
  }
}

</mosaic_0001>

<llo_original>
// kernel: squeeze.3
$region0: #{squeeze.3}
  %s0 = inlined_call_operand.hbm [shape: f32[2,1,16,16,16], index: 0, kind: input, shape index: {}]
  %s1 = inlined_call_operand.vmem [shape: f32[32,256], index: 1, kind: output, shape index: {}]
  $region1: #{squeeze.3} parent=0
    #allocation0 [shape = 'u8[262144]{0}', space=vmem, size = 0x40000, scoped, tag = 'operand span for operand 0']
    #allocation1 [shape = 's32[1]{0}', space=sflag, size = 0x4, scoped, tag = 'scoped memory for squeeze.3']
    %2 = vsyncpa [#allocation1], 0
    %s4 = ssub.s32 8192, 8192
    %5 = vsyncadd [#allocation1], %s4
    %s7 = sshll.u32 [#allocation0], 4
    %s8 = int_to_ptr.vmem [resolvable:$true] %s7
    %10 = dma.hbm_to_vmem [thread:$0]  %s0, 8192, %s8, [#allocation1]
    %11 = dma.done [#allocation1], 8192
    %v12 = vld [vmem:[#allocation0] ss:$8 sm:$0xf]
    %v13 = vld [vmem:[#allocation0] ss:$8 sm:$0xf0]
    %vm14 = vcmask 1047556
    %v15 = vsel %vm14, %v13, %v12
    %vm16 = vcmask 130048
    %17 = vst.msk [vmem:[%s1] ss:$8 sm:$0x3] %vm16, %v15
    %s18 = scalar_lea.vmem %s1, 4294967281
    %19 = vst.msk [vmem:[%s18] ss:$8 sm:$0xc] %vm16, %v15
    %s20 = scalar_lea.vmem %s1, 4294967266
    %21 = vst.msk [vmem:[%s20] ss:$8 sm:$0x30] %vm16, %v15
    %s22 = scalar_lea.vmem %s1, 4294967251
    %23 = vst.msk [vmem:[%s22] ss:$8 sm:$0xc0] %vm16, %v15
    %s24 = scalar_lea.vmem [#allocation0], 64
    %v25 = vld [vmem:[%s24] ss:$8 sm:$0xf]
    %s26 = scalar_lea.vmem [#allocation0], 64
    %v27 = vld [vmem:[%s26] ss:$8 sm:$0xf0]
    %vm28 = vcmask 1047556
    %v29 = vsel %vm28, %v27, %v25
    %vm30 = vcmask 130048
    %s31 = scalar_lea.vmem %s1, 4
    %32 = vst.msk [vmem:[%s31] ss:$8 sm:$0x3] %vm30, %v29
    %s33 = scalar_lea.vmem %s1, 4294967285
    %34 = vst.msk [vmem:[%s33] ss:$8 sm:$0xc] %vm30, %v29
    %s35 = scalar_lea.vmem %s1, 4294967270
    %36 = vst.msk [vmem:[%s35] ss:$8 sm:$0x30] %vm30, %v29
    %s37 = scalar_lea.vmem %s1, 4294967255
    %38 = vst.msk [vmem:[%s37] ss:$8 sm:$0xc0] %vm30, %v29
    %s39 = scalar_lea.vmem [#allocation0], 128
    %v40 = vld [vmem:[%s39] ss:$8 sm:$0xf]
    %s41 = scalar_lea.vmem [#allocation0], 128
    %v42 = vld [vmem:[%s41] ss:$8 sm:$0xf0]
    %vm43 = vcmask 1047556
    %v44 = vsel %vm43, %v42, %v40
    %vm45 = vcmask 130048
    %s46 = scalar_lea.vmem %s1, 16
    %47 = vst.msk [vmem:[%s46] ss:$8 sm:$0x3] %vm45, %v44
    %s48 = scalar_lea.vmem %s1, 1
    %49 = vst.msk [vmem:[%s48] ss:$8 sm:$0xc] %vm45, %v44
    %s50 = scalar_lea.vmem %s1, 4294967282
    %51 = vst.msk [vmem:[%s50] ss:$8 sm:$0x30] %vm45, %v44
    %s52 = scalar_lea.vmem %s1, 4294967267
    %53 = vst.msk [vmem:[%s52] ss:$8 sm:$0xc0] %vm45, %v44
    %s54 = scalar_lea.vmem [#allocation0], 192
    %v55 = vld [vmem:[%s54] ss:$8 sm:$0xf]
    %s56 = scalar_lea.vmem [#allocation0], 192
    %v57 = vld [vmem:[%s56] ss:$8 sm:$0xf0]
    %vm58 = vcmask 1047556
    %v59 = vsel %vm58, %v57, %v55
    %vm60 = vcmask 130048
    %s61 = scalar_lea.vmem %s1, 20
    %62 = vst.msk [vmem:[%s61] ss:$8 sm:$0x3] %vm60, %v59
    %s63 = scalar_lea.vmem %s1, 5
    %64 = vst.msk [vmem:[%s63] ss:$8 sm:$0xc] %vm60, %v59
    %s65 = scalar_lea.vmem %s1, 4294967286
    %66 = vst.msk [vmem:[%s65] ss:$8 sm:$0x30] %vm60, %v59
    %s67 = scalar_lea.vmem %s1, 4294967271
    %68 = vst.msk [vmem:[%s67] ss:$8 sm:$0xc0] %vm60, %v59
    %s69 = scalar_lea.vmem [#allocation0], 256
    %v70 = vld [vmem:[%s69] ss:$8 sm:$0xf]
    %s71 = scalar_lea.vmem [#allocation0], 256
    %v72 = vld [vmem:[%s71] ss:$8 sm:$0xf0]
    %vm73 = vcmask 1047556
    %v74 = vsel %vm73, %v72, %v70
    %vm75 = vcmask 130048
    %s76 = scalar_lea.vmem %s1, 32
    %77 = vst.msk [vmem:[%s76] ss:$8 sm:$0x3] %vm75, %v74
    %s78 = scalar_lea.vmem %s1, 17
    %79 = vst.msk [vmem:[%s78] ss:$8 sm:$0xc] %vm75, %v74
    %s80 = scalar_lea.vmem %s1, 2
    %81 = vst.msk [vmem:[%s80] ss:$8 sm:$0x30] %vm75, %v74
    %s82 = scalar_lea.vmem %s1, 4294967283
    %83 = vst.msk [vmem:[%s82] ss:$8 sm:$0xc0] %vm75, %v74
    %s84 = scalar_lea.vmem [#allocation0], 320
    %v85 = vld [vmem:[%s84] ss:$8 sm:$0xf]
    %s86 = scalar_lea.vmem [#allocation0], 320
    %v87 = vld [vmem:[%s86] ss:$8 sm:$0xf0]
    %vm88 = vcmask 1047556
    %v89 = vsel %vm88, %v87, %v85
    %vm90 = vcmask 130048
    %s91 = scalar_lea.vmem %s1, 36
    %92 = vst.msk [vmem:[%s91] ss:$8 sm:$0x3] %vm90, %v89
    %s93 = scalar_lea.vmem %s1, 21
    %94 = vst.msk [vmem:[%s93] ss:$8 sm:$0xc] %vm90, %v89
    %s95 = scalar_lea.vmem %s1, 6
    %96 = vst.msk [vmem:[%s95] ss:$8 sm:$0x30] %vm90, %v89
    %s97 = scalar_lea.vmem %s1, 4294967287
    %98 = vst.msk [vmem:[%s97] ss:$8 sm:$0xc0] %vm90, %v89
    %s99 = scalar_lea.vmem [#allocation0], 384
    %v100 = vld [vmem:[%s99] ss:$8 sm:$0xf]
    %s101 = scalar_lea.vmem [#allocation0], 384
    %v102 = vld [vmem:[%s101] ss:$8 sm:$0xf0]
    %vm103 = vcmask 1047556
    %v104 = vsel %vm103, %v102, %v100
    %vm105 = vcmask 130048
    %s106 = scalar_lea.vmem %s1, 48
    %107 = vst.msk [vmem:[%s106] ss:$8 sm:$0x3] %vm105, %v104
    %s108 = scalar_lea.vmem %s1, 33
    %109 = vst.msk [vmem:[%s108] ss:$8 sm:$0xc] %vm105, %v104
    %s110 = scalar_lea.vmem %s1, 18
    %111 = vst.msk [vmem:[%s110] ss:$8 sm:$0x30] %vm105, %v104
    %s112 = scalar_lea.vmem %s1, 3
    %113 = vst.msk [vmem:[%s112] ss:$8 sm:$0xc0] %vm105, %v104
    %s114 = scalar_lea.vmem [#allocation0], 448
    %v115 = vld [vmem:[%s114] ss:$8 sm:$0xf]
    %s116 = scalar_lea.vmem [#allocation0], 448
    %v117 = vld [vmem:[%s116] ss:$8 sm:$0xf0]
    %vm118 = vcmask 1047556
    %v119 = vsel %vm118, %v117, %v115
    %vm120 = vcmask 130048
    %s121 = scalar_lea.vmem %s1, 52
    %122 = vst.msk [vmem:[%s121] ss:$8 sm:$0x3] %vm120, %v119
    %s123 = scalar_lea.vmem %s1, 37
    %124 = vst.msk [vmem:[%s123] ss:$8 sm:$0xc] %vm120, %v119
    %s125 = scalar_lea.vmem %s1, 22
    %126 = vst.msk [vmem:[%s125] ss:$8 sm:$0x30] %vm120, %v119
    %s127 = scalar_lea.vmem %s1, 7
    %128 = vst.msk [vmem:[%s127] ss:$8 sm:$0xc0] %vm120, %v119
    %s129 = scalar_lea.vmem [#allocation0], 7
    %s130 = smov 3
    %v131 = vld [vmem:[%s129] ss:$16 sm:%s130]
    %s132 = scalar_lea.vmem [#allocation0], 7
    %s133 = smov 12
    %v134 = vld [vmem:[%s132] ss:$16 sm:%s133]
    %vm135 = vcmask 1043458
    %v136 = vsel %vm135, %v134, %v131
    %s137 = scalar_lea.vmem [#allocation0], 7
    %s138 = smov 48
    %v139 = vld [vmem:[%s137] ss:$16 sm:%s138]
    %vm140 = vcmask 1045508
    %v141 = vsel %vm140, %v139, %v136
    %s142 = scalar_lea.vmem [#allocation0], 7
    %s143 = smov 192
    %v144 = vld [vmem:[%s142] ss:$16 sm:%s143]
    %vm145 = vcmask 1047558
    %v146 = vsel %vm145, %v144, %v141
    %147 = vrot.lane.b32.xlu0 %v146, 112
    %v148 = vpop.permute.xlu0 %147
    %vm149 = vcmask 1048448
    %150 = vst.msk [vmem:[%s1] sm:$0xff] %vm149, %v148
    %s151 = scalar_lea.vmem [#allocation0], 263
    %s152 = smov 3
    %v153 = vld [vmem:[%s151] ss:$16 sm:%s152]
    %s154 = scalar_lea.vmem [#allocation0], 263
    %s155 = smov 12
    %v156 = vld [vmem:[%s154] ss:$16 sm:%s155]
    %vm157 = vcmask 1043458
    %v158 = vsel %vm157, %v156, %v153
    %s159 = scalar_lea.vmem [#allocation0], 263
    %s160 = smov 48
    %v161 = vld [vmem:[%s159] ss:$16 sm:%s160]
    %vm162 = vcmask 1045508
    %v163 = vsel %vm162, %v161, %v158
    %s164 = scalar_lea.vmem [#allocation0], 263
    %s165 = smov 192
    %v166 = vld [vmem:[%s164] ss:$16 sm:%s165]
    %vm167 = vcmask 1047558
    %v168 = vsel %vm167, %v166, %v163
    %169 = vrot.lane.b32.xlu0 %v168, 112
    %v170 = vpop.permute.xlu0 %169
    %vm171 = vcmask 1048448
    %s172 = scalar_lea.vmem %s1, 32
    %173 = vst.msk [vmem:[%s172] sm:$0xff] %vm171, %v170
    %s174 = scalar_lea.vmem [#allocation0], 15
    %s175 = smov 3
    %v176 = vld [vmem:[%s174] ss:$16 sm:%s175]
    %s177 = scalar_lea.vmem [#allocation0], 15
    %s178 = smov 12
    %v179 = vld [vmem:[%s177] ss:$16 sm:%s178]
    %vm180 = vcmask 1043458
    %v181 = vsel %vm180, %v179, %v176
    %s182 = scalar_lea.vmem [#allocation0], 15
    %s183 = smov 48
    %v184 = vld [vmem:[%s182] ss:$16 sm:%s183]
    %vm185 = vcmask 1045508
    %v186 = vsel %vm185, %v184, %v181
    %s187 = scalar_lea.vmem [#allocation0], 15
    %s188 = smov 192
    %v189 = vld [vmem:[%s187] ss:$16 sm:%s188]
    %vm190 = vcmask 1047558
    %v191 = vsel %vm190, %v189, %v186
    %192 = vrot.lane.b32.xlu0 %v191, 112
    %v193 = vpop.permute.xlu0 %192
    %vm194 = vcmask 1048448
    %s195 = scalar_lea.vmem %s1, 8
    %196 = vst.msk [vmem:[%s195] sm:$0xff] %vm194, %v193
    %s197 = scalar_lea.vmem [#allocation0], 271
    %s198 = smov 3
    %v199 = vld [vmem:[%s197] ss:$16 sm:%s198]
    %s200 = scalar_lea.vmem [#allocation0], 271
    %s201 = smov 12
    %v202 = vld [vmem:[%s200] ss:$16 sm:%s201]
    %vm203 = vcmask 1043458
    %v204 = vsel %vm203, %v202, %v199
    %s205 = scalar_lea.vmem [#allocation0], 271
    %s206 = smov 48
    %v207 = vld [vmem:[%s205] ss:$16 sm:%s206]
    %vm208 = vcmask 1045508
    %v209 = vsel %vm208, %v207, %v204
    %s210 = scalar_lea.vmem [#allocation0], 271
    %s211 = smov 192
    %v212 = vld [vmem:[%s210] ss:$16 sm:%s211]
    %vm213 = vcmask 1047558
    %v214 = vsel %vm213, %v212, %v209
    %215 = vrot.lane.b32.xlu0 %v214, 112
    %v216 = vpop.permute.xlu0 %215
    %vm217 = vcmask 1048448
    %s218 = scalar_lea.vmem %s1, 40
    %219 = vst.msk [vmem:[%s218] sm:$0xff] %vm217, %v216
    %s220 = scalar_lea.vmem [#allocation0], 135
    %s221 = smov 3
    %v222 = vld [vmem:[%s220] ss:$16 sm:%s221]
    %s223 = scalar_lea.vmem [#allocation0], 135
    %s224 = smov 12
    %v225 = vld [vmem:[%s223] ss:$16 sm:%s224]
    %vm226 = vcmask 1043458
    %v227 = vsel %vm226, %v225, %v222
    %s228 = scalar_lea.vmem [#allocation0], 135
    %s229 = smov 48
    %v230 = vld [vmem:[%s228] ss:$16 sm:%s229]
    %vm231 = vcmask 1045508
    %v232 = vsel %vm231, %v230, %v227
    %s233 = scalar_lea.vmem [#allocation0], 135
    %s234 = smov 192
    %v235 = vld [vmem:[%s233] ss:$16 sm:%s234]
    %vm236 = vcmask 1047558
    %v237 = vsel %vm236, %v235, %v232
    %238 = vrot.lane.b32.xlu0 %v237, 112
    %v239 = vpop.permute.xlu0 %238
    %vm240 = vcmask 1048448
    %s241 = scalar_lea.vmem %s1, 16
    %242 = vst.msk [vmem:[%s241] sm:$0xff] %vm240, %v239
    %s243 = scalar_lea.vmem [#allocation0], 391
    %s244 = smov 3
    %v245 = vld [vmem:[%s243] ss:$16 sm:%s244]
    %s246 = scalar_lea.vmem [#allocation0], 391
    %s247 = smov 12
    %v248 = vld [vmem:[%s246] ss:$16 sm:%s247]
    %vm249 = vcmask 1043458
    %v250 = vsel %vm249, %v248, %v245
    %s251 = scalar_lea.vmem [#allocation0], 391
    %s252 = smov 48
    %v253 = vld [vmem:[%s251] ss:$16 sm:%s252]
    %vm254 = vcmask 1045508
    %v255 = vsel %vm254, %v253, %v250
    %s256 = scalar_lea.vmem [#allocation0], 391
    %s257 = smov 192
    %v258 = vld [vmem:[%s256] ss:$16 sm:%s257]
    %vm259 = vcmask 1047558
    %v260 = vsel %vm259, %v258, %v255
    %261 = vrot.lane.b32.xlu0 %v260, 112
    %v262 = vpop.permute.xlu0 %261
    %vm263 = vcmask 1048448
    %s264 = scalar_lea.vmem %s1, 48
    %265 = vst.msk [vmem:[%s264] sm:$0xff] %vm263, %v262
    %s266 = scalar_lea.vmem [#allocation0], 143
    %s267 = smov 3
    %v268 = vld [vmem:[%s266] ss:$16 sm:%s267]
    %s269 = scalar_lea.vmem [#allocation0], 143
    %s270 = smov 12
    %v271 = vld [vmem:[%s269] ss:$16 sm:%s270]
    %vm272 = vcmask 1043458
    %v273 = vsel %vm272, %v271, %v268
    %s274 = scalar_lea.vmem [#allocation0], 143
    %s275 = smov 48
    %v276 = vld [vmem:[%s274] ss:$16 sm:%s275]
    %vm277 = vcmask 1045508
    %v278 = vsel %vm277, %v276, %v273
    %s279 = scalar_lea.vmem [#allocation0], 143
    %s280 = smov 192
    %v281 = vld [vmem:[%s279] ss:$16 sm:%s280]
    %vm282 = vcmask 1047558
    %v283 = vsel %vm282, %v281, %v278
    %284 = vrot.lane.b32.xlu0 %v283, 112
    %v285 = vpop.permute.xlu0 %284
    %vm286 = vcmask 1048448
    %s287 = scalar_lea.vmem %s1, 24
    %288 = vst.msk [vmem:[%s287] sm:$0xff] %vm286, %v285
    %s289 = scalar_lea.vmem [#allocation0], 399
    %s290 = smov 3
    %v291 = vld [vmem:[%s289] ss:$16 sm:%s290]
    %s292 = scalar_lea.vmem [#allocation0], 399
    %s293 = smov 12
    %v294 = vld [vmem:[%s292] ss:$16 sm:%s293]
    %vm295 = vcmask 1043458
    %v296 = vsel %vm295, %v294, %v291
    %s297 = scalar_lea.vmem [#allocation0], 399
    %s298 = smov 48
    %v299 = vld [vmem:[%s297] ss:$16 sm:%s298]
    %vm300 = vcmask 1045508
    %v301 = vsel %vm300, %v299, %v296
    %s302 = scalar_lea.vmem [#allocation0], 399
    %s303 = smov 192
    %v304 = vld [vmem:[%s302] ss:$16 sm:%s303]
    %vm305 = vcmask 1047558
    %v306 = vsel %vm305, %v304, %v301
    %307 = vrot.lane.b32.xlu0 %v306, 112
    %v308 = vpop.permute.xlu0 %307
    %vm309 = vcmask 1048448
    %s310 = scalar_lea.vmem %s1, 56
    %311 = vst.msk [vmem:[%s310] sm:$0xff] %vm309, %v308
    %s312 = scalar_lea.vmem [#allocation0], 6
    %s313 = smov 3
    %v314 = vld [vmem:[%s312] ss:$16 sm:%s313]
    %s315 = scalar_lea.vmem [#allocation0], 6
    %s316 = smov 12
    %v317 = vld [vmem:[%s315] ss:$16 sm:%s316]
    %vm318 = vcmask 1043458
    %v319 = vsel %vm318, %v317, %v314
    %s320 = scalar_lea.vmem [#allocation0], 6
    %s321 = smov 48
    %v322 = vld [vmem:[%s320] ss:$16 sm:%s321]
    %vm323 = vcmask 1045508
    %v324 = vsel %vm323, %v322, %v319
    %s325 = scalar_lea.vmem [#allocation0], 6
    %s326 = smov 192
    %v327 = vld [vmem:[%s325] ss:$16 sm:%s326]
    %vm328 = vcmask 1047558
    %v329 = vsel %vm328, %v327, %v324
    %330 = vrot.lane.b32.xlu0 %v329, 96
    %v331 = vpop.permute.xlu0 %330
    %vm332 = vcmask 917248
    %333 = vst.msk [vmem:[%s1] sm:$0xff] %vm332, %v331
    %s334 = scalar_lea.vmem [#allocation0], 262
    %s335 = smov 3
    %v336 = vld [vmem:[%s334] ss:$16 sm:%s335]
    %s337 = scalar_lea.vmem [#allocation0], 262
    %s338 = smov 12
    %v339 = vld [vmem:[%s337] ss:$16 sm:%s338]
    %vm340 = vcmask 1043458
    %v341 = vsel %vm340, %v339, %v336
    %s342 = scalar_lea.vmem [#allocation0], 262
    %s343 = smov 48
    %v344 = vld [vmem:[%s342] ss:$16 sm:%s343]
    %vm345 = vcmask 1045508
    %v346 = vsel %vm345, %v344, %v341
    %s347 = scalar_lea.vmem [#allocation0], 262
    %s348 = smov 192
    %v349 = vld [vmem:[%s347] ss:$16 sm:%s348]
    %vm350 = vcmask 1047558
    %v351 = vsel %vm350, %v349, %v346
    %352 = vrot.lane.b32.xlu0 %v351, 96
    %v353 = vpop.permute.xlu0 %352
    %vm354 = vcmask 917248
    %s355 = scalar_lea.vmem %s1, 32
    %356 = vst.msk [vmem:[%s355] sm:$0xff] %vm354, %v353
    %s357 = scalar_lea.vmem [#allocation0], 14
    %s358 = smov 3
    %v359 = vld [vmem:[%s357] ss:$16 sm:%s358]
    %s360 = scalar_lea.vmem [#allocation0], 14
    %s361 = smov 12
    %v362 = vld [vmem:[%s360] ss:$16 sm:%s361]
    %vm363 = vcmask 1043458
    %v364 = vsel %vm363, %v362, %v359
    %s365 = scalar_lea.vmem [#allocation0], 14
    %s366 = smov 48
    %v367 = vld [vmem:[%s365] ss:$16 sm:%s366]
    %vm368 = vcmask 1045508
    %v369 = vsel %vm368, %v367, %v364
    %s370 = scalar_lea.vmem [#allocation0], 14
    %s371 = smov 192
    %v372 = vld [vmem:[%s370] ss:$16 sm:%s371]
    %vm373 = vcmask 1047558
    %v374 = vsel %vm373, %v372, %v369
    %375 = vrot.lane.b32.xlu0 %v374, 96
    %v376 = vpop.permute.xlu0 %375
    %vm377 = vcmask 917248
    %s378 = scalar_lea.vmem %s1, 8
    %379 = vst.msk [vmem:[%s378] sm:$0xff] %vm377, %v376
    %s380 = scalar_lea.vmem [#allocation0], 270
    %s381 = smov 3
    %v382 = vld [vmem:[%s380] ss:$16 sm:%s381]
    %s383 = scalar_lea.vmem [#allocation0], 270
    %s384 = smov 12
    %v385 = vld [vmem:[%s383] ss:$16 sm:%s384]
    %vm386 = vcmask 1043458
    %v387 = vsel %vm386, %v385, %v382
    %s388 = scalar_lea.vmem [#allocation0], 270
    %s389 = smov 48
    %v390 = vld [vmem:[%s388] ss:$16 sm:%s389]
    %vm391 = vcmask 1045508
    %v392 = vsel %vm391, %v390, %v387
    %s393 = scalar_lea.vmem [#allocation0], 270
    %s394 = smov 192
    %v395 = vld [vmem:[%s393] ss:$16 sm:%s394]
    %vm396 = vcmask 1047558
    %v397 = vsel %vm396, %v395, %v392
    %398 = vrot.lane.b32.xlu0 %v397, 96
    %v399 = vpop.permute.xlu0 %398
    %vm400 = vcmask 917248
    %s401 = scalar_lea.vmem %s1, 40
    %402 = vst.msk [vmem:[%s401] sm:$0xff] %vm400, %v399
    %s403 = scalar_lea.vmem [#allocation0], 134
    %s404 = smov 3
    %v405 = vld [vmem:[%s403] ss:$16 sm:%s404]
    %s406 = scalar_lea.vmem [#allocation0], 134
    %s407 = smov 12
    %v408 = vld [vmem:[%s406] ss:$16 sm:%s407]
    %vm409 = vcmask 1043458
    %v410 = vsel %vm409, %v408, %v405
    %s411 = scalar_lea.vmem [#allocation0], 134
    %s412 = smov 48
    %v413 = vld [vmem:[%s411] ss:$16 sm:%s412]
    %vm414 = vcmask 1045508
    %v415 = vsel %vm414, %v413, %v410
    %s416 = scalar_lea.vmem [#allocation0], 134
    %s417 = smov 192
    %v418 = vld [vmem:[%s416] ss:$16 sm:%s417]
    %vm419 = vcmask 1047558
    %v420 = vsel %vm419, %v418, %v415
    %421 = vrot.lane.b32.xlu0 %v420, 96
    %v422 = vpop.permute.xlu0 %421
    %vm423 = vcmask 917248
    %s424 = scalar_lea.vmem %s1, 16
    %425 = vst.msk [vmem:[%s424] sm:$0xff] %vm423, %v422
    %s426 = scalar_lea.vmem [#allocation0], 390
    %s427 = smov 3
    %v428 = vld [vmem:[%s426] ss:$16 sm:%s427]
    %s429 = scalar_lea.vmem [#allocation0], 390
    %s430 = smov 12
    %v431 = vld [vmem:[%s429] ss:$16 sm:%s430]
    %vm432 = vcmask 1043458
    %v433 = vsel %vm432, %v431, %v428
    %s434 = scalar_lea.vmem [#allocation0], 390
    %s435 = smov 48
    %v436 = vld [vmem:[%s434] ss:$16 sm:%s435]
    %vm437 = vcmask 1045508
    %v438 = vsel %vm437, %v436, %v433
    %s439 = scalar_lea.vmem [#allocation0], 390
    %s440 = smov 192
    %v441 = vld [vmem:[%s439] ss:$16 sm:%s440]
    %vm442 = vcmask 1047558
    %v443 = vsel %vm442, %v441, %v438
    %444 = vrot.lane.b32.xlu0 %v443, 96
    %v445 = vpop.permute.xlu0 %444
    %vm446 = vcmask 917248
    %s447 = scalar_lea.vmem %s1, 48
    %448 = vst.msk [vmem:[%s447] sm:$0xff] %vm446, %v445
    %s449 = scalar_lea.vmem [#allocation0], 142
    %s450 = smov 3
    %v451 = vld [vmem:[%s449] ss:$16 sm:%s450]
    %s452 = scalar_lea.vmem [#allocation0], 142
    %s453 = smov 12
    %v454 = vld [vmem:[%s452] ss:$16 sm:%s453]
    %vm455 = vcmask 1043458
    %v456 = vsel %vm455, %v454, %v451
    %s457 = scalar_lea.vmem [#allocation0], 142
    %s458 = smov 48
    %v459 = vld [vmem:[%s457] ss:$16 sm:%s458]
    %vm460 = vcmask 1045508
    %v461 = vsel %vm460, %v459, %v456
    %s462 = scalar_lea.vmem [#allocation0], 142
    %s463 = smov 192
    %v464 = vld [vmem:[%s462] ss:$16 sm:%s463]
    %vm465 = vcmask 1047558
    %v466 = vsel %vm465, %v464, %v461
    %467 = vrot.lane.b32.xlu0 %v466, 96
    %v468 = vpop.permute.xlu0 %467
    %vm469 = vcmask 917248
    %s470 = scalar_lea.vmem %s1, 24
    %471 = vst.msk [vmem:[%s470] sm:$0xff] %vm469, %v468
    %s472 = scalar_lea.vmem [#allocation0], 398
    %s473 = smov 3
    %v474 = vld [vmem:[%s472] ss:$16 sm:%s473]
    %s475 = scalar_lea.vmem [#allocation0], 398
    %s476 = smov 12
    %v477 = vld [vmem:[%s475] ss:$16 sm:%s476]
    %vm478 = vcmask 1043458
    %v479 = vsel %vm478, %v477, %v474
    %s480 = scalar_lea.vmem [#allocation0], 398
    %s481 = smov 48
    %v482 = vld [vmem:[%s480] ss:$16 sm:%s481]
    %vm483 = vcmask 1045508
    %v484 = vsel %vm483, %v482, %v479
    %s485 = scalar_lea.vmem [#allocation0], 398
    %s486 = smov 192
    %v487 = vld [vmem:[%s485] ss:$16 sm:%s486]
    %vm488 = vcmask 1047558
    %v489 = vsel %vm488, %v487, %v484
    %490 = vrot.lane.b32.xlu0 %v489, 96
    %v491 = vpop.permute.xlu0 %490
    %vm492 = vcmask 917248
    %s493 = scalar_lea.vmem %s1, 56
    %494 = vst.msk [vmem:[%s493] sm:$0xff] %vm492, %v491
    %s495 = scalar_lea.vmem [#allocation0], 5
    %s496 = smov 3
    %v497 = vld [vmem:[%s495] ss:$16 sm:%s496]
    %s498 = scalar_lea.vmem [#allocation0], 5
    %s499 = smov 12
    %v500 = vld [vmem:[%s498] ss:$16 sm:%s499]
    %vm501 = vcmask 1043458
    %v502 = vsel %vm501, %v500, %v497
    %s503 = scalar_lea.vmem [#allocation0], 5
    %s504 = smov 48
    %v505 = vld [vmem:[%s503] ss:$16 sm:%s504]
    %vm506 = vcmask 1045508
    %v507 = vsel %vm506, %v505, %v502
    %s508 = scalar_lea.vmem [#allocation0], 5
    %s509 = smov 192
    %v510 = vld [vmem:[%s508] ss:$16 sm:%s509]
    %vm511 = vcmask 1047558
    %v512 = vsel %vm511, %v510, %v507
    %513 = vrot.lane.b32.xlu0 %v512, 80
    %v514 = vpop.permute.xlu0 %513
    %vm515 = vcmask 786048
    %516 = vst.msk [vmem:[%s1] sm:$0xff] %vm515, %v514
    %s517 = scalar_lea.vmem [#allocation0], 261
    %s518 = smov 3
    %v519 = vld [vmem:[%s517] ss:$16 sm:%s518]
    %s520 = scalar_lea.vmem [#allocation0], 261
    %s521 = smov 12
    %v522 = vld [vmem:[%s520] ss:$16 sm:%s521]
    %vm523 = vcmask 1043458
    %v524 = vsel %vm523, %v522, %v519
    %s525 = scalar_lea.vmem [#allocation0], 261
    %s526 = smov 48
    %v527 = vld [vmem:[%s525] ss:$16 sm:%s526]
    %vm528 = vcmask 1045508
    %v529 = vsel %vm528, %v527, %v524
    %s530 = scalar_lea.vmem [#allocation0], 261
    %s531 = smov 192
    %v532 = vld [vmem:[%s530] ss:$16 sm:%s531]
    %vm533 = vcmask 1047558
    %v534 = vsel %vm533, %v532, %v529
    %535 = vrot.lane.b32.xlu0 %v534, 80
    %v536 = vpop.permute.xlu0 %535
    %vm537 = vcmask 786048
    %s538 = scalar_lea.vmem %s1, 32
    %539 = vst.msk [vmem:[%s538] sm:$0xff] %vm537, %v536
    %s540 = scalar_lea.vmem [#allocation0], 13
    %s541 = smov 3
    %v542 = vld [vmem:[%s540] ss:$16 sm:%s541]
    %s543 = scalar_lea.vmem [#allocation0], 13
    %s544 = smov 12
    %v545 = vld [vmem:[%s543] ss:$16 sm:%s544]
    %vm546 = vcmask 1043458
    %v547 = vsel %vm546, %v545, %v542
    %s548 = scalar_lea.vmem [#allocation0], 13
    %s549 = smov 48
    %v550 = vld [vmem:[%s548] ss:$16 sm:%s549]
    %vm551 = vcmask 1045508
    %v552 = vsel %vm551, %v550, %v547
    %s553 = scalar_lea.vmem [#allocation0], 13
    %s554 = smov 192
    %v555 = vld [vmem:[%s553] ss:$16 sm:%s554]
    %vm556 = vcmask 1047558
    %v557 = vsel %vm556, %v555, %v552
    %558 = vrot.lane.b32.xlu0 %v557, 80
    %v559 = vpop.permute.xlu0 %558
    %vm560 = vcmask 786048
    %s561 = scalar_lea.vmem %s1, 8
    %562 = vst.msk [vmem:[%s561] sm:$0xff] %vm560, %v559
    %s563 = scalar_lea.vmem [#allocation0], 269
    %s564 = smov 3
    %v565 = vld [vmem:[%s563] ss:$16 sm:%s564]
    %s566 = scalar_lea.vmem [#allocation0], 269
    %s567 = smov 12
    %v568 = vld [vmem:[%s566] ss:$16 sm:%s567]
    %vm569 = vcmask 1043458
    %v570 = vsel %vm569, %v568, %v565
    %s571 = scalar_lea.vmem [#allocation0], 269
    %s572 = smov 48
    %v573 = vld [vmem:[%s571] ss:$16 sm:%s572]
    %vm574 = vcmask 1045508
    %v575 = vsel %vm574, %v573, %v570
    %s576 = scalar_lea.vmem [#allocation0], 269
    %s577 = smov 192
    %v578 = vld [vmem:[%s576] ss:$16 sm:%s577]
    %vm579 = vcmask 1047558
    %v580 = vsel %vm579, %v578, %v575
    %581 = vrot.lane.b32.xlu0 %v580, 80
    %v582 = vpop.permute.xlu0 %581
    %vm583 = vcmask 786048
    %s584 = scalar_lea.vmem %s1, 40
    %585 = vst.msk [vmem:[%s584] sm:$0xff] %vm583, %v582
    %s586 = scalar_lea.vmem [#allocation0], 133
    %s587 = smov 3
    %v588 = vld [vmem:[%s586] ss:$16 sm:%s587]
    %s589 = scalar_lea.vmem [#allocation0], 133
    %s590 = smov 12
    %v591 = vld [vmem:[%s589] ss:$16 sm:%s590]
    %vm592 = vcmask 1043458
    %v593 = vsel %vm592, %v591, %v588
    %s594 = scalar_lea.vmem [#allocation0], 133
    %s595 = smov 48
    %v596 = vld [vmem:[%s594] ss:$16 sm:%s595]
    %vm597 = vcmask 1045508
    %v598 = vsel %vm597, %v596, %v593
    %s599 = scalar_lea.vmem [#allocation0], 133
    %s600 = smov 192
    %v601 = vld [vmem:[%s599] ss:$16 sm:%s600]
    %vm602 = vcmask 1047558
    %v603 = vsel %vm602, %v601, %v598
    %604 = vrot.lane.b32.xlu0 %v603, 80
    %v605 = vpop.permute.xlu0 %604
    %vm606 = vcmask 786048
    %s607 = scalar_lea.vmem %s1, 16
    %608 = vst.msk [vmem:[%s607] sm:$0xff] %vm606, %v605
    %s609 = scalar_lea.vmem [#allocation0], 389
    %s610 = smov 3
    %v611 = vld [vmem:[%s609] ss:$16 sm:%s610]
    %s612 = scalar_lea.vmem [#allocation0], 389
    %s613 = smov 12
    %v614 = vld [vmem:[%s612] ss:$16 sm:%s613]
    %vm615 = vcmask 1043458
    %v616 = vsel %vm615, %v614, %v611
    %s617 = scalar_lea.vmem [#allocation0], 389
    %s618 = smov 48
    %v619 = vld [vmem:[%s617] ss:$16 sm:%s618]
    %vm620 = vcmask 1045508
    %v621 = vsel %vm620, %v619, %v616
    %s622 = scalar_lea.vmem [#allocation0], 389
    %s623 = smov 192
    %v624 = vld [vmem:[%s622] ss:$16 sm:%s623]
    %vm625 = vcmask 1047558
    %v626 = vsel %vm625, %v624, %v621
    %627 = vrot.lane.b32.xlu0 %v626, 80
    %v628 = vpop.permute.xlu0 %627
    %vm629 = vcmask 786048
    %s630 = scalar_lea.vmem %s1, 48
    %631 = vst.msk [vmem:[%s630] sm:$0xff] %vm629, %v628
    %s632 = scalar_lea.vmem [#allocation0], 141
    %s633 = smov 3
    %v634 = vld [vmem:[%s632] ss:$16 sm:%s633]
    %s635 = scalar_lea.vmem [#allocation0], 141
    %s636 = smov 12
    %v637 = vld [vmem:[%s635] ss:$16 sm:%s636]
    %vm638 = vcmask 1043458
    %v639 = vsel %vm638, %v637, %v634
    %s640 = scalar_lea.vmem [#allocation0], 141
    %s641 = smov 48
    %v642 = vld [vmem:[%s640] ss:$16 sm:%s641]
    %vm643 = vcmask 1045508
    %v644 = vsel %vm643, %v642, %v639
    %s645 = scalar_lea.vmem [#allocation0], 141
    %s646 = smov 192
    %v647 = vld [vmem:[%s645] ss:$16 sm:%s646]
    %vm648 = vcmask 1047558
    %v649 = vsel %vm648, %v647, %v644
    %650 = vrot.lane.b32.xlu0 %v649, 80
    %v651 = vpop.permute.xlu0 %650
    %vm652 = vcmask 786048
    %s653 = scalar_lea.vmem %s1, 24
    %654 = vst.msk [vmem:[%s653] sm:$0xff] %vm652, %v651
    %s655 = scalar_lea.vmem [#allocation0], 397
    %s656 = smov 3
    %v657 = vld [vmem:[%s655] ss:$16 sm:%s656]
    %s658 = scalar_lea.vmem [#allocation0], 397
    %s659 = smov 12
    %v660 = vld [vmem:[%s658] ss:$16 sm:%s659]
    %vm661 = vcmask 1043458
    %v662 = vsel %vm661, %v660, %v657
    %s663 = scalar_lea.vmem [#allocation0], 397
    %s664 = smov 48
    %v665 = vld [vmem:[%s663] ss:$16 sm:%s664]
    %vm666 = vcmask 1045508
    %v667 = vsel %vm666, %v665, %v662
    %s668 = scalar_lea.vmem [#allocation0], 397
    %s669 = smov 192
    %v670 = vld [vmem:[%s668] ss:$16 sm:%s669]
    %vm671 = vcmask 1047558
    %v672 = vsel %vm671, %v670, %v667
    %673 = vrot.lane.b32.xlu0 %v672, 80
    %v674 = vpop.permute.xlu0 %673
    %vm675 = vcmask 786048
    %s676 = scalar_lea.vmem %s1, 56
    %677 = vst.msk [vmem:[%s676] sm:$0xff] %vm675, %v674
    %s678 = scalar_lea.vmem [#allocation0], 4
    %s679 = smov 3
    %v680 = vld [vmem:[%s678] ss:$16 sm:%s679]
    %s681 = scalar_lea.vmem [#allocation0], 4
    %s682 = smov 12
    %v683 = vld [vmem:[%s681] ss:$16 sm:%s682]
    %vm684 = vcmask 1043458
    %v685 = vsel %vm684, %v683, %v680
    %s686 = scalar_lea.vmem [#allocation0], 4
    %s687 = smov 48
    %v688 = vld [vmem:[%s686] ss:$16 sm:%s687]
    %vm689 = vcmask 1045508
    %v690 = vsel %vm689, %v688, %v685
    %s691 = scalar_lea.vmem [#allocation0], 4
    %s692 = smov 192
    %v693 = vld [vmem:[%s691] ss:$16 sm:%s692]
    %vm694 = vcmask 1047558
    %v695 = vsel %vm694, %v693, %v690
    %696 = vrot.lane.b32.xlu0 %v695, 64
    %v697 = vpop.permute.xlu0 %696
    %vm698 = vcmask 654848
    %699 = vst.msk [vmem:[%s1] sm:$0xff] %vm698, %v697
    %s700 = scalar_lea.vmem [#allocation0], 260
    %s701 = smov 3
    %v702 = vld [vmem:[%s700] ss:$16 sm:%s701]
    %s703 = scalar_lea.vmem [#allocation0], 260
    %s704 = smov 12
    %v705 = vld [vmem:[%s703] ss:$16 sm:%s704]
    %vm706 = vcmask 1043458
    %v707 = vsel %vm706, %v705, %v702
    %s708 = scalar_lea.vmem [#allocation0], 260
    %s709 = smov 48
    %v710 = vld [vmem:[%s708] ss:$16 sm:%s709]
    %vm711 = vcmask 1045508
    %v712 = vsel %vm711, %v710, %v707
    %s713 = scalar_lea.vmem [#allocation0], 260
    %s714 = smov 192
    %v715 = vld [vmem:[%s713] ss:$16 sm:%s714]
    %vm716 = vcmask 1047558
    %v717 = vsel %vm716, %v715, %v712
    %718 = vrot.lane.b32.xlu0 %v717, 64
    %v719 = vpop.permute.xlu0 %718
    %vm720 = vcmask 654848
    %s721 = scalar_lea.vmem %s1, 32
    %722 = vst.msk [vmem:[%s721] sm:$0xff] %vm720, %v719
    %s723 = scalar_lea.vmem [#allocation0], 12
    %s724 = smov 3
    %v725 = vld [vmem:[%s723] ss:$16 sm:%s724]
    %s726 = scalar_lea.vmem [#allocation0], 12
    %s727 = smov 12
    %v728 = vld [vmem:[%s726] ss:$16 sm:%s727]
    %vm729 = vcmask 1043458
    %v730 = vsel %vm729, %v728, %v725
    %s731 = scalar_lea.vmem [#allocation0], 12
    %s732 = smov 48
    %v733 = vld [vmem:[%s731] ss:$16 sm:%s732]
    %vm734 = vcmask 1045508
    %v735 = vsel %vm734, %v733, %v730
    %s736 = scalar_lea.vmem [#allocation0], 12
    %s737 = smov 192
    %v738 = vld [vmem:[%s736] ss:$16 sm:%s737]
    %vm739 = vcmask 1047558
    %v740 = vsel %vm739, %v738, %v735
    %741 = vrot.lane.b32.xlu0 %v740, 64
    %v742 = vpop.permute.xlu0 %741
    %vm743 = vcmask 654848
    %s744 = scalar_lea.vmem %s1, 8
    %745 = vst.msk [vmem:[%s744] sm:$0xff] %vm743, %v742
    %s746 = scalar_lea.vmem [#allocation0], 268
    %s747 = smov 3
    %v748 = vld [vmem:[%s746] ss:$16 sm:%s747]
    %s749 = scalar_lea.vmem [#allocation0], 268
    %s750 = smov 12
    %v751 = vld [vmem:[%s749] ss:$16 sm:%s750]
    %vm752 = vcmask 1043458
    %v753 = vsel %vm752, %v751, %v748
    %s754 = scalar_lea.vmem [#allocation0], 268
    %s755 = smov 48
    %v756 = vld [vmem:[%s754] ss:$16 sm:%s755]
    %vm757 = vcmask 1045508
    %v758 = vsel %vm757, %v756, %v753
    %s759 = scalar_lea.vmem [#allocation0], 268
    %s760 = smov 192
    %v761 = vld [vmem:[%s759] ss:$16 sm:%s760]
    %vm762 = vcmask 1047558
    %v763 = vsel %vm762, %v761, %v758
    %764 = vrot.lane.b32.xlu0 %v763, 64
    %v765 = vpop.permute.xlu0 %764
    %vm766 = vcmask 654848
    %s767 = scalar_lea.vmem %s1, 40
    %768 = vst.msk [vmem:[%s767] sm:$0xff] %vm766, %v765
    %s769 = scalar_lea.vmem [#allocation0], 132
    %s770 = smov 3
    %v771 = vld [vmem:[%s769] ss:$16 sm:%s770]
    %s772 = scalar_lea.vmem [#allocation0], 132
    %s773 = smov 12
    %v774 = vld [vmem:[%s772] ss:$16 sm:%s773]
    %vm775 = vcmask 1043458
    %v776 = vsel %vm775, %v774, %v771
    %s777 = scalar_lea.vmem [#allocation0], 132
    %s778 = smov 48
    %v779 = vld [vmem:[%s777] ss:$16 sm:%s778]
    %vm780 = vcmask 1045508
    %v781 = vsel %vm780, %v779, %v776
    %s782 = scalar_lea.vmem [#allocation0], 132
    %s783 = smov 192
    %v784 = vld [vmem:[%s782] ss:$16 sm:%s783]
    %vm785 = vcmask 1047558
    %v786 = vsel %vm785, %v784, %v781
    %787 = vrot.lane.b32.xlu0 %v786, 64
    %v788 = vpop.permute.xlu0 %787
    %vm789 = vcmask 654848
    %s790 = scalar_lea.vmem %s1, 16
    %791 = vst.msk [vmem:[%s790] sm:$0xff] %vm789, %v788
    %s792 = scalar_lea.vmem [#allocation0], 388
    %s793 = smov 3
    %v794 = vld [vmem:[%s792] ss:$16 sm:%s793]
    %s795 = scalar_lea.vmem [#allocation0], 388
    %s796 = smov 12
    %v797 = vld [vmem:[%s795] ss:$16 sm:%s796]
    %vm798 = vcmask 1043458
    %v799 = vsel %vm798, %v797, %v794
    %s800 = scalar_lea.vmem [#allocation0], 388
    %s801 = smov 48
    %v802 = vld [vmem:[%s800] ss:$16 sm:%s801]
    %vm803 = vcmask 1045508
    %v804 = vsel %vm803, %v802, %v799
    %s805 = scalar_lea.vmem [#allocation0], 388
    %s806 = smov 192
    %v807 = vld [vmem:[%s805] ss:$16 sm:%s806]
    %vm808 = vcmask 1047558
    %v809 = vsel %vm808, %v807, %v804
    %810 = vrot.lane.b32.xlu0 %v809, 64
    %v811 = vpop.permute.xlu0 %810
    %vm812 = vcmask 654848
    %s813 = scalar_lea.vmem %s1, 48
    %814 = vst.msk [vmem:[%s813] sm:$0xff] %vm812, %v811
    %s815 = scalar_lea.vmem [#allocation0], 140
    %s816 = smov 3
    %v817 = vld [vmem:[%s815] ss:$16 sm:%s816]
    %s818 = scalar_lea.vmem [#allocation0], 140
    %s819 = smov 12
    %v820 = vld [vmem:[%s818] ss:$16 sm:%s819]
    %vm821 = vcmask 1043458
    %v822 = vsel %vm821, %v820, %v817
    %s823 = scalar_lea.vmem [#allocation0], 140
    %s824 = smov 48
    %v825 = vld [vmem:[%s823] ss:$16 sm:%s824]
    %vm826 = vcmask 1045508
    %v827 = vsel %vm826, %v825, %v822
    %s828 = scalar_lea.vmem [#allocation0], 140
    %s829 = smov 192
    %v830 = vld [vmem:[%s828] ss:$16 sm:%s829]
    %vm831 = vcmask 1047558
    %v832 = vsel %vm831, %v830, %v827
    %833 = vrot.lane.b32.xlu0 %v832, 64
    %v834 = vpop.permute.xlu0 %833
    %vm835 = vcmask 654848
    %s836 = scalar_lea.vmem %s1, 24
    %837 = vst.msk [vmem:[%s836] sm:$0xff] %vm835, %v834
    %s838 = scalar_lea.vmem [#allocation0], 396
    %s839 = smov 3
    %v840 = vld [vmem:[%s838] ss:$16 sm:%s839]
    %s841 = scalar_lea.vmem [#allocation0], 396
    %s842 = smov 12
    %v843 = vld [vmem:[%s841] ss:$16 sm:%s842]
    %vm844 = vcmask 1043458
    %v845 = vsel %vm844, %v843, %v840
    %s846 = scalar_lea.vmem [#allocation0], 396
    %s847 = smov 48
    %v848 = vld [vmem:[%s846] ss:$16 sm:%s847]
    %vm849 = vcmask 1045508
    %v850 = vsel %vm849, %v848, %v845
    %s851 = scalar_lea.vmem [#allocation0], 396
    %s852 = smov 192
    %v853 = vld [vmem:[%s851] ss:$16 sm:%s852]
    %vm854 = vcmask 1047558
    %v855 = vsel %vm854, %v853, %v850
    %856 = vrot.lane.b32.xlu0 %v855, 64
    %v857 = vpop.permute.xlu0 %856
    %vm858 = vcmask 654848
    %s859 = scalar_lea.vmem %s1, 56
    %860 = vst.msk [vmem:[%s859] sm:$0xff] %vm858, %v857
    %s861 = scalar_lea.vmem [#allocation0], 3
    %s862 = smov 3
    %v863 = vld [vmem:[%s861] ss:$16 sm:%s862]
    %s864 = scalar_lea.vmem [#allocation0], 3
    %s865 = smov 12
    %v866 = vld [vmem:[%s864] ss:$16 sm:%s865]
    %vm867 = vcmask 1043458
    %v868 = vsel %vm867, %v866, %v863
    %s869 = scalar_lea.vmem [#allocation0], 3
    %s870 = smov 48
    %v871 = vld [vmem:[%s869] ss:$16 sm:%s870]
    %vm872 = vcmask 1045508
    %v873 = vsel %vm872, %v871, %v868
    %s874 = scalar_lea.vmem [#allocation0], 3
    %s875 = smov 192
    %v876 = vld [vmem:[%s874] ss:$16 sm:%s875]
    %vm877 = vcmask 1047558
    %v878 = vsel %vm877, %v876, %v873
    %879 = vrot.lane.b32.xlu0 %v878, 48
    %v880 = vpop.permute.xlu0 %879
    %vm881 = vcmask 523648
    %882 = vst.msk [vmem:[%s1] sm:$0xff] %vm881, %v880
    %s883 = scalar_lea.vmem [#allocation0], 259
    %s884 = smov 3
    %v885 = vld [vmem:[%s883] ss:$16 sm:%s884]
    %s886 = scalar_lea.vmem [#allocation0], 259
    %s887 = smov 12
    %v888 = vld [vmem:[%s886] ss:$16 sm:%s887]
    %vm889 = vcmask 1043458
    %v890 = vsel %vm889, %v888, %v885
    %s891 = scalar_lea.vmem [#allocation0], 259
    %s892 = smov 48
    %v893 = vld [vmem:[%s891] ss:$16 sm:%s892]
    %vm894 = vcmask 1045508
    %v895 = vsel %vm894, %v893, %v890
    %s896 = scalar_lea.vmem [#allocation0], 259
    %s897 = smov 192
    %v898 = vld [vmem:[%s896] ss:$16 sm:%s897]
    %vm899 = vcmask 1047558
    %v900 = vsel %vm899, %v898, %v895
    %901 = vrot.lane.b32.xlu0 %v900, 48
    %v902 = vpop.permute.xlu0 %901
    %vm903 = vcmask 523648
    %s904 = scalar_lea.vmem %s1, 32
    %905 = vst.msk [vmem:[%s904] sm:$0xff] %vm903, %v902
    %s906 = scalar_lea.vmem [#allocation0], 11
    %s907 = smov 3
    %v908 = vld [vmem:[%s906] ss:$16 sm:%s907]
    %s909 = scalar_lea.vmem [#allocation0], 11
    %s910 = smov 12
    %v911 = vld [vmem:[%s909] ss:$16 sm:%s910]
    %vm912 = vcmask 1043458
    %v913 = vsel %vm912, %v911, %v908
    %s914 = scalar_lea.vmem [#allocation0], 11
    %s915 = smov 48
    %v916 = vld [vmem:[%s914] ss:$16 sm:%s915]
    %vm917 = vcmask 1045508
    %v918 = vsel %vm917, %v916, %v913
    %s919 = scalar_lea.vmem [#allocation0], 11
    %s920 = smov 192
    %v921 = vld [vmem:[%s919] ss:$16 sm:%s920]
    %vm922 = vcmask 1047558
    %v923 = vsel %vm922, %v921, %v918
    %924 = vrot.lane.b32.xlu0 %v923, 48
    %v925 = vpop.permute.xlu0 %924
    %vm926 = vcmask 523648
    %s927 = scalar_lea.vmem %s1, 8
    %928 = vst.msk [vmem:[%s927] sm:$0xff] %vm926, %v925
    %s929 = scalar_lea.vmem [#allocation0], 267
    %s930 = smov 3
    %v931 = vld [vmem:[%s929] ss:$16 sm:%s930]
    %s932 = scalar_lea.vmem [#allocation0], 267
    %s933 = smov 12
    %v934 = vld [vmem:[%s932] ss:$16 sm:%s933]
    %vm935 = vcmask 1043458
    %v936 = vsel %vm935, %v934, %v931
    %s937 = scalar_lea.vmem [#allocation0], 267
    %s938 = smov 48
    %v939 = vld [vmem:[%s937] ss:$16 sm:%s938]
    %vm940 = vcmask 1045508
    %v941 = vsel %vm940, %v939, %v936
    %s942 = scalar_lea.vmem [#allocation0], 267
    %s943 = smov 192
    %v944 = vld [vmem:[%s942] ss:$16 sm:%s943]
    %vm945 = vcmask 1047558
    %v946 = vsel %vm945, %v944, %v941
    %947 = vrot.lane.b32.xlu0 %v946, 48
    %v948 = vpop.permute.xlu0 %947
    %vm949 = vcmask 523648
    %s950 = scalar_lea.vmem %s1, 40
    %951 = vst.msk [vmem:[%s950] sm:$0xff] %vm949, %v948
    %s952 = scalar_lea.vmem [#allocation0], 131
    %s953 = smov 3
    %v954 = vld [vmem:[%s952] ss:$16 sm:%s953]
    %s955 = scalar_lea.vmem [#allocation0], 131
    %s956 = smov 12
    %v957 = vld [vmem:[%s955] ss:$16 sm:%s956]
    %vm958 = vcmask 1043458
    %v959 = vsel %vm958, %v957, %v954
    %s960 = scalar_lea.vmem [#allocation0], 131
    %s961 = smov 48
    %v962 = vld [vmem:[%s960] ss:$16 sm:%s961]
    %vm963 = vcmask 1045508
    %v964 = vsel %vm963, %v962, %v959
    %s965 = scalar_lea.vmem [#allocation0], 131
    %s966 = smov 192
    %v967 = vld [vmem:[%s965] ss:$16 sm:%s966]
    %vm968 = vcmask 1047558
    %v969 = vsel %vm968, %v967, %v964
    %970 = vrot.lane.b32.xlu0 %v969, 48
    %v971 = vpop.permute.xlu0 %970
    %vm972 = vcmask 523648
    %s973 = scalar_lea.vmem %s1, 16
    %974 = vst.msk [vmem:[%s973] sm:$0xff] %vm972, %v971
    %s975 = scalar_lea.vmem [#allocation0], 387
    %s976 = smov 3
    %v977 = vld [vmem:[%s975] ss:$16 sm:%s976]
    %s978 = scalar_lea.vmem [#allocation0], 387
    %s979 = smov 12
    %v980 = vld [vmem:[%s978] ss:$16 sm:%s979]
    %vm981 = vcmask 1043458
    %v982 = vsel %vm981, %v980, %v977
    %s983 = scalar_lea.vmem [#allocation0], 387
    %s984 = smov 48
    %v985 = vld [vmem:[%s983] ss:$16 sm:%s984]
    %vm986 = vcmask 1045508
    %v987 = vsel %vm986, %v985, %v982
    %s988 = scalar_lea.vmem [#allocation0], 387
    %s989 = smov 192
    %v990 = vld [vmem:[%s988] ss:$16 sm:%s989]
    %vm991 = vcmask 1047558
    %v992 = vsel %vm991, %v990, %v987
    %993 = vrot.lane.b32.xlu0 %v992, 48
    %v994 = vpop.permute.xlu0 %993
    %vm995 = vcmask 523648
    %s996 = scalar_lea.vmem %s1, 48
    %997 = vst.msk [vmem:[%s996] sm:$0xff] %vm995, %v994
    %s998 = scalar_lea.vmem [#allocation0], 139
    %s999 = smov 3
    %v1000 = vld [vmem:[%s998] ss:$16 sm:%s999]
    %s1001 = scalar_lea.vmem [#allocation0], 139
    %s1002 = smov 12
    %v1003 = vld [vmem:[%s1001] ss:$16 sm:%s1002]
    %vm1004 = vcmask 1043458
    %v1005 = vsel %vm1004, %v1003, %v1000
    %s1006 = scalar_lea.vmem [#allocation0], 139
    %s1007 = smov 48
    %v1008 = vld [vmem:[%s1006] ss:$16 sm:%s1007]
    %vm1009 = vcmask 1045508
    %v1010 = vsel %vm1009, %v1008, %v1005
    %s1011 = scalar_lea.vmem [#allocation0], 139
    %s1012 = smov 192
    %v1013 = vld [vmem:[%s1011] ss:$16 sm:%s1012]
    %vm1014 = vcmask 1047558
    %v1015 = vsel %vm1014, %v1013, %v1010
    %1016 = vrot.lane.b32.xlu0 %v1015, 48
    %v1017 = vpop.permute.xlu0 %1016
    %vm1018 = vcmask 523648
    %s1019 = scalar_lea.vmem %s1, 24
    %1020 = vst.msk [vmem:[%s1019] sm:$0xff] %vm1018, %v1017
    %s1021 = scalar_lea.vmem [#allocation0], 395
    %s1022 = smov 3
    %v1023 = vld [vmem:[%s1021] ss:$16 sm:%s1022]
    %s1024 = scalar_lea.vmem [#allocation0], 395
    %s1025 = smov 12
    %v1026 = vld [vmem:[%s1024] ss:$16 sm:%s1025]
    %vm1027 = vcmask 1043458
    %v1028 = vsel %vm1027, %v1026, %v1023
    %s1029 = scalar_lea.vmem [#allocation0], 395
    %s1030 = smov 48
    %v1031 = vld [vmem:[%s1029] ss:$16 sm:%s1030]
    %vm1032 = vcmask 1045508
    %v1033 = vsel %vm1032, %v1031, %v1028
    %s1034 = scalar_lea.vmem [#allocation0], 395
    %s1035 = smov 192
    %v1036 = vld [vmem:[%s1034] ss:$16 sm:%s1035]
    %vm1037 = vcmask 1047558
    %v1038 = vsel %vm1037, %v1036, %v1033
    %1039 = vrot.lane.b32.xlu0 %v1038, 48
    %v1040 = vpop.permute.xlu0 %1039
    %vm1041 = vcmask 523648
    %s1042 = scalar_lea.vmem %s1, 56
    %1043 = vst.msk [vmem:[%s1042] sm:$0xff] %vm1041, %v1040
    %s1044 = scalar_lea.vmem [#allocation0], 2
    %s1045 = smov 3
    %v1046 = vld [vmem:[%s1044] ss:$16 sm:%s1045]
    %s1047 = scalar_lea.vmem [#allocation0], 2
    %s1048 = smov 12
    %v1049 = vld [vmem:[%s1047] ss:$16 sm:%s1048]
    %vm1050 = vcmask 1043458
    %v1051 = vsel %vm1050, %v1049, %v1046
    %s1052 = scalar_lea.vmem [#allocation0], 2
    %s1053 = smov 48
    %v1054 = vld [vmem:[%s1052] ss:$16 sm:%s1053]
    %vm1055 = vcmask 1045508
    %v1056 = vsel %vm1055, %v1054, %v1051
    %s1057 = scalar_lea.vmem [#allocation0], 2
    %s1058 = smov 192
    %v1059 = vld [vmem:[%s1057] ss:$16 sm:%s1058]
    %vm1060 = vcmask 1047558
    %v1061 = vsel %vm1060, %v1059, %v1056
    %1062 = vrot.lane.b32.xlu0 %v1061, 32
    %v1063 = vpop.permute.xlu0 %1062
    %vm1064 = vcmask 392448
    %1065 = vst.msk [vmem:[%s1] sm:$0xff] %vm1064, %v1063
    %s1066 = scalar_lea.vmem [#allocation0], 258
    %s1067 = smov 3
    %v1068 = vld [vmem:[%s1066] ss:$16 sm:%s1067]
    %s1069 = scalar_lea.vmem [#allocation0], 258
    %s1070 = smov 12
    %v1071 = vld [vmem:[%s1069] ss:$16 sm:%s1070]
    %vm1072 = vcmask 1043458
    %v1073 = vsel %vm1072, %v1071, %v1068
    %s1074 = scalar_lea.vmem [#allocation0], 258
    %s1075 = smov 48
    %v1076 = vld [vmem:[%s1074] ss:$16 sm:%s1075]
    %vm1077 = vcmask 1045508
    %v1078 = vsel %vm1077, %v1076, %v1073
    %s1079 = scalar_lea.vmem [#allocation0], 258
    %s1080 = smov 192
    %v1081 = vld [vmem:[%s1079] ss:$16 sm:%s1080]
    %vm1082 = vcmask 1047558
    %v1083 = vsel %vm1082, %v1081, %v1078
    %1084 = vrot.lane.b32.xlu0 %v1083, 32
    %v1085 = vpop.permute.xlu0 %1084
    %vm1086 = vcmask 392448
    %s1087 = scalar_lea.vmem %s1, 32
    %1088 = vst.msk [vmem:[%s1087] sm:$0xff] %vm1086, %v1085
    %s1089 = scalar_lea.vmem [#allocation0], 10
    %s1090 = smov 3
    %v1091 = vld [vmem:[%s1089] ss:$16 sm:%s1090]
    %s1092 = scalar_lea.vmem [#allocation0], 10
    %s1093 = smov 12
    %v1094 = vld [vmem:[%s1092] ss:$16 sm:%s1093]
    %vm1095 = vcmask 1043458
    %v1096 = vsel %vm1095, %v1094, %v1091
    %s1097 = scalar_lea.vmem [#allocation0], 10
    %s1098 = smov 48
    %v1099 = vld [vmem:[%s1097] ss:$16 sm:%s1098]
    %vm1100 = vcmask 1045508
    %v1101 = vsel %vm1100, %v1099, %v1096
    %s1102 = scalar_lea.vmem [#allocation0], 10
    %s1103 = smov 192
    %v1104 = vld [vmem:[%s1102] ss:$16 sm:%s1103]
    %vm1105 = vcmask 1047558
    %v1106 = vsel %vm1105, %v1104, %v1101
    %1107 = vrot.lane.b32.xlu0 %v1106, 32
    %v1108 = vpop.permute.xlu0 %1107
    %vm1109 = vcmask 392448
    %s1110 = scalar_lea.vmem %s1, 8
    %1111 = vst.msk [vmem:[%s1110] sm:$0xff] %vm1109, %v1108
    %s1112 = scalar_lea.vmem [#allocation0], 266
    %s1113 = smov 3
    %v1114 = vld [vmem:[%s1112] ss:$16 sm:%s1113]
    %s1115 = scalar_lea.vmem [#allocation0], 266
    %s1116 = smov 12
    %v1117 = vld [vmem:[%s1115] ss:$16 sm:%s1116]
    %vm1118 = vcmask 1043458
    %v1119 = vsel %vm1118, %v1117, %v1114
    %s1120 = scalar_lea.vmem [#allocation0], 266
    %s1121 = smov 48
    %v1122 = vld [vmem:[%s1120] ss:$16 sm:%s1121]
    %vm1123 = vcmask 1045508
    %v1124 = vsel %vm1123, %v1122, %v1119
    %s1125 = scalar_lea.vmem [#allocation0], 266
    %s1126 = smov 192
    %v1127 = vld [vmem:[%s1125] ss:$16 sm:%s1126]
    %vm1128 = vcmask 1047558
    %v1129 = vsel %vm1128, %v1127, %v1124
    %1130 = vrot.lane.b32.xlu0 %v1129, 32
    %v1131 = vpop.permute.xlu0 %1130
    %vm1132 = vcmask 392448
    %s1133 = scalar_lea.vmem %s1, 40
    %1134 = vst.msk [vmem:[%s1133] sm:$0xff] %vm1132, %v1131
    %s1135 = scalar_lea.vmem [#allocation0], 130
    %s1136 = smov 3
    %v1137 = vld [vmem:[%s1135] ss:$16 sm:%s1136]
    %s1138 = scalar_lea.vmem [#allocation0], 130
    %s1139 = smov 12
    %v1140 = vld [vmem:[%s1138] ss:$16 sm:%s1139]
    %vm1141 = vcmask 1043458
    %v1142 = vsel %vm1141, %v1140, %v1137
    %s1143 = scalar_lea.vmem [#allocation0], 130
    %s1144 = smov 48
    %v1145 = vld [vmem:[%s1143] ss:$16 sm:%s1144]
    %vm1146 = vcmask 1045508
    %v1147 = vsel %vm1146, %v1145, %v1142
    %s1148 = scalar_lea.vmem [#allocation0], 130
    %s1149 = smov 192
    %v1150 = vld [vmem:[%s1148] ss:$16 sm:%s1149]
    %vm1151 = vcmask 1047558
    %v1152 = vsel %vm1151, %v1150, %v1147
    %1153 = vrot.lane.b32.xlu0 %v1152, 32
    %v1154 = vpop.permute.xlu0 %1153
    %vm1155 = vcmask 392448
    %s1156 = scalar_lea.vmem %s1, 16
    %1157 = vst.msk [vmem:[%s1156] sm:$0xff] %vm1155, %v1154
    %s1158 = scalar_lea.vmem [#allocation0], 386
    %s1159 = smov 3
    %v1160 = vld [vmem:[%s1158] ss:$16 sm:%s1159]
    %s1161 = scalar_lea.vmem [#allocation0], 386
    %s1162 = smov 12
    %v1163 = vld [vmem:[%s1161] ss:$16 sm:%s1162]
    %vm1164 = vcmask 1043458
    %v1165 = vsel %vm1164, %v1163, %v1160
    %s1166 = scalar_lea.vmem [#allocation0], 386
    %s1167 = smov 48
    %v1168 = vld [vmem:[%s1166] ss:$16 sm:%s1167]
    %vm1169 = vcmask 1045508
    %v1170 = vsel %vm1169, %v1168, %v1165
    %s1171 = scalar_lea.vmem [#allocation0], 386
    %s1172 = smov 192
    %v1173 = vld [vmem:[%s1171] ss:$16 sm:%s1172]
    %vm1174 = vcmask 1047558
    %v1175 = vsel %vm1174, %v1173, %v1170
    %1176 = vrot.lane.b32.xlu0 %v1175, 32
    %v1177 = vpop.permute.xlu0 %1176
    %vm1178 = vcmask 392448
    %s1179 = scalar_lea.vmem %s1, 48
    %1180 = vst.msk [vmem:[%s1179] sm:$0xff] %vm1178, %v1177
    %s1181 = scalar_lea.vmem [#allocation0], 138
    %s1182 = smov 3
    %v1183 = vld [vmem:[%s1181] ss:$16 sm:%s1182]
    %s1184 = scalar_lea.vmem [#allocation0], 138
    %s1185 = smov 12
    %v1186 = vld [vmem:[%s1184] ss:$16 sm:%s1185]
    %vm1187 = vcmask 1043458
    %v1188 = vsel %vm1187, %v1186, %v1183
    %s1189 = scalar_lea.vmem [#allocation0], 138
    %s1190 = smov 48
    %v1191 = vld [vmem:[%s1189] ss:$16 sm:%s1190]
    %vm1192 = vcmask 1045508
    %v1193 = vsel %vm1192, %v1191, %v1188
    %s1194 = scalar_lea.vmem [#allocation0], 138
    %s1195 = smov 192
    %v1196 = vld [vmem:[%s1194] ss:$16 sm:%s1195]
    %vm1197 = vcmask 1047558
    %v1198 = vsel %vm1197, %v1196, %v1193
    %1199 = vrot.lane.b32.xlu0 %v1198, 32
    %v1200 = vpop.permute.xlu0 %1199
    %vm1201 = vcmask 392448
    %s1202 = scalar_lea.vmem %s1, 24
    %1203 = vst.msk [vmem:[%s1202] sm:$0xff] %vm1201, %v1200
    %s1204 = scalar_lea.vmem [#allocation0], 394
    %s1205 = smov 3
    %v1206 = vld [vmem:[%s1204] ss:$16 sm:%s1205]
    %s1207 = scalar_lea.vmem [#allocation0], 394
    %s1208 = smov 12
    %v1209 = vld [vmem:[%s1207] ss:$16 sm:%s1208]
    %vm1210 = vcmask 1043458
    %v1211 = vsel %vm1210, %v1209, %v1206
    %s1212 = scalar_lea.vmem [#allocation0], 394
    %s1213 = smov 48
    %v1214 = vld [vmem:[%s1212] ss:$16 sm:%s1213]
    %vm1215 = vcmask 1045508
    %v1216 = vsel %vm1215, %v1214, %v1211
    %s1217 = scalar_lea.vmem [#allocation0], 394
    %s1218 = smov 192
    %v1219 = vld [vmem:[%s1217] ss:$16 sm:%s1218]
    %vm1220 = vcmask 1047558
    %v1221 = vsel %vm1220, %v1219, %v1216
    %1222 = vrot.lane.b32.xlu0 %v1221, 32
    %v1223 = vpop.permute.xlu0 %1222
    %vm1224 = vcmask 392448
    %s1225 = scalar_lea.vmem %s1, 56
    %1226 = vst.msk [vmem:[%s1225] sm:$0xff] %vm1224, %v1223
    %s1227 = scalar_lea.vmem [#allocation0], 1
    %s1228 = smov 3
    %v1229 = vld [vmem:[%s1227] ss:$16 sm:%s1228]
    %s1230 = scalar_lea.vmem [#allocation0], 1
    %s1231 = smov 12
    %v1232 = vld [vmem:[%s1230] ss:$16 sm:%s1231]
    %vm1233 = vcmask 1043458
    %v1234 = vsel %vm1233, %v1232, %v1229
    %s1235 = scalar_lea.vmem [#allocation0], 1
    %s1236 = smov 48
    %v1237 = vld [vmem:[%s1235] ss:$16 sm:%s1236]
    %vm1238 = vcmask 1045508
    %v1239 = vsel %vm1238, %v1237, %v1234
    %s1240 = scalar_lea.vmem [#allocation0], 1
    %s1241 = smov 192
    %v1242 = vld [vmem:[%s1240] ss:$16 sm:%s1241]
    %vm1243 = vcmask 1047558
    %v1244 = vsel %vm1243, %v1242, %v1239
    %1245 = vrot.lane.b32.xlu0 %v1244, 16
    %v1246 = vpop.permute.xlu0 %1245
    %vm1247 = vcmask 261248
    %1248 = vst.msk [vmem:[%s1] sm:$0xff] %vm1247, %v1246
    %s1249 = scalar_lea.vmem [#allocation0], 257
    %s1250 = smov 3
    %v1251 = vld [vmem:[%s1249] ss:$16 sm:%s1250]
    %s1252 = scalar_lea.vmem [#allocation0], 257
    %s1253 = smov 12
    %v1254 = vld [vmem:[%s1252] ss:$16 sm:%s1253]
    %vm1255 = vcmask 1043458
    %v1256 = vsel %vm1255, %v1254, %v1251
    %s1257 = scalar_lea.vmem [#allocation0], 257
    %s1258 = smov 48
    %v1259 = vld [vmem:[%s1257] ss:$16 sm:%s1258]
    %vm1260 = vcmask 1045508
    %v1261 = vsel %vm1260, %v1259, %v1256
    %s1262 = scalar_lea.vmem [#allocation0], 257
    %s1263 = smov 192
    %v1264 = vld [vmem:[%s1262] ss:$16 sm:%s1263]
    %vm1265 = vcmask 1047558
    %v1266 = vsel %vm1265, %v1264, %v1261
    %1267 = vrot.lane.b32.xlu0 %v1266, 16
    %v1268 = vpop.permute.xlu0 %1267
    %vm1269 = vcmask 261248
    %s1270 = scalar_lea.vmem %s1, 32
    %1271 = vst.msk [vmem:[%s1270] sm:$0xff] %vm1269, %v1268
    %s1272 = scalar_lea.vmem [#allocation0], 9
    %s1273 = smov 3
    %v1274 = vld [vmem:[%s1272] ss:$16 sm:%s1273]
    %s1275 = scalar_lea.vmem [#allocation0], 9
    %s1276 = smov 12
    %v1277 = vld [vmem:[%s1275] ss:$16 sm:%s1276]
    %vm1278 = vcmask 1043458
    %v1279 = vsel %vm1278, %v1277, %v1274
    %s1280 = scalar_lea.vmem [#allocation0], 9
    %s1281 = smov 48
    %v1282 = vld [vmem:[%s1280] ss:$16 sm:%s1281]
    %vm1283 = vcmask 1045508
    %v1284 = vsel %vm1283, %v1282, %v1279
    %s1285 = scalar_lea.vmem [#allocation0], 9
    %s1286 = smov 192
    %v1287 = vld [vmem:[%s1285] ss:$16 sm:%s1286]
    %vm1288 = vcmask 1047558
    %v1289 = vsel %vm1288, %v1287, %v1284
    %1290 = vrot.lane.b32.xlu0 %v1289, 16
    %v1291 = vpop.permute.xlu0 %1290
    %vm1292 = vcmask 261248
    %s1293 = scalar_lea.vmem %s1, 8
    %1294 = vst.msk [vmem:[%s1293] sm:$0xff] %vm1292, %v1291
    %s1295 = scalar_lea.vmem [#allocation0], 265
    %s1296 = smov 3
    %v1297 = vld [vmem:[%s1295] ss:$16 sm:%s1296]
    %s1298 = scalar_lea.vmem [#allocation0], 265
    %s1299 = smov 12
    %v1300 = vld [vmem:[%s1298] ss:$16 sm:%s1299]
    %vm1301 = vcmask 1043458
    %v1302 = vsel %vm1301, %v1300, %v1297
    %s1303 = scalar_lea.vmem [#allocation0], 265
    %s1304 = smov 48
    %v1305 = vld [vmem:[%s1303] ss:$16 sm:%s1304]
    %vm1306 = vcmask 1045508
    %v1307 = vsel %vm1306, %v1305, %v1302
    %s1308 = scalar_lea.vmem [#allocation0], 265
    %s1309 = smov 192
    %v1310 = vld [vmem:[%s1308] ss:$16 sm:%s1309]
    %vm1311 = vcmask 1047558
    %v1312 = vsel %vm1311, %v1310, %v1307
    %1313 = vrot.lane.b32.xlu0 %v1312, 16
    %v1314 = vpop.permute.xlu0 %1313
    %vm1315 = vcmask 261248
    %s1316 = scalar_lea.vmem %s1, 40
    %1317 = vst.msk [vmem:[%s1316] sm:$0xff] %vm1315, %v1314
    %s1318 = scalar_lea.vmem [#allocation0], 129
    %s1319 = smov 3
    %v1320 = vld [vmem:[%s1318] ss:$16 sm:%s1319]
    %s1321 = scalar_lea.vmem [#allocation0], 129
    %s1322 = smov 12
    %v1323 = vld [vmem:[%s1321] ss:$16 sm:%s1322]
    %vm1324 = vcmask 1043458
    %v1325 = vsel %vm1324, %v1323, %v1320
    %s1326 = scalar_lea.vmem [#allocation0], 129
    %s1327 = smov 48
    %v1328 = vld [vmem:[%s1326] ss:$16 sm:%s1327]
    %vm1329 = vcmask 1045508
    %v1330 = vsel %vm1329, %v1328, %v1325
    %s1331 = scalar_lea.vmem [#allocation0], 129
    %s1332 = smov 192
    %v1333 = vld [vmem:[%s1331] ss:$16 sm:%s1332]
    %vm1334 = vcmask 1047558
    %v1335 = vsel %vm1334, %v1333, %v1330
    %1336 = vrot.lane.b32.xlu0 %v1335, 16
    %v1337 = vpop.permute.xlu0 %1336
    %vm1338 = vcmask 261248
    %s1339 = scalar_lea.vmem %s1, 16
    %1340 = vst.msk [vmem:[%s1339] sm:$0xff] %vm1338, %v1337
    %s1341 = scalar_lea.vmem [#allocation0], 385
    %s1342 = smov 3
    %v1343 = vld [vmem:[%s1341] ss:$16 sm:%s1342]
    %s1344 = scalar_lea.vmem [#allocation0], 385
    %s1345 = smov 12
    %v1346 = vld [vmem:[%s1344] ss:$16 sm:%s1345]
    %vm1347 = vcmask 1043458
    %v1348 = vsel %vm1347, %v1346, %v1343
    %s1349 = scalar_lea.vmem [#allocation0], 385
    %s1350 = smov 48
    %v1351 = vld [vmem:[%s1349] ss:$16 sm:%s1350]
    %vm1352 = vcmask 1045508
    %v1353 = vsel %vm1352, %v1351, %v1348
    %s1354 = scalar_lea.vmem [#allocation0], 385
    %s1355 = smov 192
    %v1356 = vld [vmem:[%s1354] ss:$16 sm:%s1355]
    %vm1357 = vcmask 1047558
    %v1358 = vsel %vm1357, %v1356, %v1353
    %1359 = vrot.lane.b32.xlu0 %v1358, 16
    %v1360 = vpop.permute.xlu0 %1359
    %vm1361 = vcmask 261248
    %s1362 = scalar_lea.vmem %s1, 48
    %1363 = vst.msk [vmem:[%s1362] sm:$0xff] %vm1361, %v1360
    %s1364 = scalar_lea.vmem [#allocation0], 137
    %s1365 = smov 3
    %v1366 = vld [vmem:[%s1364] ss:$16 sm:%s1365]
    %s1367 = scalar_lea.vmem [#allocation0], 137
    %s1368 = smov 12
    %v1369 = vld [vmem:[%s1367] ss:$16 sm:%s1368]
    %vm1370 = vcmask 1043458
    %v1371 = vsel %vm1370, %v1369, %v1366
    %s1372 = scalar_lea.vmem [#allocation0], 137
    %s1373 = smov 48
    %v1374 = vld [vmem:[%s1372] ss:$16 sm:%s1373]
    %vm1375 = vcmask 1045508
    %v1376 = vsel %vm1375, %v1374, %v1371
    %s1377 = scalar_lea.vmem [#allocation0], 137
    %s1378 = smov 192
    %v1379 = vld [vmem:[%s1377] ss:$16 sm:%s1378]
    %vm1380 = vcmask 1047558
    %v1381 = vsel %vm1380, %v1379, %v1376
    %1382 = vrot.lane.b32.xlu0 %v1381, 16
    %v1383 = vpop.permute.xlu0 %1382
    %vm1384 = vcmask 261248
    %s1385 = scalar_lea.vmem %s1, 24
    %1386 = vst.msk [vmem:[%s1385] sm:$0xff] %vm1384, %v1383
    %s1387 = scalar_lea.vmem [#allocation0], 393
    %s1388 = smov 3
    %v1389 = vld [vmem:[%s1387] ss:$16 sm:%s1388]
    %s1390 = scalar_lea.vmem [#allocation0], 393
    %s1391 = smov 12
    %v1392 = vld [vmem:[%s1390] ss:$16 sm:%s1391]
    %vm1393 = vcmask 1043458
    %v1394 = vsel %vm1393, %v1392, %v1389
    %s1395 = scalar_lea.vmem [#allocation0], 393
    %s1396 = smov 48
    %v1397 = vld [vmem:[%s1395] ss:$16 sm:%s1396]
    %vm1398 = vcmask 1045508
    %v1399 = vsel %vm1398, %v1397, %v1394
    %s1400 = scalar_lea.vmem [#allocation0], 393
    %s1401 = smov 192
    %v1402 = vld [vmem:[%s1400] ss:$16 sm:%s1401]
    %vm1403 = vcmask 1047558
    %v1404 = vsel %vm1403, %v1402, %v1399
    %1405 = vrot.lane.b32.xlu0 %v1404, 16
    %v1406 = vpop.permute.xlu0 %1405
    %vm1407 = vcmask 261248
    %s1408 = scalar_lea.vmem %s1, 56
    %1409 = vst.msk [vmem:[%s1408] sm:$0xff] %vm1407, %v1406
    %1410 = vsyncpa [#allocation1], 1

// kernel: squeeze.4
$region0: #{squeeze.4}
  %s0 = inlined_call_operand.vmem [shape: f32[2,1,16,16,16], index: 0, kind: input, shape index: {}]
  %s1 = inlined_call_operand.vmem [shape: f32[32,256], index: 1, kind: output, shape index: {}]
  %v2 = vld [vmem:[%s0] ss:$8 sm:$0xf]
  %v3 = vld [vmem:[%s0] ss:$8 sm:$0xf0]
  %vm4 = vcmask 1047556
  %v5 = vsel %vm4, %v3, %v2
  %vm6 = vcmask 130048
  %7 = vst.msk [vmem:[%s1] ss:$8 sm:$0x3] %vm6, %v5
  %s8 = scalar_lea.vmem %s1, 4294967281
  %9 = vst.msk [vmem:[%s8] ss:$8 sm:$0xc] %vm6, %v5
  %s10 = scalar_lea.vmem %s1, 4294967266
  %11 = vst.msk [vmem:[%s10] ss:$8 sm:$0x30] %vm6, %v5
  %s12 = scalar_lea.vmem %s1, 4294967251
  %13 = vst.msk [vmem:[%s12] ss:$8 sm:$0xc0] %vm6, %v5
  %s14 = scalar_lea.vmem %s0, 64
  %v15 = vld [vmem:[%s14] ss:$8 sm:$0xf]
  %s16 = scalar_lea.vmem %s0, 64
  %v17 = vld [vmem:[%s16] ss:$8 sm:$0xf0]
  %vm18 = vcmask 1047556
  %v19 = vsel %vm18, %v17, %v15
  %vm20 = vcmask 130048
  %s21 = scalar_lea.vmem %s1, 4
  %22 = vst.msk [vmem:[%s21] ss:$8 sm:$0x3] %vm20, %v19
  %s23 = scalar_lea.vmem %s1, 4294967285
  %24 = vst.msk [vmem:[%s23] ss:$8 sm:$0xc] %vm20, %v19
  %s25 = scalar_lea.vmem %s1, 4294967270
  %26 = vst.msk [vmem:[%s25] ss:$8 sm:$0x30] %vm20, %v19
  %s27 = scalar_lea.vmem %s1, 4294967255
  %28 = vst.msk [vmem:[%s27] ss:$8 sm:$0xc0] %vm20, %v19
  %s29 = scalar_lea.vmem %s0, 128
  %v30 = vld [vmem:[%s29] ss:$8 sm:$0xf]
  %s31 = scalar_lea.vmem %s0, 128
  %v32 = vld [vmem:[%s31] ss:$8 sm:$0xf0]
  %vm33 = vcmask 1047556
  %v34 = vsel %vm33, %v32, %v30
  %vm35 = vcmask 130048
  %s36 = scalar_lea.vmem %s1, 16
  %37 = vst.msk [vmem:[%s36] ss:$8 sm:$0x3] %vm35, %v34
  %s38 = scalar_lea.vmem %s1, 1
  %39 = vst.msk [vmem:[%s38] ss:$8 sm:$0xc] %vm35, %v34
  %s40 = scalar_lea.vmem %s1, 4294967282
  %41 = vst.msk [vmem:[%s40] ss:$8 sm:$0x30] %vm35, %v34
  %s42 = scalar_lea.vmem %s1, 4294967267
  %43 = vst.msk [vmem:[%s42] ss:$8 sm:$0xc0] %vm35, %v34
  %s44 = scalar_lea.vmem %s0, 192
  %v45 = vld [vmem:[%s44] ss:$8 sm:$0xf]
  %s46 = scalar_lea.vmem %s0, 192
  %v47 = vld [vmem:[%s46] ss:$8 sm:$0xf0]
  %vm48 = vcmask 1047556
  %v49 = vsel %vm48, %v47, %v45
  %vm50 = vcmask 130048
  %s51 = scalar_lea.vmem %s1, 20
  %52 = vst.msk [vmem:[%s51] ss:$8 sm:$0x3] %vm50, %v49
  %s53 = scalar_lea.vmem %s1, 5
  %54 = vst.msk [vmem:[%s53] ss:$8 sm:$0xc] %vm50, %v49
  %s55 = scalar_lea.vmem %s1, 4294967286
  %56 = vst.msk [vmem:[%s55] ss:$8 sm:$0x30] %vm50, %v49
  %s57 = scalar_lea.vmem %s1, 4294967271
  %58 = vst.msk [vmem:[%s57] ss:$8 sm:$0xc0] %vm50, %v49
  %s59 = scalar_lea.vmem %s0, 256
  %v60 = vld [vmem:[%s59] ss:$8 sm:$0xf]
  %s61 = scalar_lea.vmem %s0, 256
  %v62 = vld [vmem:[%s61] ss:$8 sm:$0xf0]
  %vm63 = vcmask 1047556
  %v64 = vsel %vm63, %v62, %v60
  %vm65 = vcmask 130048
  %s66 = scalar_lea.vmem %s1, 32
  %67 = vst.msk [vmem:[%s66] ss:$8 sm:$0x3] %vm65, %v64
  %s68 = scalar_lea.vmem %s1, 17
  %69 = vst.msk [vmem:[%s68] ss:$8 sm:$0xc] %vm65, %v64
  %s70 = scalar_lea.vmem %s1, 2
  %71 = vst.msk [vmem:[%s70] ss:$8 sm:$0x30] %vm65, %v64
  %s72 = scalar_lea.vmem %s1, 4294967283
  %73 = vst.msk [vmem:[%s72] ss:$8 sm:$0xc0] %vm65, %v64
  %s74 = scalar_lea.vmem %s0, 320
  %v75 = vld [vmem:[%s74] ss:$8 sm:$0xf]
  %s76 = scalar_lea.vmem %s0, 320
  %v77 = vld [vmem:[%s76] ss:$8 sm:$0xf0]
  %vm78 = vcmask 1047556
  %v79 = vsel %vm78, %v77, %v75
  %vm80 = vcmask 130048
  %s81 = scalar_lea.vmem %s1, 36
  %82 = vst.msk [vmem:[%s81] ss:$8 sm:$0x3] %vm80, %v79
  %s83 = scalar_lea.vmem %s1, 21
  %84 = vst.msk [vmem:[%s83] ss:$8 sm:$0xc] %vm80, %v79
  %s85 = scalar_lea.vmem %s1, 6
  %86 = vst.msk [vmem:[%s85] ss:$8 sm:$0x30] %vm80, %v79
  %s87 = scalar_lea.vmem %s1, 4294967287
  %88 = vst.msk [vmem:[%s87] ss:$8 sm:$0xc0] %vm80, %v79
  %s89 = scalar_lea.vmem %s0, 384
  %v90 = vld [vmem:[%s89] ss:$8 sm:$0xf]
  %s91 = scalar_lea.vmem %s0, 384
  %v92 = vld [vmem:[%s91] ss:$8 sm:$0xf0]
  %vm93 = vcmask 1047556
  %v94 = vsel %vm93, %v92, %v90
  %vm95 = vcmask 130048
  %s96 = scalar_lea.vmem %s1, 48
  %97 = vst.msk [vmem:[%s96] ss:$8 sm:$0x3] %vm95, %v94
  %s98 = scalar_lea.vmem %s1, 33
  %99 = vst.msk [vmem:[%s98] ss:$8 sm:$0xc] %vm95, %v94
  %s100 = scalar_lea.vmem %s1, 18
  %101 = vst.msk [vmem:[%s100] ss:$8 sm:$0x30] %vm95, %v94
  %s102 = scalar_lea.vmem %s1, 3
  %103 = vst.msk [vmem:[%s102] ss:$8 sm:$0xc0] %vm95, %v94
  %s104 = scalar_lea.vmem %s0, 448
  %v105 = vld [vmem:[%s104] ss:$8 sm:$0xf]
  %s106 = scalar_lea.vmem %s0, 448
  %v107 = vld [vmem:[%s106] ss:$8 sm:$0xf0]
  %vm108 = vcmask 1047556
  %v109 = vsel %vm108, %v107, %v105
  %vm110 = vcmask 130048
  %s111 = scalar_lea.vmem %s1, 52
  %112 = vst.msk [vmem:[%s111] ss:$8 sm:$0x3] %vm110, %v109
  %s113 = scalar_lea.vmem %s1, 37
  %114 = vst.msk [vmem:[%s113] ss:$8 sm:$0xc] %vm110, %v109
  %s115 = scalar_lea.vmem %s1, 22
  %116 = vst.msk [vmem:[%s115] ss:$8 sm:$0x30] %vm110, %v109
  %s117 = scalar_lea.vmem %s1, 7
  %118 = vst.msk [vmem:[%s117] ss:$8 sm:$0xc0] %vm110, %v109
  %s119 = scalar_lea.vmem %s0, 7
  %s120 = smov 3
  %v121 = vld [vmem:[%s119] ss:$16 sm:%s120]
  %s122 = scalar_lea.vmem %s0, 7
  %s123 = smov 12
  %v124 = vld [vmem:[%s122] ss:$16 sm:%s123]
  %vm125 = vcmask 1043458
  %v126 = vsel %vm125, %v124, %v121
  %s127 = scalar_lea.vmem %s0, 7
  %s128 = smov 48
  %v129 = vld [vmem:[%s127] ss:$16 sm:%s128]
  %vm130 = vcmask 1045508
  %v131 = vsel %vm130, %v129, %v126
  %s132 = scalar_lea.vmem %s0, 7
  %s133 = smov 192
  %v134 = vld [vmem:[%s132] ss:$16 sm:%s133]
  %vm135 = vcmask 1047558
  %v136 = vsel %vm135, %v134, %v131
  %137 = vrot.lane.b32.xlu0 %v136, 112
  %v138 = vpop.permute.xlu0 %137
  %vm139 = vcmask 1048448
  %140 = vst.msk [vmem:[%s1] sm:$0xff] %vm139, %v138
  %s141 = scalar_lea.vmem %s0, 263
  %s142 = smov 3
  %v143 = vld [vmem:[%s141] ss:$16 sm:%s142]
  %s144 = scalar_lea.vmem %s0, 263
  %s145 = smov 12
  %v146 = vld [vmem:[%s144] ss:$16 sm:%s145]
  %vm147 = vcmask 1043458
  %v148 = vsel %vm147, %v146, %v143
  %s149 = scalar_lea.vmem %s0, 263
  %s150 = smov 48
  %v151 = vld [vmem:[%s149] ss:$16 sm:%s150]
  %vm152 = vcmask 1045508
  %v153 = vsel %vm152, %v151, %v148
  %s154 = scalar_lea.vmem %s0, 263
  %s155 = smov 192
  %v156 = vld [vmem:[%s154] ss:$16 sm:%s155]
  %vm157 = vcmask 1047558
  %v158 = vsel %vm157, %v156, %v153
  %159 = vrot.lane.b32.xlu0 %v158, 112
  %v160 = vpop.permute.xlu0 %159
  %vm161 = vcmask 1048448
  %s162 = scalar_lea.vmem %s1, 32
  %163 = vst.msk [vmem:[%s162] sm:$0xff] %vm161, %v160
  %s164 = scalar_lea.vmem %s0, 15
  %s165 = smov 3
  %v166 = vld [vmem:[%s164] ss:$16 sm:%s165]
  %s167 = scalar_lea.vmem %s0, 15
  %s168 = smov 12
  %v169 = vld [vmem:[%s167] ss:$16 sm:%s168]
  %vm170 = vcmask 1043458
  %v171 = vsel %vm170, %v169, %v166
  %s172 = scalar_lea.vmem %s0, 15
  %s173 = smov 48
  %v174 = vld [vmem:[%s172] ss:$16 sm:%s173]
  %vm175 = vcmask 1045508
  %v176 = vsel %vm175, %v174, %v171
  %s177 = scalar_lea.vmem %s0, 15
  %s178 = smov 192
  %v179 = vld [vmem:[%s177] ss:$16 sm:%s178]
  %vm180 = vcmask 1047558
  %v181 = vsel %vm180, %v179, %v176
  %182 = vrot.lane.b32.xlu0 %v181, 112
  %v183 = vpop.permute.xlu0 %182
  %vm184 = vcmask 1048448
  %s185 = scalar_lea.vmem %s1, 8
  %186 = vst.msk [vmem:[%s185] sm:$0xff] %vm184, %v183
  %s187 = scalar_lea.vmem %s0, 271
  %s188 = smov 3
  %v189 = vld [vmem:[%s187] ss:$16 sm:%s188]
  %s190 = scalar_lea.vmem %s0, 271
  %s191 = smov 12
  %v192 = vld [vmem:[%s190] ss:$16 sm:%s191]
  %vm193 = vcmask 1043458
  %v194 = vsel %vm193, %v192, %v189
  %s195 = scalar_lea.vmem %s0, 271
  %s196 = smov 48
  %v197 = vld [vmem:[%s195] ss:$16 sm:%s196]
  %vm198 = vcmask 1045508
  %v199 = vsel %vm198, %v197, %v194
  %s200 = scalar_lea.vmem %s0, 271
  %s201 = smov 192
  %v202 = vld [vmem:[%s200] ss:$16 sm:%s201]
  %vm203 = vcmask 1047558
  %v204 = vsel %vm203, %v202, %v199
  %205 = vrot.lane.b32.xlu0 %v204, 112
  %v206 = vpop.permute.xlu0 %205
  %vm207 = vcmask 1048448
  %s208 = scalar_lea.vmem %s1, 40
  %209 = vst.msk [vmem:[%s208] sm:$0xff] %vm207, %v206
  %s210 = scalar_lea.vmem %s0, 135
  %s211 = smov 3
  %v212 = vld [vmem:[%s210] ss:$16 sm:%s211]
  %s213 = scalar_lea.vmem %s0, 135
  %s214 = smov 12
  %v215 = vld [vmem:[%s213] ss:$16 sm:%s214]
  %vm216 = vcmask 1043458
  %v217 = vsel %vm216, %v215, %v212
  %s218 = scalar_lea.vmem %s0, 135
  %s219 = smov 48
  %v220 = vld [vmem:[%s218] ss:$16 sm:%s219]
  %vm221 = vcmask 1045508
  %v222 = vsel %vm221, %v220, %v217
  %s223 = scalar_lea.vmem %s0, 135
  %s224 = smov 192
  %v225 = vld [vmem:[%s223] ss:$16 sm:%s224]
  %vm226 = vcmask 1047558
  %v227 = vsel %vm226, %v225, %v222
  %228 = vrot.lane.b32.xlu0 %v227, 112
  %v229 = vpop.permute.xlu0 %228
  %vm230 = vcmask 1048448
  %s231 = scalar_lea.vmem %s1, 16
  %232 = vst.msk [vmem:[%s231] sm:$0xff] %vm230, %v229
  %s233 = scalar_lea.vmem %s0, 391
  %s234 = smov 3
  %v235 = vld [vmem:[%s233] ss:$16 sm:%s234]
  %s236 = scalar_lea.vmem %s0, 391
  %s237 = smov 12
  %v238 = vld [vmem:[%s236] ss:$16 sm:%s237]
  %vm239 = vcmask 1043458
  %v240 = vsel %vm239, %v238, %v235
  %s241 = scalar_lea.vmem %s0, 391
  %s242 = smov 48
  %v243 = vld [vmem:[%s241] ss:$16 sm:%s242]
  %vm244 = vcmask 1045508
  %v245 = vsel %vm244, %v243, %v240
  %s246 = scalar_lea.vmem %s0, 391
  %s247 = smov 192
  %v248 = vld [vmem:[%s246] ss:$16 sm:%s247]
  %vm249 = vcmask 1047558
  %v250 = vsel %vm249, %v248, %v245
  %251 = vrot.lane.b32.xlu0 %v250, 112
  %v252 = vpop.permute.xlu0 %251
  %vm253 = vcmask 1048448
  %s254 = scalar_lea.vmem %s1, 48
  %255 = vst.msk [vmem:[%s254] sm:$0xff] %vm253, %v252
  %s256 = scalar_lea.vmem %s0, 143
  %s257 = smov 3
  %v258 = vld [vmem:[%s256] ss:$16 sm:%s257]
  %s259 = scalar_lea.vmem %s0, 143
  %s260 = smov 12
  %v261 = vld [vmem:[%s259] ss:$16 sm:%s260]
  %vm262 = vcmask 1043458
  %v263 = vsel %vm262, %v261, %v258
  %s264 = scalar_lea.vmem %s0, 143
  %s265 = smov 48
  %v266 = vld [vmem:[%s264] ss:$16 sm:%s265]
  %vm267 = vcmask 1045508
  %v268 = vsel %vm267, %v266, %v263
  %s269 = scalar_lea.vmem %s0, 143
  %s270 = smov 192
  %v271 = vld [vmem:[%s269] ss:$16 sm:%s270]
  %vm272 = vcmask 1047558
  %v273 = vsel %vm272, %v271, %v268
  %274 = vrot.lane.b32.xlu0 %v273, 112
  %v275 = vpop.permute.xlu0 %274
  %vm276 = vcmask 1048448
  %s277 = scalar_lea.vmem %s1, 24
  %278 = vst.msk [vmem:[%s277] sm:$0xff] %vm276, %v275
  %s279 = scalar_lea.vmem %s0, 399
  %s280 = smov 3
  %v281 = vld [vmem:[%s279] ss:$16 sm:%s280]
  %s282 = scalar_lea.vmem %s0, 399
  %s283 = smov 12
  %v284 = vld [vmem:[%s282] ss:$16 sm:%s283]
  %vm285 = vcmask 1043458
  %v286 = vsel %vm285, %v284, %v281
  %s287 = scalar_lea.vmem %s0, 399
  %s288 = smov 48
  %v289 = vld [vmem:[%s287] ss:$16 sm:%s288]
  %vm290 = vcmask 1045508
  %v291 = vsel %vm290, %v289, %v286
  %s292 = scalar_lea.vmem %s0, 399
  %s293 = smov 192
  %v294 = vld [vmem:[%s292] ss:$16 sm:%s293]
  %vm295 = vcmask 1047558
  %v296 = vsel %vm295, %v294, %v291
  %297 = vrot.lane.b32.xlu0 %v296, 112
  %v298 = vpop.permute.xlu0 %297
  %vm299 = vcmask 1048448
  %s300 = scalar_lea.vmem %s1, 56
  %301 = vst.msk [vmem:[%s300] sm:$0xff] %vm299, %v298
  %s302 = scalar_lea.vmem %s0, 6
  %s303 = smov 3
  %v304 = vld [vmem:[%s302] ss:$16 sm:%s303]
  %s305 = scalar_lea.vmem %s0, 6
  %s306 = smov 12
  %v307 = vld [vmem:[%s305] ss:$16 sm:%s306]
  %vm308 = vcmask 1043458
  %v309 = vsel %vm308, %v307, %v304
  %s310 = scalar_lea.vmem %s0, 6
  %s311 = smov 48
  %v312 = vld [vmem:[%s310] ss:$16 sm:%s311]
  %vm313 = vcmask 1045508
  %v314 = vsel %vm313, %v312, %v309
  %s315 = scalar_lea.vmem %s0, 6
  %s316 = smov 192
  %v317 = vld [vmem:[%s315] ss:$16 sm:%s316]
  %vm318 = vcmask 1047558
  %v319 = vsel %vm318, %v317, %v314
  %320 = vrot.lane.b32.xlu0 %v319, 96
  %v321 = vpop.permute.xlu0 %320
  %vm322 = vcmask 917248
  %323 = vst.msk [vmem:[%s1] sm:$0xff] %vm322, %v321
  %s324 = scalar_lea.vmem %s0, 262
  %s325 = smov 3
  %v326 = vld [vmem:[%s324] ss:$16 sm:%s325]
  %s327 = scalar_lea.vmem %s0, 262
  %s328 = smov 12
  %v329 = vld [vmem:[%s327] ss:$16 sm:%s328]
  %vm330 = vcmask 1043458
  %v331 = vsel %vm330, %v329, %v326
  %s332 = scalar_lea.vmem %s0, 262
  %s333 = smov 48
  %v334 = vld [vmem:[%s332] ss:$16 sm:%s333]
  %vm335 = vcmask 1045508
  %v336 = vsel %vm335, %v334, %v331
  %s337 = scalar_lea.vmem %s0, 262
  %s338 = smov 192
  %v339 = vld [vmem:[%s337] ss:$16 sm:%s338]
  %vm340 = vcmask 1047558
  %v341 = vsel %vm340, %v339, %v336
  %342 = vrot.lane.b32.xlu0 %v341, 96
  %v343 = vpop.permute.xlu0 %342
  %vm344 = vcmask 917248
  %s345 = scalar_lea.vmem %s1, 32
  %346 = vst.msk [vmem:[%s345] sm:$0xff] %vm344, %v343
  %s347 = scalar_lea.vmem %s0, 14
  %s348 = smov 3
  %v349 = vld [vmem:[%s347] ss:$16 sm:%s348]
  %s350 = scalar_lea.vmem %s0, 14
  %s351 = smov 12
  %v352 = vld [vmem:[%s350] ss:$16 sm:%s351]
  %vm353 = vcmask 1043458
  %v354 = vsel %vm353, %v352, %v349
  %s355 = scalar_lea.vmem %s0, 14
  %s356 = smov 48
  %v357 = vld [vmem:[%s355] ss:$16 sm:%s356]
  %vm358 = vcmask 1045508
  %v359 = vsel %vm358, %v357, %v354
  %s360 = scalar_lea.vmem %s0, 14
  %s361 = smov 192
  %v362 = vld [vmem:[%s360] ss:$16 sm:%s361]
  %vm363 = vcmask 1047558
  %v364 = vsel %vm363, %v362, %v359
  %365 = vrot.lane.b32.xlu0 %v364, 96
  %v366 = vpop.permute.xlu0 %365
  %vm367 = vcmask 917248
  %s368 = scalar_lea.vmem %s1, 8
  %369 = vst.msk [vmem:[%s368] sm:$0xff] %vm367, %v366
  %s370 = scalar_lea.vmem %s0, 270
  %s371 = smov 3
  %v372 = vld [vmem:[%s370] ss:$16 sm:%s371]
  %s373 = scalar_lea.vmem %s0, 270
  %s374 = smov 12
  %v375 = vld [vmem:[%s373] ss:$16 sm:%s374]
  %vm376 = vcmask 1043458
  %v377 = vsel %vm376, %v375, %v372
  %s378 = scalar_lea.vmem %s0, 270
  %s379 = smov 48
  %v380 = vld [vmem:[%s378] ss:$16 sm:%s379]
  %vm381 = vcmask 1045508
  %v382 = vsel %vm381, %v380, %v377
  %s383 = scalar_lea.vmem %s0, 270
  %s384 = smov 192
  %v385 = vld [vmem:[%s383] ss:$16 sm:%s384]
  %vm386 = vcmask 1047558
  %v387 = vsel %vm386, %v385, %v382
  %388 = vrot.lane.b32.xlu0 %v387, 96
  %v389 = vpop.permute.xlu0 %388
  %vm390 = vcmask 917248
  %s391 = scalar_lea.vmem %s1, 40
  %392 = vst.msk [vmem:[%s391] sm:$0xff] %vm390, %v389
  %s393 = scalar_lea.vmem %s0, 134
  %s394 = smov 3
  %v395 = vld [vmem:[%s393] ss:$16 sm:%s394]
  %s396 = scalar_lea.vmem %s0, 134
  %s397 = smov 12
  %v398 = vld [vmem:[%s396] ss:$16 sm:%s397]
  %vm399 = vcmask 1043458
  %v400 = vsel %vm399, %v398, %v395
  %s401 = scalar_lea.vmem %s0, 134
  %s402 = smov 48
  %v403 = vld [vmem:[%s401] ss:$16 sm:%s402]
  %vm404 = vcmask 1045508
  %v405 = vsel %vm404, %v403, %v400
  %s406 = scalar_lea.vmem %s0, 134
  %s407 = smov 192
  %v408 = vld [vmem:[%s406] ss:$16 sm:%s407]
  %vm409 = vcmask 1047558
  %v410 = vsel %vm409, %v408, %v405
  %411 = vrot.lane.b32.xlu0 %v410, 96
  %v412 = vpop.permute.xlu0 %411
  %vm413 = vcmask 917248
  %s414 = scalar_lea.vmem %s1, 16
  %415 = vst.msk [vmem:[%s414] sm:$0xff] %vm413, %v412
  %s416 = scalar_lea.vmem %s0, 390
  %s417 = smov 3
  %v418 = vld [vmem:[%s416] ss:$16 sm:%s417]
  %s419 = scalar_lea.vmem %s0, 390
  %s420 = smov 12
  %v421 = vld [vmem:[%s419] ss:$16 sm:%s420]
  %vm422 = vcmask 1043458
  %v423 = vsel %vm422, %v421, %v418
  %s424 = scalar_lea.vmem %s0, 390
  %s425 = smov 48
  %v426 = vld [vmem:[%s424] ss:$16 sm:%s425]
  %vm427 = vcmask 1045508
  %v428 = vsel %vm427, %v426, %v423
  %s429 = scalar_lea.vmem %s0, 390
  %s430 = smov 192
  %v431 = vld [vmem:[%s429] ss:$16 sm:%s430]
  %vm432 = vcmask 1047558
  %v433 = vsel %vm432, %v431, %v428
  %434 = vrot.lane.b32.xlu0 %v433, 96
  %v435 = vpop.permute.xlu0 %434
  %vm436 = vcmask 917248
  %s437 = scalar_lea.vmem %s1, 48
  %438 = vst.msk [vmem:[%s437] sm:$0xff] %vm436, %v435
  %s439 = scalar_lea.vmem %s0, 142
  %s440 = smov 3
  %v441 = vld [vmem:[%s439] ss:$16 sm:%s440]
  %s442 = scalar_lea.vmem %s0, 142
  %s443 = smov 12
  %v444 = vld [vmem:[%s442] ss:$16 sm:%s443]
  %vm445 = vcmask 1043458
  %v446 = vsel %vm445, %v444, %v441
  %s447 = scalar_lea.vmem %s0, 142
  %s448 = smov 48
  %v449 = vld [vmem:[%s447] ss:$16 sm:%s448]
  %vm450 = vcmask 1045508
  %v451 = vsel %vm450, %v449, %v446
  %s452 = scalar_lea.vmem %s0, 142
  %s453 = smov 192
  %v454 = vld [vmem:[%s452] ss:$16 sm:%s453]
  %vm455 = vcmask 1047558
  %v456 = vsel %vm455, %v454, %v451
  %457 = vrot.lane.b32.xlu0 %v456, 96
  %v458 = vpop.permute.xlu0 %457
  %vm459 = vcmask 917248
  %s460 = scalar_lea.vmem %s1, 24
  %461 = vst.msk [vmem:[%s460] sm:$0xff] %vm459, %v458
  %s462 = scalar_lea.vmem %s0, 398
  %s463 = smov 3
  %v464 = vld [vmem:[%s462] ss:$16 sm:%s463]
  %s465 = scalar_lea.vmem %s0, 398
  %s466 = smov 12
  %v467 = vld [vmem:[%s465] ss:$16 sm:%s466]
  %vm468 = vcmask 1043458
  %v469 = vsel %vm468, %v467, %v464
  %s470 = scalar_lea.vmem %s0, 398
  %s471 = smov 48
  %v472 = vld [vmem:[%s470] ss:$16 sm:%s471]
  %vm473 = vcmask 1045508
  %v474 = vsel %vm473, %v472, %v469
  %s475 = scalar_lea.vmem %s0, 398
  %s476 = smov 192
  %v477 = vld [vmem:[%s475] ss:$16 sm:%s476]
  %vm478 = vcmask 1047558
  %v479 = vsel %vm478, %v477, %v474
  %480 = vrot.lane.b32.xlu0 %v479, 96
  %v481 = vpop.permute.xlu0 %480
  %vm482 = vcmask 917248
  %s483 = scalar_lea.vmem %s1, 56
  %484 = vst.msk [vmem:[%s483] sm:$0xff] %vm482, %v481
  %s485 = scalar_lea.vmem %s0, 5
  %s486 = smov 3
  %v487 = vld [vmem:[%s485] ss:$16 sm:%s486]
  %s488 = scalar_lea.vmem %s0, 5
  %s489 = smov 12
  %v490 = vld [vmem:[%s488] ss:$16 sm:%s489]
  %vm491 = vcmask 1043458
  %v492 = vsel %vm491, %v490, %v487
  %s493 = scalar_lea.vmem %s0, 5
  %s494 = smov 48
  %v495 = vld [vmem:[%s493] ss:$16 sm:%s494]
  %vm496 = vcmask 1045508
  %v497 = vsel %vm496, %v495, %v492
  %s498 = scalar_lea.vmem %s0, 5
  %s499 = smov 192
  %v500 = vld [vmem:[%s498] ss:$16 sm:%s499]
  %vm501 = vcmask 1047558
  %v502 = vsel %vm501, %v500, %v497
  %503 = vrot.lane.b32.xlu0 %v502, 80
  %v504 = vpop.permute.xlu0 %503
  %vm505 = vcmask 786048
  %506 = vst.msk [vmem:[%s1] sm:$0xff] %vm505, %v504
  %s507 = scalar_lea.vmem %s0, 261
  %s508 = smov 3
  %v509 = vld [vmem:[%s507] ss:$16 sm:%s508]
  %s510 = scalar_lea.vmem %s0, 261
  %s511 = smov 12
  %v512 = vld [vmem:[%s510] ss:$16 sm:%s511]
  %vm513 = vcmask 1043458
  %v514 = vsel %vm513, %v512, %v509
  %s515 = scalar_lea.vmem %s0, 261
  %s516 = smov 48
  %v517 = vld [vmem:[%s515] ss:$16 sm:%s516]
  %vm518 = vcmask 1045508
  %v519 = vsel %vm518, %v517, %v514
  %s520 = scalar_lea.vmem %s0, 261
  %s521 = smov 192
  %v522 = vld [vmem:[%s520] ss:$16 sm:%s521]
  %vm523 = vcmask 1047558
  %v524 = vsel %vm523, %v522, %v519
  %525 = vrot.lane.b32.xlu0 %v524, 80
  %v526 = vpop.permute.xlu0 %525
  %vm527 = vcmask 786048
  %s528 = scalar_lea.vmem %s1, 32
  %529 = vst.msk [vmem:[%s528] sm:$0xff] %vm527, %v526
  %s530 = scalar_lea.vmem %s0, 13
  %s531 = smov 3
  %v532 = vld [vmem:[%s530] ss:$16 sm:%s531]
  %s533 = scalar_lea.vmem %s0, 13
  %s534 = smov 12
  %v535 = vld [vmem:[%s533] ss:$16 sm:%s534]
  %vm536 = vcmask 1043458
  %v537 = vsel %vm536, %v535, %v532
  %s538 = scalar_lea.vmem %s0, 13
  %s539 = smov 48
  %v540 = vld [vmem:[%s538] ss:$16 sm:%s539]
  %vm541 = vcmask 1045508
  %v542 = vsel %vm541, %v540, %v537
  %s543 = scalar_lea.vmem %s0, 13
  %s544 = smov 192
  %v545 = vld [vmem:[%s543] ss:$16 sm:%s544]
  %vm546 = vcmask 1047558
  %v547 = vsel %vm546, %v545, %v542
  %548 = vrot.lane.b32.xlu0 %v547, 80
  %v549 = vpop.permute.xlu0 %548
  %vm550 = vcmask 786048
  %s551 = scalar_lea.vmem %s1, 8
  %552 = vst.msk [vmem:[%s551] sm:$0xff] %vm550, %v549
  %s553 = scalar_lea.vmem %s0, 269
  %s554 = smov 3
  %v555 = vld [vmem:[%s553] ss:$16 sm:%s554]
  %s556 = scalar_lea.vmem %s0, 269
  %s557 = smov 12
  %v558 = vld [vmem:[%s556] ss:$16 sm:%s557]
  %vm559 = vcmask 1043458
  %v560 = vsel %vm559, %v558, %v555
  %s561 = scalar_lea.vmem %s0, 269
  %s562 = smov 48
  %v563 = vld [vmem:[%s561] ss:$16 sm:%s562]
  %vm564 = vcmask 1045508
  %v565 = vsel %vm564, %v563, %v560
  %s566 = scalar_lea.vmem %s0, 269
  %s567 = smov 192
  %v568 = vld [vmem:[%s566] ss:$16 sm:%s567]
  %vm569 = vcmask 1047558
  %v570 = vsel %vm569, %v568, %v565
  %571 = vrot.lane.b32.xlu0 %v570, 80
  %v572 = vpop.permute.xlu0 %571
  %vm573 = vcmask 786048
  %s574 = scalar_lea.vmem %s1, 40
  %575 = vst.msk [vmem:[%s574] sm:$0xff] %vm573, %v572
  %s576 = scalar_lea.vmem %s0, 133
  %s577 = smov 3
  %v578 = vld [vmem:[%s576] ss:$16 sm:%s577]
  %s579 = scalar_lea.vmem %s0, 133
  %s580 = smov 12
  %v581 = vld [vmem:[%s579] ss:$16 sm:%s580]
  %vm582 = vcmask 1043458
  %v583 = vsel %vm582, %v581, %v578
  %s584 = scalar_lea.vmem %s0, 133
  %s585 = smov 48
  %v586 = vld [vmem:[%s584] ss:$16 sm:%s585]
  %vm587 = vcmask 1045508
  %v588 = vsel %vm587, %v586, %v583
  %s589 = scalar_lea.vmem %s0, 133
  %s590 = smov 192
  %v591 = vld [vmem:[%s589] ss:$16 sm:%s590]
  %vm592 = vcmask 1047558
  %v593 = vsel %vm592, %v591, %v588
  %594 = vrot.lane.b32.xlu0 %v593, 80
  %v595 = vpop.permute.xlu0 %594
  %vm596 = vcmask 786048
  %s597 = scalar_lea.vmem %s1, 16
  %598 = vst.msk [vmem:[%s597] sm:$0xff] %vm596, %v595
  %s599 = scalar_lea.vmem %s0, 389
  %s600 = smov 3
  %v601 = vld [vmem:[%s599] ss:$16 sm:%s600]
  %s602 = scalar_lea.vmem %s0, 389
  %s603 = smov 12
  %v604 = vld [vmem:[%s602] ss:$16 sm:%s603]
  %vm605 = vcmask 1043458
  %v606 = vsel %vm605, %v604, %v601
  %s607 = scalar_lea.vmem %s0, 389
  %s608 = smov 48
  %v609 = vld [vmem:[%s607] ss:$16 sm:%s608]
  %vm610 = vcmask 1045508
  %v611 = vsel %vm610, %v609, %v606
  %s612 = scalar_lea.vmem %s0, 389
  %s613 = smov 192
  %v614 = vld [vmem:[%s612] ss:$16 sm:%s613]
  %vm615 = vcmask 1047558
  %v616 = vsel %vm615, %v614, %v611
  %617 = vrot.lane.b32.xlu0 %v616, 80
  %v618 = vpop.permute.xlu0 %617
  %vm619 = vcmask 786048
  %s620 = scalar_lea.vmem %s1, 48
  %621 = vst.msk [vmem:[%s620] sm:$0xff] %vm619, %v618
  %s622 = scalar_lea.vmem %s0, 141
  %s623 = smov 3
  %v624 = vld [vmem:[%s622] ss:$16 sm:%s623]
  %s625 = scalar_lea.vmem %s0, 141
  %s626 = smov 12
  %v627 = vld [vmem:[%s625] ss:$16 sm:%s626]
  %vm628 = vcmask 1043458
  %v629 = vsel %vm628, %v627, %v624
  %s630 = scalar_lea.vmem %s0, 141
  %s631 = smov 48
  %v632 = vld [vmem:[%s630] ss:$16 sm:%s631]
  %vm633 = vcmask 1045508
  %v634 = vsel %vm633, %v632, %v629
  %s635 = scalar_lea.vmem %s0, 141
  %s636 = smov 192
  %v637 = vld [vmem:[%s635] ss:$16 sm:%s636]
  %vm638 = vcmask 1047558
  %v639 = vsel %vm638, %v637, %v634
  %640 = vrot.lane.b32.xlu0 %v639, 80
  %v641 = vpop.permute.xlu0 %640
  %vm642 = vcmask 786048
  %s643 = scalar_lea.vmem %s1, 24
  %644 = vst.msk [vmem:[%s643] sm:$0xff] %vm642, %v641
  %s645 = scalar_lea.vmem %s0, 397
  %s646 = smov 3
  %v647 = vld [vmem:[%s645] ss:$16 sm:%s646]
  %s648 = scalar_lea.vmem %s0, 397
  %s649 = smov 12
  %v650 = vld [vmem:[%s648] ss:$16 sm:%s649]
  %vm651 = vcmask 1043458
  %v652 = vsel %vm651, %v650, %v647
  %s653 = scalar_lea.vmem %s0, 397
  %s654 = smov 48
  %v655 = vld [vmem:[%s653] ss:$16 sm:%s654]
  %vm656 = vcmask 1045508
  %v657 = vsel %vm656, %v655, %v652
  %s658 = scalar_lea.vmem %s0, 397
  %s659 = smov 192
  %v660 = vld [vmem:[%s658] ss:$16 sm:%s659]
  %vm661 = vcmask 1047558
  %v662 = vsel %vm661, %v660, %v657
  %663 = vrot.lane.b32.xlu0 %v662, 80
  %v664 = vpop.permute.xlu0 %663
  %vm665 = vcmask 786048
  %s666 = scalar_lea.vmem %s1, 56
  %667 = vst.msk [vmem:[%s666] sm:$0xff] %vm665, %v664
  %s668 = scalar_lea.vmem %s0, 4
  %s669 = smov 3
  %v670 = vld [vmem:[%s668] ss:$16 sm:%s669]
  %s671 = scalar_lea.vmem %s0, 4
  %s672 = smov 12
  %v673 = vld [vmem:[%s671] ss:$16 sm:%s672]
  %vm674 = vcmask 1043458
  %v675 = vsel %vm674, %v673, %v670
  %s676 = scalar_lea.vmem %s0, 4
  %s677 = smov 48
  %v678 = vld [vmem:[%s676] ss:$16 sm:%s677]
  %vm679 = vcmask 1045508
  %v680 = vsel %vm679, %v678, %v675
  %s681 = scalar_lea.vmem %s0, 4
  %s682 = smov 192
  %v683 = vld [vmem:[%s681] ss:$16 sm:%s682]
  %vm684 = vcmask 1047558
  %v685 = vsel %vm684, %v683, %v680
  %686 = vrot.lane.b32.xlu0 %v685, 64
  %v687 = vpop.permute.xlu0 %686
  %vm688 = vcmask 654848
  %689 = vst.msk [vmem:[%s1] sm:$0xff] %vm688, %v687
  %s690 = scalar_lea.vmem %s0, 260
  %s691 = smov 3
  %v692 = vld [vmem:[%s690] ss:$16 sm:%s691]
  %s693 = scalar_lea.vmem %s0, 260
  %s694 = smov 12
  %v695 = vld [vmem:[%s693] ss:$16 sm:%s694]
  %vm696 = vcmask 1043458
  %v697 = vsel %vm696, %v695, %v692
  %s698 = scalar_lea.vmem %s0, 260
  %s699 = smov 48
  %v700 = vld [vmem:[%s698] ss:$16 sm:%s699]
  %vm701 = vcmask 1045508
  %v702 = vsel %vm701, %v700, %v697
  %s703 = scalar_lea.vmem %s0, 260
  %s704 = smov 192
  %v705 = vld [vmem:[%s703] ss:$16 sm:%s704]
  %vm706 = vcmask 1047558
  %v707 = vsel %vm706, %v705, %v702
  %708 = vrot.lane.b32.xlu0 %v707, 64
  %v709 = vpop.permute.xlu0 %708
  %vm710 = vcmask 654848
  %s711 = scalar_lea.vmem %s1, 32
  %712 = vst.msk [vmem:[%s711] sm:$0xff] %vm710, %v709
  %s713 = scalar_lea.vmem %s0, 12
  %s714 = smov 3
  %v715 = vld [vmem:[%s713] ss:$16 sm:%s714]
  %s716 = scalar_lea.vmem %s0, 12
  %s717 = smov 12
  %v718 = vld [vmem:[%s716] ss:$16 sm:%s717]
  %vm719 = vcmask 1043458
  %v720 = vsel %vm719, %v718, %v715
  %s721 = scalar_lea.vmem %s0, 12
  %s722 = smov 48
  %v723 = vld [vmem:[%s721] ss:$16 sm:%s722]
  %vm724 = vcmask 1045508
  %v725 = vsel %vm724, %v723, %v720
  %s726 = scalar_lea.vmem %s0, 12
  %s727 = smov 192
  %v728 = vld [vmem:[%s726] ss:$16 sm:%s727]
  %vm729 = vcmask 1047558
  %v730 = vsel %vm729, %v728, %v725
  %731 = vrot.lane.b32.xlu0 %v730, 64
  %v732 = vpop.permute.xlu0 %731
  %vm733 = vcmask 654848
  %s734 = scalar_lea.vmem %s1, 8
  %735 = vst.msk [vmem:[%s734] sm:$0xff] %vm733, %v732
  %s736 = scalar_lea.vmem %s0, 268
  %s737 = smov 3
  %v738 = vld [vmem:[%s736] ss:$16 sm:%s737]
  %s739 = scalar_lea.vmem %s0, 268
  %s740 = smov 12
  %v741 = vld [vmem:[%s739] ss:$16 sm:%s740]
  %vm742 = vcmask 1043458
  %v743 = vsel %vm742, %v741, %v738
  %s744 = scalar_lea.vmem %s0, 268
  %s745 = smov 48
  %v746 = vld [vmem:[%s744] ss:$16 sm:%s745]
  %vm747 = vcmask 1045508
  %v748 = vsel %vm747, %v746, %v743
  %s749 = scalar_lea.vmem %s0, 268
  %s750 = smov 192
  %v751 = vld [vmem:[%s749] ss:$16 sm:%s750]
  %vm752 = vcmask 1047558
  %v753 = vsel %vm752, %v751, %v748
  %754 = vrot.lane.b32.xlu0 %v753, 64
  %v755 = vpop.permute.xlu0 %754
  %vm756 = vcmask 654848
  %s757 = scalar_lea.vmem %s1, 40
  %758 = vst.msk [vmem:[%s757] sm:$0xff] %vm756, %v755
  %s759 = scalar_lea.vmem %s0, 132
  %s760 = smov 3
  %v761 = vld [vmem:[%s759] ss:$16 sm:%s760]
  %s762 = scalar_lea.vmem %s0, 132
  %s763 = smov 12
  %v764 = vld [vmem:[%s762] ss:$16 sm:%s763]
  %vm765 = vcmask 1043458
  %v766 = vsel %vm765, %v764, %v761
  %s767 = scalar_lea.vmem %s0, 132
  %s768 = smov 48
  %v769 = vld [vmem:[%s767] ss:$16 sm:%s768]
  %vm770 = vcmask 1045508
  %v771 = vsel %vm770, %v769, %v766
  %s772 = scalar_lea.vmem %s0, 132
  %s773 = smov 192
  %v774 = vld [vmem:[%s772] ss:$16 sm:%s773]
  %vm775 = vcmask 1047558
  %v776 = vsel %vm775, %v774, %v771
  %777 = vrot.lane.b32.xlu0 %v776, 64
  %v778 = vpop.permute.xlu0 %777
  %vm779 = vcmask 654848
  %s780 = scalar_lea.vmem %s1, 16
  %781 = vst.msk [vmem:[%s780] sm:$0xff] %vm779, %v778
  %s782 = scalar_lea.vmem %s0, 388
  %s783 = smov 3
  %v784 = vld [vmem:[%s782] ss:$16 sm:%s783]
  %s785 = scalar_lea.vmem %s0, 388
  %s786 = smov 12
  %v787 = vld [vmem:[%s785] ss:$16 sm:%s786]
  %vm788 = vcmask 1043458
  %v789 = vsel %vm788, %v787, %v784
  %s790 = scalar_lea.vmem %s0, 388
  %s791 = smov 48
  %v792 = vld [vmem:[%s790] ss:$16 sm:%s791]
  %vm793 = vcmask 1045508
  %v794 = vsel %vm793, %v792, %v789
  %s795 = scalar_lea.vmem %s0, 388
  %s796 = smov 192
  %v797 = vld [vmem:[%s795] ss:$16 sm:%s796]
  %vm798 = vcmask 1047558
  %v799 = vsel %vm798, %v797, %v794
  %800 = vrot.lane.b32.xlu0 %v799, 64
  %v801 = vpop.permute.xlu0 %800
  %vm802 = vcmask 654848
  %s803 = scalar_lea.vmem %s1, 48
  %804 = vst.msk [vmem:[%s803] sm:$0xff] %vm802, %v801
  %s805 = scalar_lea.vmem %s0, 140
  %s806 = smov 3
  %v807 = vld [vmem:[%s805] ss:$16 sm:%s806]
  %s808 = scalar_lea.vmem %s0, 140
  %s809 = smov 12
  %v810 = vld [vmem:[%s808] ss:$16 sm:%s809]
  %vm811 = vcmask 1043458
  %v812 = vsel %vm811, %v810, %v807
  %s813 = scalar_lea.vmem %s0, 140
  %s814 = smov 48
  %v815 = vld [vmem:[%s813] ss:$16 sm:%s814]
  %vm816 = vcmask 1045508
  %v817 = vsel %vm816, %v815, %v812
  %s818 = scalar_lea.vmem %s0, 140
  %s819 = smov 192
  %v820 = vld [vmem:[%s818] ss:$16 sm:%s819]
  %vm821 = vcmask 1047558
  %v822 = vsel %vm821, %v820, %v817
  %823 = vrot.lane.b32.xlu0 %v822, 64
  %v824 = vpop.permute.xlu0 %823
  %vm825 = vcmask 654848
  %s826 = scalar_lea.vmem %s1, 24
  %827 = vst.msk [vmem:[%s826] sm:$0xff] %vm825, %v824
  %s828 = scalar_lea.vmem %s0, 396
  %s829 = smov 3
  %v830 = vld [vmem:[%s828] ss:$16 sm:%s829]
  %s831 = scalar_lea.vmem %s0, 396
  %s832 = smov 12
  %v833 = vld [vmem:[%s831] ss:$16 sm:%s832]
  %vm834 = vcmask 1043458
  %v835 = vsel %vm834, %v833, %v830
  %s836 = scalar_lea.vmem %s0, 396
  %s837 = smov 48
  %v838 = vld [vmem:[%s836] ss:$16 sm:%s837]
  %vm839 = vcmask 1045508
  %v840 = vsel %vm839, %v838, %v835
  %s841 = scalar_lea.vmem %s0, 396
  %s842 = smov 192
  %v843 = vld [vmem:[%s841] ss:$16 sm:%s842]
  %vm844 = vcmask 1047558
  %v845 = vsel %vm844, %v843, %v840
  %846 = vrot.lane.b32.xlu0 %v845, 64
  %v847 = vpop.permute.xlu0 %846
  %vm848 = vcmask 654848
  %s849 = scalar_lea.vmem %s1, 56
  %850 = vst.msk [vmem:[%s849] sm:$0xff] %vm848, %v847
  %s851 = scalar_lea.vmem %s0, 3
  %s852 = smov 3
  %v853 = vld [vmem:[%s851] ss:$16 sm:%s852]
  %s854 = scalar_lea.vmem %s0, 3
  %s855 = smov 12
  %v856 = vld [vmem:[%s854] ss:$16 sm:%s855]
  %vm857 = vcmask 1043458
  %v858 = vsel %vm857, %v856, %v853
  %s859 = scalar_lea.vmem %s0, 3
  %s860 = smov 48
  %v861 = vld [vmem:[%s859] ss:$16 sm:%s860]
  %vm862 = vcmask 1045508
  %v863 = vsel %vm862, %v861, %v858
  %s864 = scalar_lea.vmem %s0, 3
  %s865 = smov 192
  %v866 = vld [vmem:[%s864] ss:$16 sm:%s865]
  %vm867 = vcmask 1047558
  %v868 = vsel %vm867, %v866, %v863
  %869 = vrot.lane.b32.xlu0 %v868, 48
  %v870 = vpop.permute.xlu0 %869
  %vm871 = vcmask 523648
  %872 = vst.msk [vmem:[%s1] sm:$0xff] %vm871, %v870
  %s873 = scalar_lea.vmem %s0, 259
  %s874 = smov 3
  %v875 = vld [vmem:[%s873] ss:$16 sm:%s874]
  %s876 = scalar_lea.vmem %s0, 259
  %s877 = smov 12
  %v878 = vld [vmem:[%s876] ss:$16 sm:%s877]
  %vm879 = vcmask 1043458
  %v880 = vsel %vm879, %v878, %v875
  %s881 = scalar_lea.vmem %s0, 259
  %s882 = smov 48
  %v883 = vld [vmem:[%s881] ss:$16 sm:%s882]
  %vm884 = vcmask 1045508
  %v885 = vsel %vm884, %v883, %v880
  %s886 = scalar_lea.vmem %s0, 259
  %s887 = smov 192
  %v888 = vld [vmem:[%s886] ss:$16 sm:%s887]
  %vm889 = vcmask 1047558
  %v890 = vsel %vm889, %v888, %v885
  %891 = vrot.lane.b32.xlu0 %v890, 48
  %v892 = vpop.permute.xlu0 %891
  %vm893 = vcmask 523648
  %s894 = scalar_lea.vmem %s1, 32
  %895 = vst.msk [vmem:[%s894] sm:$0xff] %vm893, %v892
  %s896 = scalar_lea.vmem %s0, 11
  %s897 = smov 3
  %v898 = vld [vmem:[%s896] ss:$16 sm:%s897]
  %s899 = scalar_lea.vmem %s0, 11
  %s900 = smov 12
  %v901 = vld [vmem:[%s899] ss:$16 sm:%s900]
  %vm902 = vcmask 1043458
  %v903 = vsel %vm902, %v901, %v898
  %s904 = scalar_lea.vmem %s0, 11
  %s905 = smov 48
  %v906 = vld [vmem:[%s904] ss:$16 sm:%s905]
  %vm907 = vcmask 1045508
  %v908 = vsel %vm907, %v906, %v903
  %s909 = scalar_lea.vmem %s0, 11
  %s910 = smov 192
  %v911 = vld [vmem:[%s909] ss:$16 sm:%s910]
  %vm912 = vcmask 1047558
  %v913 = vsel %vm912, %v911, %v908
  %914 = vrot.lane.b32.xlu0 %v913, 48
  %v915 = vpop.permute.xlu0 %914
  %vm916 = vcmask 523648
  %s917 = scalar_lea.vmem %s1, 8
  %918 = vst.msk [vmem:[%s917] sm:$0xff] %vm916, %v915
  %s919 = scalar_lea.vmem %s0, 267
  %s920 = smov 3
  %v921 = vld [vmem:[%s919] ss:$16 sm:%s920]
  %s922 = scalar_lea.vmem %s0, 267
  %s923 = smov 12
  %v924 = vld [vmem:[%s922] ss:$16 sm:%s923]
  %vm925 = vcmask 1043458
  %v926 = vsel %vm925, %v924, %v921
  %s927 = scalar_lea.vmem %s0, 267
  %s928 = smov 48
  %v929 = vld [vmem:[%s927] ss:$16 sm:%s928]
  %vm930 = vcmask 1045508
  %v931 = vsel %vm930, %v929, %v926
  %s932 = scalar_lea.vmem %s0, 267
  %s933 = smov 192
  %v934 = vld [vmem:[%s932] ss:$16 sm:%s933]
  %vm935 = vcmask 1047558
  %v936 = vsel %vm935, %v934, %v931
  %937 = vrot.lane.b32.xlu0 %v936, 48
  %v938 = vpop.permute.xlu0 %937
  %vm939 = vcmask 523648
  %s940 = scalar_lea.vmem %s1, 40
  %941 = vst.msk [vmem:[%s940] sm:$0xff] %vm939, %v938
  %s942 = scalar_lea.vmem %s0, 131
  %s943 = smov 3
  %v944 = vld [vmem:[%s942] ss:$16 sm:%s943]
  %s945 = scalar_lea.vmem %s0, 131
  %s946 = smov 12
  %v947 = vld [vmem:[%s945] ss:$16 sm:%s946]
  %vm948 = vcmask 1043458
  %v949 = vsel %vm948, %v947, %v944
  %s950 = scalar_lea.vmem %s0, 131
  %s951 = smov 48
  %v952 = vld [vmem:[%s950] ss:$16 sm:%s951]
  %vm953 = vcmask 1045508
  %v954 = vsel %vm953, %v952, %v949
  %s955 = scalar_lea.vmem %s0, 131
  %s956 = smov 192
  %v957 = vld [vmem:[%s955] ss:$16 sm:%s956]
  %vm958 = vcmask 1047558
  %v959 = vsel %vm958, %v957, %v954
  %960 = vrot.lane.b32.xlu0 %v959, 48
  %v961 = vpop.permute.xlu0 %960
  %vm962 = vcmask 523648
  %s963 = scalar_lea.vmem %s1, 16
  %964 = vst.msk [vmem:[%s963] sm:$0xff] %vm962, %v961
  %s965 = scalar_lea.vmem %s0, 387
  %s966 = smov 3
  %v967 = vld [vmem:[%s965] ss:$16 sm:%s966]
  %s968 = scalar_lea.vmem %s0, 387
  %s969 = smov 12
  %v970 = vld [vmem:[%s968] ss:$16 sm:%s969]
  %vm971 = vcmask 1043458
  %v972 = vsel %vm971, %v970, %v967
  %s973 = scalar_lea.vmem %s0, 387
  %s974 = smov 48
  %v975 = vld [vmem:[%s973] ss:$16 sm:%s974]
  %vm976 = vcmask 1045508
  %v977 = vsel %vm976, %v975, %v972
  %s978 = scalar_lea.vmem %s0, 387
  %s979 = smov 192
  %v980 = vld [vmem:[%s978] ss:$16 sm:%s979]
  %vm981 = vcmask 1047558
  %v982 = vsel %vm981, %v980, %v977
  %983 = vrot.lane.b32.xlu0 %v982, 48
  %v984 = vpop.permute.xlu0 %983
  %vm985 = vcmask 523648
  %s986 = scalar_lea.vmem %s1, 48
  %987 = vst.msk [vmem:[%s986] sm:$0xff] %vm985, %v984
  %s988 = scalar_lea.vmem %s0, 139
  %s989 = smov 3
  %v990 = vld [vmem:[%s988] ss:$16 sm:%s989]
  %s991 = scalar_lea.vmem %s0, 139
  %s992 = smov 12
  %v993 = vld [vmem:[%s991] ss:$16 sm:%s992]
  %vm994 = vcmask 1043458
  %v995 = vsel %vm994, %v993, %v990
  %s996 = scalar_lea.vmem %s0, 139
  %s997 = smov 48
  %v998 = vld [vmem:[%s996] ss:$16 sm:%s997]
  %vm999 = vcmask 1045508
  %v1000 = vsel %vm999, %v998, %v995
  %s1001 = scalar_lea.vmem %s0, 139
  %s1002 = smov 192
  %v1003 = vld [vmem:[%s1001] ss:$16 sm:%s1002]
  %vm1004 = vcmask 1047558
  %v1005 = vsel %vm1004, %v1003, %v1000
  %1006 = vrot.lane.b32.xlu0 %v1005, 48
  %v1007 = vpop.permute.xlu0 %1006
  %vm1008 = vcmask 523648
  %s1009 = scalar_lea.vmem %s1, 24
  %1010 = vst.msk [vmem:[%s1009] sm:$0xff] %vm1008, %v1007
  %s1011 = scalar_lea.vmem %s0, 395
  %s1012 = smov 3
  %v1013 = vld [vmem:[%s1011] ss:$16 sm:%s1012]
  %s1014 = scalar_lea.vmem %s0, 395
  %s1015 = smov 12
  %v1016 = vld [vmem:[%s1014] ss:$16 sm:%s1015]
  %vm1017 = vcmask 1043458
  %v1018 = vsel %vm1017, %v1016, %v1013
  %s1019 = scalar_lea.vmem %s0, 395
  %s1020 = smov 48
  %v1021 = vld [vmem:[%s1019] ss:$16 sm:%s1020]
  %vm1022 = vcmask 1045508
  %v1023 = vsel %vm1022, %v1021, %v1018
  %s1024 = scalar_lea.vmem %s0, 395
  %s1025 = smov 192
  %v1026 = vld [vmem:[%s1024] ss:$16 sm:%s1025]
  %vm1027 = vcmask 1047558
  %v1028 = vsel %vm1027, %v1026, %v1023
  %1029 = vrot.lane.b32.xlu0 %v1028, 48
  %v1030 = vpop.permute.xlu0 %1029
  %vm1031 = vcmask 523648
  %s1032 = scalar_lea.vmem %s1, 56
  %1033 = vst.msk [vmem:[%s1032] sm:$0xff] %vm1031, %v1030
  %s1034 = scalar_lea.vmem %s0, 2
  %s1035 = smov 3
  %v1036 = vld [vmem:[%s1034] ss:$16 sm:%s1035]
  %s1037 = scalar_lea.vmem %s0, 2
  %s1038 = smov 12
  %v1039 = vld [vmem:[%s1037] ss:$16 sm:%s1038]
  %vm1040 = vcmask 1043458
  %v1041 = vsel %vm1040, %v1039, %v1036
  %s1042 = scalar_lea.vmem %s0, 2
  %s1043 = smov 48
  %v1044 = vld [vmem:[%s1042] ss:$16 sm:%s1043]
  %vm1045 = vcmask 1045508
  %v1046 = vsel %vm1045, %v1044, %v1041
  %s1047 = scalar_lea.vmem %s0, 2
  %s1048 = smov 192
  %v1049 = vld [vmem:[%s1047] ss:$16 sm:%s1048]
  %vm1050 = vcmask 1047558
  %v1051 = vsel %vm1050, %v1049, %v1046
  %1052 = vrot.lane.b32.xlu0 %v1051, 32
  %v1053 = vpop.permute.xlu0 %1052
  %vm1054 = vcmask 392448
  %1055 = vst.msk [vmem:[%s1] sm:$0xff] %vm1054, %v1053
  %s1056 = scalar_lea.vmem %s0, 258
  %s1057 = smov 3
  %v1058 = vld [vmem:[%s1056] ss:$16 sm:%s1057]
  %s1059 = scalar_lea.vmem %s0, 258
  %s1060 = smov 12
  %v1061 = vld [vmem:[%s1059] ss:$16 sm:%s1060]
  %vm1062 = vcmask 1043458
  %v1063 = vsel %vm1062, %v1061, %v1058
  %s1064 = scalar_lea.vmem %s0, 258
  %s1065 = smov 48
  %v1066 = vld [vmem:[%s1064] ss:$16 sm:%s1065]
  %vm1067 = vcmask 1045508
  %v1068 = vsel %vm1067, %v1066, %v1063
  %s1069 = scalar_lea.vmem %s0, 258
  %s1070 = smov 192
  %v1071 = vld [vmem:[%s1069] ss:$16 sm:%s1070]
  %vm1072 = vcmask 1047558
  %v1073 = vsel %vm1072, %v1071, %v1068
  %1074 = vrot.lane.b32.xlu0 %v1073, 32
  %v1075 = vpop.permute.xlu0 %1074
  %vm1076 = vcmask 392448
  %s1077 = scalar_lea.vmem %s1, 32
  %1078 = vst.msk [vmem:[%s1077] sm:$0xff] %vm1076, %v1075
  %s1079 = scalar_lea.vmem %s0, 10
  %s1080 = smov 3
  %v1081 = vld [vmem:[%s1079] ss:$16 sm:%s1080]
  %s1082 = scalar_lea.vmem %s0, 10
  %s1083 = smov 12
  %v1084 = vld [vmem:[%s1082] ss:$16 sm:%s1083]
  %vm1085 = vcmask 1043458
  %v1086 = vsel %vm1085, %v1084, %v1081
  %s1087 = scalar_lea.vmem %s0, 10
  %s1088 = smov 48
  %v1089 = vld [vmem:[%s1087] ss:$16 sm:%s1088]
  %vm1090 = vcmask 1045508
  %v1091 = vsel %vm1090, %v1089, %v1086
  %s1092 = scalar_lea.vmem %s0, 10
  %s1093 = smov 192
  %v1094 = vld [vmem:[%s1092] ss:$16 sm:%s1093]
  %vm1095 = vcmask 1047558
  %v1096 = vsel %vm1095, %v1094, %v1091
  %1097 = vrot.lane.b32.xlu0 %v1096, 32
  %v1098 = vpop.permute.xlu0 %1097
  %vm1099 = vcmask 392448
  %s1100 = scalar_lea.vmem %s1, 8
  %1101 = vst.msk [vmem:[%s1100] sm:$0xff] %vm1099, %v1098
  %s1102 = scalar_lea.vmem %s0, 266
  %s1103 = smov 3
  %v1104 = vld [vmem:[%s1102] ss:$16 sm:%s1103]
  %s1105 = scalar_lea.vmem %s0, 266
  %s1106 = smov 12
  %v1107 = vld [vmem:[%s1105] ss:$16 sm:%s1106]
  %vm1108 = vcmask 1043458
  %v1109 = vsel %vm1108, %v1107, %v1104
  %s1110 = scalar_lea.vmem %s0, 266
  %s1111 = smov 48
  %v1112 = vld [vmem:[%s1110] ss:$16 sm:%s1111]
  %vm1113 = vcmask 1045508
  %v1114 = vsel %vm1113, %v1112, %v1109
  %s1115 = scalar_lea.vmem %s0, 266
  %s1116 = smov 192
  %v1117 = vld [vmem:[%s1115] ss:$16 sm:%s1116]
  %vm1118 = vcmask 1047558
  %v1119 = vsel %vm1118, %v1117, %v1114
  %1120 = vrot.lane.b32.xlu0 %v1119, 32
  %v1121 = vpop.permute.xlu0 %1120
  %vm1122 = vcmask 392448
  %s1123 = scalar_lea.vmem %s1, 40
  %1124 = vst.msk [vmem:[%s1123] sm:$0xff] %vm1122, %v1121
  %s1125 = scalar_lea.vmem %s0, 130
  %s1126 = smov 3
  %v1127 = vld [vmem:[%s1125] ss:$16 sm:%s1126]
  %s1128 = scalar_lea.vmem %s0, 130
  %s1129 = smov 12
  %v1130 = vld [vmem:[%s1128] ss:$16 sm:%s1129]
  %vm1131 = vcmask 1043458
  %v1132 = vsel %vm1131, %v1130, %v1127
  %s1133 = scalar_lea.vmem %s0, 130
  %s1134 = smov 48
  %v1135 = vld [vmem:[%s1133] ss:$16 sm:%s1134]
  %vm1136 = vcmask 1045508
  %v1137 = vsel %vm1136, %v1135, %v1132
  %s1138 = scalar_lea.vmem %s0, 130
  %s1139 = smov 192
  %v1140 = vld [vmem:[%s1138] ss:$16 sm:%s1139]
  %vm1141 = vcmask 1047558
  %v1142 = vsel %vm1141, %v1140, %v1137
  %1143 = vrot.lane.b32.xlu0 %v1142, 32
  %v1144 = vpop.permute.xlu0 %1143
  %vm1145 = vcmask 392448
  %s1146 = scalar_lea.vmem %s1, 16
  %1147 = vst.msk [vmem:[%s1146] sm:$0xff] %vm1145, %v1144
  %s1148 = scalar_lea.vmem %s0, 386
  %s1149 = smov 3
  %v1150 = vld [vmem:[%s1148] ss:$16 sm:%s1149]
  %s1151 = scalar_lea.vmem %s0, 386
  %s1152 = smov 12
  %v1153 = vld [vmem:[%s1151] ss:$16 sm:%s1152]
  %vm1154 = vcmask 1043458
  %v1155 = vsel %vm1154, %v1153, %v1150
  %s1156 = scalar_lea.vmem %s0, 386
  %s1157 = smov 48
  %v1158 = vld [vmem:[%s1156] ss:$16 sm:%s1157]
  %vm1159 = vcmask 1045508
  %v1160 = vsel %vm1159, %v1158, %v1155
  %s1161 = scalar_lea.vmem %s0, 386
  %s1162 = smov 192
  %v1163 = vld [vmem:[%s1161] ss:$16 sm:%s1162]
  %vm1164 = vcmask 1047558
  %v1165 = vsel %vm1164, %v1163, %v1160
  %1166 = vrot.lane.b32.xlu0 %v1165, 32
  %v1167 = vpop.permute.xlu0 %1166
  %vm1168 = vcmask 392448
  %s1169 = scalar_lea.vmem %s1, 48
  %1170 = vst.msk [vmem:[%s1169] sm:$0xff] %vm1168, %v1167
  %s1171 = scalar_lea.vmem %s0, 138
  %s1172 = smov 3
  %v1173 = vld [vmem:[%s1171] ss:$16 sm:%s1172]
  %s1174 = scalar_lea.vmem %s0, 138
  %s1175 = smov 12
  %v1176 = vld [vmem:[%s1174] ss:$16 sm:%s1175]
  %vm1177 = vcmask 1043458
  %v1178 = vsel %vm1177, %v1176, %v1173
  %s1179 = scalar_lea.vmem %s0, 138
  %s1180 = smov 48
  %v1181 = vld [vmem:[%s1179] ss:$16 sm:%s1180]
  %vm1182 = vcmask 1045508
  %v1183 = vsel %vm1182, %v1181, %v1178
  %s1184 = scalar_lea.vmem %s0, 138
  %s1185 = smov 192
  %v1186 = vld [vmem:[%s1184] ss:$16 sm:%s1185]
  %vm1187 = vcmask 1047558
  %v1188 = vsel %vm1187, %v1186, %v1183
  %1189 = vrot.lane.b32.xlu0 %v1188, 32
  %v1190 = vpop.permute.xlu0 %1189
  %vm1191 = vcmask 392448
  %s1192 = scalar_lea.vmem %s1, 24
  %1193 = vst.msk [vmem:[%s1192] sm:$0xff] %vm1191, %v1190
  %s1194 = scalar_lea.vmem %s0, 394
  %s1195 = smov 3
  %v1196 = vld [vmem:[%s1194] ss:$16 sm:%s1195]
  %s1197 = scalar_lea.vmem %s0, 394
  %s1198 = smov 12
  %v1199 = vld [vmem:[%s1197] ss:$16 sm:%s1198]
  %vm1200 = vcmask 1043458
  %v1201 = vsel %vm1200, %v1199, %v1196
  %s1202 = scalar_lea.vmem %s0, 394
  %s1203 = smov 48
  %v1204 = vld [vmem:[%s1202] ss:$16 sm:%s1203]
  %vm1205 = vcmask 1045508
  %v1206 = vsel %vm1205, %v1204, %v1201
  %s1207 = scalar_lea.vmem %s0, 394
  %s1208 = smov 192
  %v1209 = vld [vmem:[%s1207] ss:$16 sm:%s1208]
  %vm1210 = vcmask 1047558
  %v1211 = vsel %vm1210, %v1209, %v1206
  %1212 = vrot.lane.b32.xlu0 %v1211, 32
  %v1213 = vpop.permute.xlu0 %1212
  %vm1214 = vcmask 392448
  %s1215 = scalar_lea.vmem %s1, 56
  %1216 = vst.msk [vmem:[%s1215] sm:$0xff] %vm1214, %v1213
  %s1217 = scalar_lea.vmem %s0, 1
  %s1218 = smov 3
  %v1219 = vld [vmem:[%s1217] ss:$16 sm:%s1218]
  %s1220 = scalar_lea.vmem %s0, 1
  %s1221 = smov 12
  %v1222 = vld [vmem:[%s1220] ss:$16 sm:%s1221]
  %vm1223 = vcmask 1043458
  %v1224 = vsel %vm1223, %v1222, %v1219
  %s1225 = scalar_lea.vmem %s0, 1
  %s1226 = smov 48
  %v1227 = vld [vmem:[%s1225] ss:$16 sm:%s1226]
  %vm1228 = vcmask 1045508
  %v1229 = vsel %vm1228, %v1227, %v1224
  %s1230 = scalar_lea.vmem %s0, 1
  %s1231 = smov 192
  %v1232 = vld [vmem:[%s1230] ss:$16 sm:%s1231]
  %vm1233 = vcmask 1047558
  %v1234 = vsel %vm1233, %v1232, %v1229
  %1235 = vrot.lane.b32.xlu0 %v1234, 16
  %v1236 = vpop.permute.xlu0 %1235
  %vm1237 = vcmask 261248
  %1238 = vst.msk [vmem:[%s1] sm:$0xff] %vm1237, %v1236
  %s1239 = scalar_lea.vmem %s0, 257
  %s1240 = smov 3
  %v1241 = vld [vmem:[%s1239] ss:$16 sm:%s1240]
  %s1242 = scalar_lea.vmem %s0, 257
  %s1243 = smov 12
  %v1244 = vld [vmem:[%s1242] ss:$16 sm:%s1243]
  %vm1245 = vcmask 1043458
  %v1246 = vsel %vm1245, %v1244, %v1241
  %s1247 = scalar_lea.vmem %s0, 257
  %s1248 = smov 48
  %v1249 = vld [vmem:[%s1247] ss:$16 sm:%s1248]
  %vm1250 = vcmask 1045508
  %v1251 = vsel %vm1250, %v1249, %v1246
  %s1252 = scalar_lea.vmem %s0, 257
  %s1253 = smov 192
  %v1254 = vld [vmem:[%s1252] ss:$16 sm:%s1253]
  %vm1255 = vcmask 1047558
  %v1256 = vsel %vm1255, %v1254, %v1251
  %1257 = vrot.lane.b32.xlu0 %v1256, 16
  %v1258 = vpop.permute.xlu0 %1257
  %vm1259 = vcmask 261248
  %s1260 = scalar_lea.vmem %s1, 32
  %1261 = vst.msk [vmem:[%s1260] sm:$0xff] %vm1259, %v1258
  %s1262 = scalar_lea.vmem %s0, 9
  %s1263 = smov 3
  %v1264 = vld [vmem:[%s1262] ss:$16 sm:%s1263]
  %s1265 = scalar_lea.vmem %s0, 9
  %s1266 = smov 12
  %v1267 = vld [vmem:[%s1265] ss:$16 sm:%s1266]
  %vm1268 = vcmask 1043458
  %v1269 = vsel %vm1268, %v1267, %v1264
  %s1270 = scalar_lea.vmem %s0, 9
  %s1271 = smov 48
  %v1272 = vld [vmem:[%s1270] ss:$16 sm:%s1271]
  %vm1273 = vcmask 1045508
  %v1274 = vsel %vm1273, %v1272, %v1269
  %s1275 = scalar_lea.vmem %s0, 9
  %s1276 = smov 192
  %v1277 = vld [vmem:[%s1275] ss:$16 sm:%s1276]
  %vm1278 = vcmask 1047558
  %v1279 = vsel %vm1278, %v1277, %v1274
  %1280 = vrot.lane.b32.xlu0 %v1279, 16
  %v1281 = vpop.permute.xlu0 %1280
  %vm1282 = vcmask 261248
  %s1283 = scalar_lea.vmem %s1, 8
  %1284 = vst.msk [vmem:[%s1283] sm:$0xff] %vm1282, %v1281
  %s1285 = scalar_lea.vmem %s0, 265
  %s1286 = smov 3
  %v1287 = vld [vmem:[%s1285] ss:$16 sm:%s1286]
  %s1288 = scalar_lea.vmem %s0, 265
  %s1289 = smov 12
  %v1290 = vld [vmem:[%s1288] ss:$16 sm:%s1289]
  %vm1291 = vcmask 1043458
  %v1292 = vsel %vm1291, %v1290, %v1287
  %s1293 = scalar_lea.vmem %s0, 265
  %s1294 = smov 48
  %v1295 = vld [vmem:[%s1293] ss:$16 sm:%s1294]
  %vm1296 = vcmask 1045508
  %v1297 = vsel %vm1296, %v1295, %v1292
  %s1298 = scalar_lea.vmem %s0, 265
  %s1299 = smov 192
  %v1300 = vld [vmem:[%s1298] ss:$16 sm:%s1299]
  %vm1301 = vcmask 1047558
  %v1302 = vsel %vm1301, %v1300, %v1297
  %1303 = vrot.lane.b32.xlu0 %v1302, 16
  %v1304 = vpop.permute.xlu0 %1303
  %vm1305 = vcmask 261248
  %s1306 = scalar_lea.vmem %s1, 40
  %1307 = vst.msk [vmem:[%s1306] sm:$0xff] %vm1305, %v1304
  %s1308 = scalar_lea.vmem %s0, 129
  %s1309 = smov 3
  %v1310 = vld [vmem:[%s1308] ss:$16 sm:%s1309]
  %s1311 = scalar_lea.vmem %s0, 129
  %s1312 = smov 12
  %v1313 = vld [vmem:[%s1311] ss:$16 sm:%s1312]
  %vm1314 = vcmask 1043458
  %v1315 = vsel %vm1314, %v1313, %v1310
  %s1316 = scalar_lea.vmem %s0, 129
  %s1317 = smov 48
  %v1318 = vld [vmem:[%s1316] ss:$16 sm:%s1317]
  %vm1319 = vcmask 1045508
  %v1320 = vsel %vm1319, %v1318, %v1315
  %s1321 = scalar_lea.vmem %s0, 129
  %s1322 = smov 192
  %v1323 = vld [vmem:[%s1321] ss:$16 sm:%s1322]
  %vm1324 = vcmask 1047558
  %v1325 = vsel %vm1324, %v1323, %v1320
  %1326 = vrot.lane.b32.xlu0 %v1325, 16
  %v1327 = vpop.permute.xlu0 %1326
  %vm1328 = vcmask 261248
  %s1329 = scalar_lea.vmem %s1, 16
  %1330 = vst.msk [vmem:[%s1329] sm:$0xff] %vm1328, %v1327
  %s1331 = scalar_lea.vmem %s0, 385
  %s1332 = smov 3
  %v1333 = vld [vmem:[%s1331] ss:$16 sm:%s1332]
  %s1334 = scalar_lea.vmem %s0, 385
  %s1335 = smov 12
  %v1336 = vld [vmem:[%s1334] ss:$16 sm:%s1335]
  %vm1337 = vcmask 1043458
  %v1338 = vsel %vm1337, %v1336, %v1333
  %s1339 = scalar_lea.vmem %s0, 385
  %s1340 = smov 48
  %v1341 = vld [vmem:[%s1339] ss:$16 sm:%s1340]
  %vm1342 = vcmask 1045508
  %v1343 = vsel %vm1342, %v1341, %v1338
  %s1344 = scalar_lea.vmem %s0, 385
  %s1345 = smov 192
  %v1346 = vld [vmem:[%s1344] ss:$16 sm:%s1345]
  %vm1347 = vcmask 1047558
  %v1348 = vsel %vm1347, %v1346, %v1343
  %1349 = vrot.lane.b32.xlu0 %v1348, 16
  %v1350 = vpop.permute.xlu0 %1349
  %vm1351 = vcmask 261248
  %s1352 = scalar_lea.vmem %s1, 48
  %1353 = vst.msk [vmem:[%s1352] sm:$0xff] %vm1351, %v1350
  %s1354 = scalar_lea.vmem %s0, 137
  %s1355 = smov 3
  %v1356 = vld [vmem:[%s1354] ss:$16 sm:%s1355]
  %s1357 = scalar_lea.vmem %s0, 137
  %s1358 = smov 12
  %v1359 = vld [vmem:[%s1357] ss:$16 sm:%s1358]
  %vm1360 = vcmask 1043458
  %v1361 = vsel %vm1360, %v1359, %v1356
  %s1362 = scalar_lea.vmem %s0, 137
  %s1363 = smov 48
  %v1364 = vld [vmem:[%s1362] ss:$16 sm:%s1363]
  %vm1365 = vcmask 1045508
  %v1366 = vsel %vm1365, %v1364, %v1361
  %s1367 = scalar_lea.vmem %s0, 137
  %s1368 = smov 192
  %v1369 = vld [vmem:[%s1367] ss:$16 sm:%s1368]
  %vm1370 = vcmask 1047558
  %v1371 = vsel %vm1370, %v1369, %v1366
  %1372 = vrot.lane.b32.xlu0 %v1371, 16
  %v1373 = vpop.permute.xlu0 %1372
  %vm1374 = vcmask 261248
  %s1375 = scalar_lea.vmem %s1, 24
  %1376 = vst.msk [vmem:[%s1375] sm:$0xff] %vm1374, %v1373
  %s1377 = scalar_lea.vmem %s0, 393
  %s1378 = smov 3
  %v1379 = vld [vmem:[%s1377] ss:$16 sm:%s1378]
  %s1380 = scalar_lea.vmem %s0, 393
  %s1381 = smov 12
  %v1382 = vld [vmem:[%s1380] ss:$16 sm:%s1381]
  %vm1383 = vcmask 1043458
  %v1384 = vsel %vm1383, %v1382, %v1379
  %s1385 = scalar_lea.vmem %s0, 393
  %s1386 = smov 48
  %v1387 = vld [vmem:[%s1385] ss:$16 sm:%s1386]
  %vm1388 = vcmask 1045508
  %v1389 = vsel %vm1388, %v1387, %v1384
  %s1390 = scalar_lea.vmem %s0, 393
  %s1391 = smov 192
  %v1392 = vld [vmem:[%s1390] ss:$16 sm:%s1391]
  %vm1393 = vcmask 1047558
  %v1394 = vsel %vm1393, %v1392, %v1389
  %1395 = vrot.lane.b32.xlu0 %v1394, 16
  %v1396 = vpop.permute.xlu0 %1395
  %vm1397 = vcmask 261248
  %s1398 = scalar_lea.vmem %s1, 56
  %1399 = vst.msk [vmem:[%s1398] sm:$0xff] %vm1397, %v1396

// kernel: cc_loss_pallas.1
$region0: #{cc_loss_pallas.1}
  #allocation0 [shape = 'u32[]', space=smem, size = 0x4, offset = 0x4, fixed_abs, tag = 'smem constant byte address 0x4 - core index']
  #allocation1 [shape = 'u32[144,128]{1,0:T(1,128)}', space=vmem, size = 0x12000, scoped, tag = 'internal scratch']
  %s0 = inlined_call_operand.vmem [shape: f32[32,256], index: 0, kind: input, shape index: {}]
  %s1 = inlined_call_operand.vmem [shape: f32[32,256], index: 1, kind: input, shape index: {}]
  %s2 = inlined_call_operand.vmem [shape: s8[256,256], index: 2, kind: input, shape index: {}]
  %s3 = inlined_call_operand.vmem [shape: s8[160,160], index: 3, kind: input, shape index: {}]
  %s4 = inlined_call_operand.hbm [shape: f32[1,1], index: 4, kind: output, shape index: {}]
  %s5 = sld [smem:[#allocation0]]
  $region26: #{cc_loss_pallas.1} parent=0
    _
  %s7 = ssub.s32 1, %s5
  %s8 = scalar_select 0, %s7, %s5
  $region1: #{cc_loss_pallas.1} parent=0
    #allocation2 [shape = 'u8[512]{0}', space=smem, size = 0x200, scoped, tag = 'output window, operand 0, single buffered']
    #allocation3 [shape = 's32[1]{0}', space=sflag, size = 0x4, scoped, tag = 'scoped memory for cc_loss_pallas.1']
    %9 = vsyncpa [#allocation3], 0
    // Predicated region
    $region2: #{cc_loss_pallas.1} parent=1 // pred_check
      _
    $region3: #{cc_loss_pallas.1} parent=1 // pred_check_branch
      %11 = sbr.rel (0) target = $region5
    $region4: #{cc_loss_pallas.1} parent=1 // pred_region
      _
    $region5: #{cc_loss_pallas.1} parent=1 // pred_fallthru
      _
    // Predicated region
    $region6: #{cc_loss_pallas.1} parent=1 // pred_check
      _
    $region7: #{cc_loss_pallas.1} parent=1 // pred_check_branch
      %13 = sbr.rel (0) target = $region9
    $region8: #{cc_loss_pallas.1} parent=1 // pred_region
      _
    $region9: #{cc_loss_pallas.1} parent=1 // pred_fallthru
      _
    // Predicated region
    $region10: #{cc_loss_pallas.1} parent=1 // pred_check
      _
    $region11: #{cc_loss_pallas.1} parent=1 // pred_check_branch
      %15 = sbr.rel (0) target = $region13
    $region12: #{cc_loss_pallas.1} parent=1 // pred_region
      _
    $region13: #{cc_loss_pallas.1} parent=1 // pred_fallthru
      _
    // Predicated region
    $region14: #{cc_loss_pallas.1} parent=1 // pred_check
      _
    $region15: #{cc_loss_pallas.1} parent=1 // pred_check_branch
      %17 = sbr.rel (0) target = $region17
    $region16: #{cc_loss_pallas.1} parent=1 // pred_region
      _
    $region17: #{cc_loss_pallas.1} parent=1 // pred_fallthru
      _
    %v18 = vld [vmem:[%s0] sm:$0xff]
    %v19 = vld [vmem:[%s0 + $0x8] sm:$0xff]
    %v20 = vld [vmem:[%s0 + $0x10] sm:$0xff]
    %v21 = vld [vmem:[%s0 + $0x18] sm:$0xff]
    %v22 = vld [vmem:[%s0 + $0x20] sm:$0xff]
    %v23 = vld [vmem:[%s0 + $0x28] sm:$0xff]
    %v24 = vld [vmem:[%s0 + $0x30] sm:$0xff]
    %v25 = vld [vmem:[%s0 + $0x38] sm:$0xff]
    %v26 = vld [vmem:[%s1] sm:$0xff]
    %v27 = vld [vmem:[%s1 + $0x8] sm:$0xff]
    %v28 = vld [vmem:[%s1 + $0x10] sm:$0xff]
    %v29 = vld [vmem:[%s1 + $0x18] sm:$0xff]
    %v30 = vld [vmem:[%s1 + $0x20] sm:$0xff]
    %v31 = vld [vmem:[%s1 + $0x28] sm:$0xff]
    %v32 = vld [vmem:[%s1 + $0x30] sm:$0xff]
    %v33 = vld [vmem:[%s1 + $0x38] sm:$0xff]
    %v34 = vld [vmem:[%s2] sm:$0xff]
    %v35 = vld [vmem:[%s2 + $0x8] sm:$0xff]
    %v36 = vld [vmem:[%s2 + $0x10] sm:$0xff]
    %v37 = vld [vmem:[%s2 + $0x18] sm:$0xff]
    %v38 = vld [vmem:[%s2 + $0x20] sm:$0xff]
    %v39 = vld [vmem:[%s2 + $0x28] sm:$0xff]
    %v40 = vld [vmem:[%s2 + $0x30] sm:$0xff]
    %v41 = vld [vmem:[%s2 + $0x38] sm:$0xff]
    %v42 = vld [vmem:[%s2 + $0x40] sm:$0xff]
    %v43 = vld [vmem:[%s2 + $0x48] sm:$0xff]
    %v44 = vld [vmem:[%s2 + $0x50] sm:$0xff]
    %v45 = vld [vmem:[%s2 + $0x58] sm:$0xff]
    %v46 = vld [vmem:[%s2 + $0x60] sm:$0xff]
    %v47 = vld [vmem:[%s2 + $0x68] sm:$0xff]
    %v48 = vld [vmem:[%s2 + $0x70] sm:$0xff]
    %v49 = vld [vmem:[%s2 + $0x78] sm:$0xff]
    %v50 = vunpack.c.0.s8 %v34
    %v51 = vunpack.c.0.s8 %v35
    %v52 = vunpack.c.1.s8 %v34
    %v53 = vunpack.c.1.s8 %v35
    %v54 = vunpack.c.2.s8 %v34
    %v55 = vunpack.c.2.s8 %v35
    %v56 = vunpack.c.3.s8 %v34
    %v57 = vunpack.c.3.s8 %v35
    %v58 = vunpack.c.0.s8 %v36
    %v59 = vunpack.c.0.s8 %v37
    %v60 = vunpack.c.1.s8 %v36
    %v61 = vunpack.c.1.s8 %v37
    %v62 = vunpack.c.2.s8 %v36
    %v63 = vunpack.c.2.s8 %v37
    %v64 = vunpack.c.3.s8 %v36
    %v65 = vunpack.c.3.s8 %v37
    %v66 = vunpack.c.0.s8 %v38
    %v67 = vunpack.c.0.s8 %v39
    %v68 = vunpack.c.1.s8 %v38
    %v69 = vunpack.c.1.s8 %v39
    %v70 = vunpack.c.2.s8 %v38
    %v71 = vunpack.c.2.s8 %v39
    %v72 = vunpack.c.3.s8 %v38
    %v73 = vunpack.c.3.s8 %v39
    %v74 = vunpack.c.0.s8 %v40
    %v75 = vunpack.c.0.s8 %v41
    %v76 = vunpack.c.1.s8 %v40
    %v77 = vunpack.c.1.s8 %v41
    %v78 = vunpack.c.2.s8 %v40
    %v79 = vunpack.c.2.s8 %v41
    %v80 = vunpack.c.3.s8 %v40
    %v81 = vunpack.c.3.s8 %v41
    %v82 = vunpack.c.0.s8 %v42
    %v83 = vunpack.c.0.s8 %v43
    %v84 = vunpack.c.1.s8 %v42
    %v85 = vunpack.c.1.s8 %v43
    %v86 = vunpack.c.2.s8 %v42
    %v87 = vunpack.c.2.s8 %v43
    %v88 = vunpack.c.3.s8 %v42
    %v89 = vunpack.c.3.s8 %v43
    %v90 = vunpack.c.0.s8 %v44
    %v91 = vunpack.c.0.s8 %v45
    %v92 = vunpack.c.1.s8 %v44
    %v93 = vunpack.c.1.s8 %v45
    %v94 = vunpack.c.2.s8 %v44
    %v95 = vunpack.c.2.s8 %v45
    %v96 = vunpack.c.3.s8 %v44
    %v97 = vunpack.c.3.s8 %v45
    %v98 = vunpack.c.0.s8 %v46
    %v99 = vunpack.c.0.s8 %v47
    %v100 = vunpack.c.1.s8 %v46
    %v101 = vunpack.c.1.s8 %v47
    %v102 = vunpack.c.2.s8 %v46
    %v103 = vunpack.c.2.s8 %v47
    %v104 = vunpack.c.3.s8 %v46
    %v105 = vunpack.c.3.s8 %v47
    %v106 = vunpack.c.0.s8 %v48
    %v107 = vunpack.c.0.s8 %v49
    %v108 = vunpack.c.1.s8 %v48
    %v109 = vunpack.c.1.s8 %v49
    %v110 = vunpack.c.2.s8 %v48
    %v111 = vunpack.c.2.s8 %v49
    %v112 = vunpack.c.3.s8 %v48
    %v113 = vunpack.c.3.s8 %v49
    %v114 = vcvt.s32.f32 %v50
    %v115 = vcvt.s32.f32 %v51
    %v116 = vcvt.s32.f32 %v52
    %v117 = vcvt.s32.f32 %v53
    %v118 = vcvt.s32.f32 %v54
    %v119 = vcvt.s32.f32 %v55
    %v120 = vcvt.s32.f32 %v56
    %v121 = vcvt.s32.f32 %v57
    %v122 = vcvt.s32.f32 %v58
    %v123 = vcvt.s32.f32 %v59
    %v124 = vcvt.s32.f32 %v60
    %v125 = vcvt.s32.f32 %v61
    %v126 = vcvt.s32.f32 %v62
    %v127 = vcvt.s32.f32 %v63
    %v128 = vcvt.s32.f32 %v64
    %v129 = vcvt.s32.f32 %v65
    %v130 = vcvt.s32.f32 %v66
    %v131 = vcvt.s32.f32 %v67
    %v132 = vcvt.s32.f32 %v68
    %v133 = vcvt.s32.f32 %v69
    %v134 = vcvt.s32.f32 %v70
    %v135 = vcvt.s32.f32 %v71
    %v136 = vcvt.s32.f32 %v72
    %v137 = vcvt.s32.f32 %v73
    %v138 = vcvt.s32.f32 %v74
    %v139 = vcvt.s32.f32 %v75
    %v140 = vcvt.s32.f32 %v76
    %v141 = vcvt.s32.f32 %v77
    %v142 = vcvt.s32.f32 %v78
    %v143 = vcvt.s32.f32 %v79
    %v144 = vcvt.s32.f32 %v80
    %v145 = vcvt.s32.f32 %v81
    %v146 = vcvt.s32.f32 %v82
    %v147 = vcvt.s32.f32 %v83
    %v148 = vcvt.s32.f32 %v84
    %v149 = vcvt.s32.f32 %v85
    %v150 = vcvt.s32.f32 %v86
    %v151 = vcvt.s32.f32 %v87
    %v152 = vcvt.s32.f32 %v88
    %v153 = vcvt.s32.f32 %v89
    %v154 = vcvt.s32.f32 %v90
    %v155 = vcvt.s32.f32 %v91
    %v156 = vcvt.s32.f32 %v92
    %v157 = vcvt.s32.f32 %v93
    %v158 = vcvt.s32.f32 %v94
    %v159 = vcvt.s32.f32 %v95
    %v160 = vcvt.s32.f32 %v96
    %v161 = vcvt.s32.f32 %v97
    %v162 = vcvt.s32.f32 %v98
    %v163 = vcvt.s32.f32 %v99
    %v164 = vcvt.s32.f32 %v100
    %v165 = vcvt.s32.f32 %v101
    %v166 = vcvt.s32.f32 %v102
    %v167 = vcvt.s32.f32 %v103
    %v168 = vcvt.s32.f32 %v104
    %v169 = vcvt.s32.f32 %v105
    %v170 = vcvt.s32.f32 %v106
    %v171 = vcvt.s32.f32 %v107
    %v172 = vcvt.s32.f32 %v108
    %v173 = vcvt.s32.f32 %v109
    %v174 = vcvt.s32.f32 %v110
    %v175 = vcvt.s32.f32 %v111
    %v176 = vcvt.s32.f32 %v112
    %v177 = vcvt.s32.f32 %v113
    %v178 = vld [vmem:[%s3] sm:$0xff]
    %v179 = vld [vmem:[%s3 + $0x8] sm:$0xff]
    %v180 = vld [vmem:[%s3 + $0x10] sm:$0xff]
    %v181 = vld [vmem:[%s3 + $0x18] sm:$0xff]
    %v182 = vld [vmem:[%s3 + $0x20] sm:$0xff]
    %v183 = vld [vmem:[%s3 + $0x28] sm:$0xff]
    %v184 = vld [vmem:[%s3 + $0x30] sm:$0xff]
    %v185 = vld [vmem:[%s3 + $0x38] sm:$0xff]
    %v186 = vld [vmem:[%s3 + $0x40] sm:$0xff]
    %v187 = vld [vmem:[%s3 + $0x48] sm:$0xff]
    %v188 = vunpack.c.0.s8 %v178
    %v189 = vunpack.c.0.s8 %v179
    %v190 = vunpack.c.1.s8 %v178
    %v191 = vunpack.c.1.s8 %v179
    %v192 = vunpack.c.2.s8 %v178
    %v193 = vunpack.c.2.s8 %v179
    %v194 = vunpack.c.3.s8 %v178
    %v195 = vunpack.c.3.s8 %v179
    %v196 = vunpack.c.0.s8 %v180
    %v197 = vunpack.c.0.s8 %v181
    %v198 = vunpack.c.1.s8 %v180
    %v199 = vunpack.c.1.s8 %v181
    %v200 = vunpack.c.2.s8 %v180
    %v201 = vunpack.c.2.s8 %v181
    %v202 = vunpack.c.3.s8 %v180
    %v203 = vunpack.c.3.s8 %v181
    %v204 = vunpack.c.0.s8 %v182
    %v205 = vunpack.c.0.s8 %v183
    %v206 = vunpack.c.1.s8 %v182
    %v207 = vunpack.c.1.s8 %v183
    %v208 = vunpack.c.2.s8 %v182
    %v209 = vunpack.c.2.s8 %v183
    %v210 = vunpack.c.3.s8 %v182
    %v211 = vunpack.c.3.s8 %v183
    %v212 = vunpack.c.0.s8 %v184
    %v213 = vunpack.c.0.s8 %v185
    %v214 = vunpack.c.1.s8 %v184
    %v215 = vunpack.c.1.s8 %v185
    %v216 = vunpack.c.2.s8 %v184
    %v217 = vunpack.c.2.s8 %v185
    %v218 = vunpack.c.3.s8 %v184
    %v219 = vunpack.c.3.s8 %v185
    %v220 = vunpack.c.0.s8 %v186
    %v221 = vunpack.c.0.s8 %v187
    %v222 = vunpack.c.1.s8 %v186
    %v223 = vunpack.c.1.s8 %v187
    %v224 = vunpack.c.2.s8 %v186
    %v225 = vunpack.c.2.s8 %v187
    %v226 = vunpack.c.3.s8 %v186
    %v227 = vunpack.c.3.s8 %v187
    %v228 = vcvt.s32.f32 %v188
    %v229 = vcvt.s32.f32 %v189
    %v230 = vcvt.s32.f32 %v190
    %v231 = vcvt.s32.f32 %v191
    %v232 = vcvt.s32.f32 %v192
    %v233 = vcvt.s32.f32 %v193
    %v234 = vcvt.s32.f32 %v194
    %v235 = vcvt.s32.f32 %v195
    %v236 = vcvt.s32.f32 %v196
    %v237 = vcvt.s32.f32 %v197
    %v238 = vcvt.s32.f32 %v198
    %v239 = vcvt.s32.f32 %v199
    %v240 = vcvt.s32.f32 %v200
    %v241 = vcvt.s32.f32 %v201
    %v242 = vcvt.s32.f32 %v202
    %v243 = vcvt.s32.f32 %v203
    %v244 = vcvt.s32.f32 %v204
    %v245 = vcvt.s32.f32 %v205
    %v246 = vcvt.s32.f32 %v206
    %v247 = vcvt.s32.f32 %v207
    %v248 = vcvt.s32.f32 %v208
    %v249 = vcvt.s32.f32 %v209
    %v250 = vcvt.s32.f32 %v210
    %v251 = vcvt.s32.f32 %v211
    %v252 = vcvt.s32.f32 %v212
    %v253 = vcvt.s32.f32 %v213
    %v254 = vcvt.s32.f32 %v214
    %v255 = vcvt.s32.f32 %v215
    %v256 = vcvt.s32.f32 %v216
    %v257 = vcvt.s32.f32 %v217
    %v258 = vcvt.s32.f32 %v218
    %v259 = vcvt.s32.f32 %v219
    %v260 = vcvt.s32.f32 %v220
    %v261 = vcvt.s32.f32 %v221
    %v262 = vcvt.s32.f32 %v222
    %v263 = vcvt.s32.f32 %v223
    %v264 = vcvt.s32.f32 %v224
    %v265 = vcvt.s32.f32 %v225
    %v266 = vcvt.s32.f32 %v226
    %v267 = vcvt.s32.f32 %v227
    %v268 = vmul.f32 %v18, %v18
    %v269 = vmul.f32 %v19, %v19
    %v270 = vmul.f32 %v20, %v20
    %v271 = vmul.f32 %v21, %v21
    %v272 = vmul.f32 %v22, %v22
    %v273 = vmul.f32 %v23, %v23
    %v274 = vmul.f32 %v24, %v24
    %v275 = vmul.f32 %v25, %v25
    %v276 = vmul.f32 %v26, %v26
    %v277 = vmul.f32 %v27, %v27
    %v278 = vmul.f32 %v28, %v28
    %v279 = vmul.f32 %v29, %v29
    %v280 = vmul.f32 %v30, %v30
    %v281 = vmul.f32 %v31, %v31
    %v282 = vmul.f32 %v32, %v32
    %v283 = vmul.f32 %v33, %v33
    %v284 = vmul.f32 %v18, %v26
    %v285 = vmul.f32 %v19, %v27
    %v286 = vmul.f32 %v20, %v28
    %v287 = vmul.f32 %v21, %v29
    %v288 = vmul.f32 %v22, %v30
    %v289 = vmul.f32 %v23, %v31
    %v290 = vmul.f32 %v24, %v32
    %v291 = vmul.f32 %v25, %v33
    %292 = vmatprep.subr.mxu0 %v145
    %293 = vmatpush1.msra.mxu0 %v144
    %294 = vmatprep.subr.mxu0 %v143
    %295 = vmatpush1.msra.mxu0 %v142
    %296 = vmatprep.subr.mxu0 %v141
    %297 = vmatpush1.msra.mxu0 %v140
    %298 = vmatprep.subr.mxu0 %v139
    %299 = vmatpush1.msra.mxu0 %v138
    %300 = vmatprep.subr.mxu0 %v137
    %301 = vmatpush1.msra.mxu0 %v136
    %302 = vmatprep.subr.mxu0 %v135
    %303 = vmatpush1.msra.mxu0 %v134
    %304 = vmatprep.subr.mxu0 %v133
    %305 = vmatpush1.msra.mxu0 %v132
    %306 = vmatprep.subr.mxu0 %v131
    %307 = vmatpush1.msra.mxu0 %v130
    %308 = vmatprep.subr.mxu0 %v129
    %309 = vmatpush1.msra.mxu0 %v128
    %310 = vmatprep.subr.mxu0 %v127
    %311 = vmatpush1.msra.mxu0 %v126
    %312 = vmatprep.subr.mxu0 %v125
    %313 = vmatpush1.msra.mxu0 %v124
    %314 = vmatprep.subr.mxu0 %v123
    %315 = vmatpush1.msra.mxu0 %v122
    %316 = vmatprep.subr.mxu0 %v121
    %317 = vmatpush1.msra.mxu0 %v120
    %318 = vmatprep.subr.mxu0 %v119
    %319 = vmatpush1.msra.mxu0 %v118
    %320 = vmatprep.subr.mxu0 %v117
    %321 = vmatpush1.msra.mxu0 %v116
    %322 = vmatprep.subr.mxu0 %v115
    %323 = vmatpush1.msra.mxu0 %v114
    %324 = vmatprep.subr.mxu0 %v177
    %325 = vmatpush2.msra.mxu0 %v176
    %326 = vmatprep.subr.mxu0 %v175
    %327 = vmatpush2.msra.mxu0 %v174
    %328 = vmatprep.subr.mxu0 %v173
    %329 = vmatpush2.msra.mxu0 %v172
    %330 = vmatprep.subr.mxu0 %v171
    %331 = vmatpush2.msra.mxu0 %v170
    %332 = vmatprep.subr.mxu0 %v169
    %333 = vmatpush2.msra.mxu0 %v168
    %334 = vmatprep.subr.mxu0 %v167
    %335 = vmatpush2.msra.mxu0 %v166
    %336 = vmatprep.subr.mxu0 %v165
    %337 = vmatpush2.msra.mxu0 %v164
    %338 = vmatprep.subr.mxu0 %v163
    %339 = vmatpush2.msra.mxu0 %v162
    %340 = vmatprep.subr.mxu0 %v161
    %341 = vmatpush2.msra.mxu0 %v160
    %342 = vmatprep.subr.mxu0 %v159
    %343 = vmatpush2.msra.mxu0 %v158
    %344 = vmatprep.subr.mxu0 %v157
    %345 = vmatpush2.msra.mxu0 %v156
    %346 = vmatprep.subr.mxu0 %v155
    %347 = vmatpush2.msra.mxu0 %v154
    %348 = vmatprep.subr.mxu0 %v153
    %349 = vmatpush2.msra.mxu0 %v152
    %350 = vmatprep.subr.mxu0 %v151
    %351 = vmatpush2.msra.mxu0 %v150
    %352 = vmatprep.subr.mxu0 %v149
    %353 = vmatpush2.msra.mxu0 %v148
    %354 = vmatprep.subr.mxu0 %v147
    %355 = vmatpush2.msra.mxu0 %v146
    %356 = vmatprep.mubr.f32.mxu0 %v19
    %357 = vmatmul.mubr.f32.gmra.mxu0 %v18
    %v358 = vpop.f32.mrf.mxu0
    %v359 = vadd.f32 0.0, %v358
    %v360 = vpop.f32.mrf.mxu0
    %v361 = vadd.f32 0.0, %v360
    %362 = vmatprep.mubr.f32.mxu0 %v21
    %363 = vmatmul.mubr.f32.gmra.mxu0 %v20
    %v364 = vpop.f32.mrf.mxu0
    %v365 = vadd.f32 0.0, %v364
    %v366 = vpop.f32.mrf.mxu0
    %v367 = vadd.f32 0.0, %v366
    %368 = vmatprep.mubr.f32.mxu0 %v23
    %369 = vmatmul.mubr.f32.gmra.mxu0 %v22
    %v370 = vpop.f32.mrf.mxu0
    %v371 = vadd.f32 0.0, %v370
    %v372 = vpop.f32.mrf.mxu0
    %v373 = vadd.f32 0.0, %v372
    %374 = vmatprep.mubr.f32.mxu0 %v25
    %375 = vmatmul.mubr.f32.gmra.mxu0 %v24
    %v376 = vpop.f32.mrf.mxu0
    %v377 = vadd.f32 0.0, %v376
    %v378 = vpop.f32.mrf.mxu0
    %v379 = vadd.f32 0.0, %v378
    %380 = vmatprep.mubr.f32.mxu0 %v27
    %381 = vmatmul.mubr.f32.gmra.mxu0 %v26
    %v382 = vpop.f32.mrf.mxu0
    %v383 = vadd.f32 0.0, %v382
    %v384 = vpop.f32.mrf.mxu0
    %v385 = vadd.f32 0.0, %v384
    %386 = vmatprep.mubr.f32.mxu0 %v29
    %387 = vmatmul.mubr.f32.gmra.mxu0 %v28
    %v388 = vpop.f32.mrf.mxu0
    %v389 = vadd.f32 0.0, %v388
    %v390 = vpop.f32.mrf.mxu0
    %v391 = vadd.f32 0.0, %v390
    %392 = vmatprep.mubr.f32.mxu0 %v31
    %393 = vmatmul.mubr.f32.gmra.mxu0 %v30
    %v394 = vpop.f32.mrf.mxu0
    %v395 = vadd.f32 0.0, %v394
    %v396 = vpop.f32.mrf.mxu0
    %v397 = vadd.f32 0.0, %v396
    %398 = vmatprep.mubr.f32.mxu0 %v33
    %399 = vmatmul.mubr.f32.gmra.mxu0 %v32
    %v400 = vpop.f32.mrf.mxu0
    %v401 = vadd.f32 0.0, %v400
    %v402 = vpop.f32.mrf.mxu0
    %v403 = vadd.f32 0.0, %v402
    %404 = vmatprep.mubr.f32.mxu0 %v269
    %405 = vmatmul.mubr.f32.gmra.mxu0 %v268
    %v406 = vpop.f32.mrf.mxu0
    %v407 = vadd.f32 0.0, %v406
    %v408 = vpop.f32.mrf.mxu0
    %v409 = vadd.f32 0.0, %v408
    %410 = vmatprep.mubr.f32.mxu0 %v271
    %411 = vmatmul.mubr.f32.gmra.mxu0 %v270
    %v412 = vpop.f32.mrf.mxu0
    %v413 = vadd.f32 0.0, %v412
    %v414 = vpop.f32.mrf.mxu0
    %v415 = vadd.f32 0.0, %v414
    %416 = vmatprep.mubr.f32.mxu0 %v273
    %417 = vmatmul.mubr.f32.gmra.mxu0 %v272
    %v418 = vpop.f32.mrf.mxu0
    %v419 = vadd.f32 0.0, %v418
    %v420 = vpop.f32.mrf.mxu0
    %v421 = vadd.f32 0.0, %v420
    %422 = vmatprep.mubr.f32.mxu0 %v275
    %423 = vmatmul.mubr.f32.gmra.mxu0 %v274
    %v424 = vpop.f32.mrf.mxu0
    %v425 = vadd.f32 0.0, %v424
    %v426 = vpop.f32.mrf.mxu0
    %v427 = vadd.f32 0.0, %v426
    %428 = vmatprep.mubr.f32.mxu0 %v277
    %429 = vmatmul.mubr.f32.gmra.mxu0 %v276
    %v430 = vpop.f32.mrf.mxu0
    %v431 = vadd.f32 0.0, %v430
    %v432 = vpop.f32.mrf.mxu0
    %v433 = vadd.f32 0.0, %v432
    %434 = vmatprep.mubr.f32.mxu0 %v279
    %435 = vmatmul.mubr.f32.gmra.mxu0 %v278
    %v436 = vpop.f32.mrf.mxu0
    %v437 = vadd.f32 0.0, %v436
    %v438 = vpop.f32.mrf.mxu0
    %v439 = vadd.f32 0.0, %v438
    %440 = vmatprep.mubr.f32.mxu0 %v281
    %441 = vmatmul.mubr.f32.gmra.mxu0 %v280
    %v442 = vpop.f32.mrf.mxu0
    %v443 = vadd.f32 0.0, %v442
    %v444 = vpop.f32.mrf.mxu0
    %v445 = vadd.f32 0.0, %v444
    %446 = vmatprep.mubr.f32.mxu0 %v283
    %447 = vmatmul.mubr.f32.gmra.mxu0 %v282
    %v448 = vpop.f32.mrf.mxu0
    %v449 = vadd.f32 0.0, %v448
    %v450 = vpop.f32.mrf.mxu0
    %v451 = vadd.f32 0.0, %v450
    %452 = vmatprep.mubr.f32.mxu0 %v285
    %453 = vmatmul.mubr.f32.gmra.mxu0 %v284
    %v454 = vpop.f32.mrf.mxu0
    %v455 = vadd.f32 0.0, %v454
    %v456 = vpop.f32.mrf.mxu0
    %v457 = vadd.f32 0.0, %v456
    %458 = vmatprep.mubr.f32.mxu0 %v287
    %459 = vmatmul.mubr.f32.gmra.mxu0 %v286
    %v460 = vpop.f32.mrf.mxu0
    %v461 = vadd.f32 0.0, %v460
    %v462 = vpop.f32.mrf.mxu0
    %v463 = vadd.f32 0.0, %v462
    %464 = vmatprep.mubr.f32.mxu0 %v289
    %465 = vmatmul.mubr.f32.gmra.mxu0 %v288
    %v466 = vpop.f32.mrf.mxu0
    %v467 = vadd.f32 0.0, %v466
    %v468 = vpop.f32.mrf.mxu0
    %v469 = vadd.f32 0.0, %v468
    %470 = vmatprep.mubr.f32.mxu0 %v291
    %471 = vmatmul.mubr.f32.gmra.mxu0 %v290
    %v472 = vpop.f32.mrf.mxu0
    %v473 = vadd.f32 0.0, %v472
    %v474 = vpop.f32.mrf.mxu0
    %v475 = vadd.f32 0.0, %v474
    %476 = vdwg.mxu0
    %vm477 = vcmask 261120
    %v479 = vsel %vm477, %v229, 0
    %v482 = vsel %vm477, %v231, 0
    %v485 = vsel %vm477, %v233, 0
    %v488 = vsel %vm477, %v235, 0
    %v491 = vsel %vm477, %v237, 0
    %v494 = vsel %vm477, %v239, 0
    %v497 = vsel %vm477, %v241, 0
    %v500 = vsel %vm477, %v243, 0
    %v503 = vsel %vm477, %v245, 0
    %v506 = vsel %vm477, %v247, 0
    %v509 = vsel %vm477, %v249, 0
    %v512 = vsel %vm477, %v251, 0
    %v515 = vsel %vm477, %v253, 0
    %v518 = vsel %vm477, %v255, 0
    %v521 = vsel %vm477, %v257, 0
    %v524 = vsel %vm477, %v259, 0
    %v527 = vsel %vm477, %v261, 0
    %v530 = vsel %vm477, %v263, 0
    %v533 = vsel %vm477, %v265, 0
    %v536 = vsel %vm477, %v267, 0
    %538 = vmatprep.subr.mxu0 %v451
    %539 = vmatpush1.msra.mxu0 %v449
    %540 = vmatprep.subr.mxu0 %v445
    %541 = vmatpush1.msra.mxu0 %v443
    %542 = vmatprep.subr.mxu0 %v439
    %543 = vmatpush1.msra.mxu0 %v437
    %544 = vmatprep.subr.mxu0 %v433
    %545 = vmatpush1.msra.mxu0 %v431
    %546 = vmatprep.subr.mxu0 %v427
    %547 = vmatpush1.msra.mxu0 %v425
    %548 = vmatprep.subr.mxu0 %v421
    %549 = vmatpush1.msra.mxu0 %v419
    %550 = vmatprep.subr.mxu0 %v415
    %551 = vmatpush1.msra.mxu0 %v413
    %552 = vmatprep.subr.mxu0 %v409
    %553 = vmatpush1.msra.mxu0 %v407
    %554 = vmatprep.subr.mxu0 %v403
    %555 = vmatpush1.msra.mxu0 %v401
    %556 = vmatprep.subr.mxu0 %v397
    %557 = vmatpush1.msra.mxu0 %v395
    %558 = vmatprep.subr.mxu0 %v391
    %559 = vmatpush1.msra.mxu0 %v389
    %560 = vmatprep.subr.mxu0 %v385
    %561 = vmatpush1.msra.mxu0 %v383
    %562 = vmatprep.subr.mxu0 %v379
    %563 = vmatpush1.msra.mxu0 %v377
    %564 = vmatprep.subr.mxu0 %v373
    %565 = vmatpush1.msra.mxu0 %v371
    %566 = vmatprep.subr.mxu0 %v367
    %567 = vmatpush1.msra.mxu0 %v365
    %568 = vmatprep.subr.mxu0 %v361
    %569 = vmatpush1.msra.mxu0 %v359
    %570 = vmatprep.subr.mxu0 0.0
    %571 = vmatpush2.msra.mxu0 0.0
    %572 = vmatprep.subr.mxu0 0.0
    %573 = vmatpush2.msra.mxu0 0.0
    %574 = vmatprep.subr.mxu0 0.0
    %575 = vmatpush2.msra.mxu0 0.0
    %576 = vmatprep.subr.mxu0 0.0
    %577 = vmatpush2.msra.mxu0 0.0
    %578 = vmatprep.subr.mxu0 0.0
    %579 = vmatpush2.msra.mxu0 0.0
    %580 = vmatprep.subr.mxu0 0.0
    %581 = vmatpush2.msra.mxu0 0.0
    %582 = vmatprep.subr.mxu0 0.0
    %583 = vmatpush2.msra.mxu0 0.0
    %584 = vmatprep.subr.mxu0 0.0
    %585 = vmatpush2.msra.mxu0 0.0
    %586 = vmatprep.subr.mxu0 0.0
    %587 = vmatpush2.msra.mxu0 0.0
    %588 = vmatprep.subr.mxu0 0.0
    %589 = vmatpush2.msra.mxu0 0.0
    %590 = vmatprep.subr.mxu0 0.0
    %591 = vmatpush2.msra.mxu0 0.0
    %592 = vmatprep.subr.mxu0 0.0
    %593 = vmatpush2.msra.mxu0 0.0
    %594 = vmatprep.subr.mxu0 %v475
    %595 = vmatpush2.msra.mxu0 %v473
    %596 = vmatprep.subr.mxu0 %v469
    %597 = vmatpush2.msra.mxu0 %v467
    %598 = vmatprep.subr.mxu0 %v463
    %599 = vmatpush2.msra.mxu0 %v461
    %600 = vmatprep.subr.mxu0 %v457
    %601 = vmatpush2.msra.mxu0 %v455
    %602 = vmatprep.mubr.f32.mxu0 %v479
    %603 = vmatmul.mubr.f32.gmra.mxu0 %v228
    %v604 = vpop.f32.mrf.mxu0
    %v605 = vadd.f32 0.0, %v604
    %v606 = vpop.f32.mrf.mxu0
    %v607 = vadd.f32 0.0, %v606
    %608 = vmatprep.mubr.f32.mxu0 %v482
    %609 = vmatmul.mubr.f32.gmra.mxu0 %v230
    %v610 = vpop.f32.mrf.mxu0
    %v611 = vadd.f32 0.0, %v610
    %v612 = vpop.f32.mrf.mxu0
    %v613 = vadd.f32 0.0, %v612
    %614 = vmatprep.mubr.f32.mxu0 %v485
    %615 = vmatmul.mubr.f32.gmra.mxu0 %v232
    %v616 = vpop.f32.mrf.mxu0
    %v617 = vadd.f32 0.0, %v616
    %v618 = vpop.f32.mrf.mxu0
    %v619 = vadd.f32 0.0, %v618
    %620 = vmatprep.mubr.f32.mxu0 %v488
    %621 = vmatmul.mubr.f32.gmra.mxu0 %v234
    %v622 = vpop.f32.mrf.mxu0
    %v623 = vadd.f32 0.0, %v622
    %v624 = vpop.f32.mrf.mxu0
    %v625 = vadd.f32 0.0, %v624
    %626 = vmatprep.mubr.f32.mxu0 %v491
    %627 = vmatmul.mubr.f32.gmra.mxu0 %v236
    %v628 = vpop.f32.mrf.mxu0
    %v629 = vadd.f32 0.0, %v628
    %v630 = vpop.f32.mrf.mxu0
    %v631 = vadd.f32 0.0, %v630
    %632 = vmatprep.mubr.f32.mxu0 %v494
    %633 = vmatmul.mubr.f32.gmra.mxu0 %v238
    %v634 = vpop.f32.mrf.mxu0
    %v635 = vadd.f32 0.0, %v634
    %v636 = vpop.f32.mrf.mxu0
    %v637 = vadd.f32 0.0, %v636
    %638 = vmatprep.mubr.f32.mxu0 %v497
    %639 = vmatmul.mubr.f32.gmra.mxu0 %v240
    %v640 = vpop.f32.mrf.mxu0
    %v641 = vadd.f32 0.0, %v640
    %v642 = vpop.f32.mrf.mxu0
    %v643 = vadd.f32 0.0, %v642
    %644 = vmatprep.mubr.f32.mxu0 %v500
    %645 = vmatmul.mubr.f32.gmra.mxu0 %v242
    %v646 = vpop.f32.mrf.mxu0
    %v647 = vadd.f32 0.0, %v646
    %v648 = vpop.f32.mrf.mxu0
    %v649 = vadd.f32 0.0, %v648
    %650 = vmatprep.mubr.f32.mxu0 %v503
    %651 = vmatmul.mubr.f32.gmra.mxu0 %v244
    %v652 = vpop.f32.mrf.mxu0
    %v653 = vadd.f32 0.0, %v652
    %v654 = vpop.f32.mrf.mxu0
    %v655 = vadd.f32 0.0, %v654
    %656 = vmatprep.mubr.f32.mxu0 %v506
    %657 = vmatmul.mubr.f32.gmra.mxu0 %v246
    %v658 = vpop.f32.mrf.mxu0
    %v659 = vadd.f32 0.0, %v658
    %v660 = vpop.f32.mrf.mxu0
    %v661 = vadd.f32 0.0, %v660
    %662 = vmatprep.mubr.f32.mxu0 %v509
    %663 = vmatmul.mubr.f32.gmra.mxu0 %v248
    %v664 = vpop.f32.mrf.mxu0
    %v665 = vadd.f32 0.0, %v664
    %v666 = vpop.f32.mrf.mxu0
    %v667 = vadd.f32 0.0, %v666
    %668 = vmatprep.mubr.f32.mxu0 %v512
    %669 = vmatmul.mubr.f32.gmra.mxu0 %v250
    %v670 = vpop.f32.mrf.mxu0
    %v671 = vadd.f32 0.0, %v670
    %v672 = vpop.f32.mrf.mxu0
    %v673 = vadd.f32 0.0, %v672
    %674 = vmatprep.mubr.f32.mxu0 %v515
    %675 = vmatmul.mubr.f32.gmra.mxu0 %v252
    %v676 = vpop.f32.mrf.mxu0
    %v677 = vadd.f32 0.0, %v676
    %v678 = vpop.f32.mrf.mxu0
    %v679 = vadd.f32 0.0, %v678
    %680 = vmatprep.mubr.f32.mxu0 %v518
    %681 = vmatmul.mubr.f32.gmra.mxu0 %v254
    %v682 = vpop.f32.mrf.mxu0
    %v683 = vadd.f32 0.0, %v682
    %v684 = vpop.f32.mrf.mxu0
    %v685 = vadd.f32 0.0, %v684
    %686 = vmatprep.mubr.f32.mxu0 %v521
    %687 = vmatmul.mubr.f32.gmra.mxu0 %v256
    %v688 = vpop.f32.mrf.mxu0
    %v689 = vadd.f32 0.0, %v688
    %v690 = vpop.f32.mrf.mxu0
    %v691 = vadd.f32 0.0, %v690
    %692 = vmatprep.mubr.f32.mxu0 %v524
    %693 = vmatmul.mubr.f32.gmra.mxu0 %v258
    %v694 = vpop.f32.mrf.mxu0
    %v695 = vadd.f32 0.0, %v694
    %v696 = vpop.f32.mrf.mxu0
    %v697 = vadd.f32 0.0, %v696
    %698 = vmatprep.mubr.f32.mxu0 %v527
    %699 = vmatmul.mubr.f32.gmra.mxu0 %v260
    %v700 = vpop.f32.mrf.mxu0
    %v701 = vadd.f32 0.0, %v700
    %v702 = vpop.f32.mrf.mxu0
    %v703 = vadd.f32 0.0, %v702
    %704 = vmatprep.mubr.f32.mxu0 %v530
    %705 = vmatmul.mubr.f32.gmra.mxu0 %v262
    %v706 = vpop.f32.mrf.mxu0
    %v707 = vadd.f32 0.0, %v706
    %v708 = vpop.f32.mrf.mxu0
    %v709 = vadd.f32 0.0, %v708
    %710 = vmatprep.mubr.f32.mxu0 %v533
    %711 = vmatmul.mubr.f32.gmra.mxu0 %v264
    %v712 = vpop.f32.mrf.mxu0
    %v713 = vadd.f32 0.0, %v712
    %v714 = vpop.f32.mrf.mxu0
    %v715 = vadd.f32 0.0, %v714
    %716 = vmatprep.mubr.f32.mxu0 %v536
    %717 = vmatmul.mubr.f32.gmra.mxu0 %v266
    %v718 = vpop.f32.mrf.mxu0
    %v719 = vadd.f32 0.0, %v718
    %v720 = vpop.f32.mrf.mxu0
    %v721 = vadd.f32 0.0, %v720
    %722 = vdwg.mxu0
    %v723 = vmul.f32 %v605, %v629
    %v724 = vmul.f32 %v607, %v631
    %v725 = vmul.f32 %v611, %v635
    %v726 = vmul.f32 %v613, %v637
    %v727 = vmul.f32 %v617, %v641
    %v728 = vmul.f32 %v619, %v643
    %v729 = vmul.f32 %v623, %v647
    %v730 = vmul.f32 %v625, %v649
    %v731 = vmul.f32 %v723, 0.015625
    %v732 = vmul.f32 %v724, 0.015625
    %v733 = vmul.f32 %v725, 0.015625
    %v734 = vmul.f32 %v726, 0.015625
    %v735 = vmul.f32 %v727, 0.015625
    %v736 = vmul.f32 %v728, 0.015625
    %v737 = vmul.f32 %v729, 0.015625
    %v738 = vmul.f32 %v730, 0.015625
    %v739 = vsub.f32 %v701, %v731
    %v740 = vsub.f32 %v703, %v732
    %v741 = vsub.f32 %v707, %v733
    %v742 = vsub.f32 %v709, %v734
    %v743 = vsub.f32 %v713, %v735
    %v744 = vsub.f32 %v715, %v736
    %v745 = vsub.f32 %v719, %v737
    %v746 = vsub.f32 %v721, %v738
    %v747 = vmul.f32 %v739, %v739
    %v748 = vmul.f32 %v740, %v740
    %v749 = vmul.f32 %v741, %v741
    %v750 = vmul.f32 %v742, %v742
    %v751 = vmul.f32 %v743, %v743
    %v752 = vmul.f32 %v744, %v744
    %v753 = vmul.f32 %v745, %v745
    %v754 = vmul.f32 %v746, %v746
    %v755 = vmul.f32 %v605, %v605
    %v756 = vmul.f32 %v607, %v607
    %v757 = vmul.f32 %v611, %v611
    %v758 = vmul.f32 %v613, %v613
    %v759 = vmul.f32 %v617, %v617
    %v760 = vmul.f32 %v619, %v619
    %v761 = vmul.f32 %v623, %v623
    %v762 = vmul.f32 %v625, %v625
    %v763 = vmul.f32 %v755, 0.015625
    %v764 = vmul.f32 %v756, 0.015625
    %v765 = vmul.f32 %v757, 0.015625
    %v766 = vmul.f32 %v758, 0.015625
    %v767 = vmul.f32 %v759, 0.015625
    %v768 = vmul.f32 %v760, 0.015625
    %v769 = vmul.f32 %v761, 0.015625
    %v770 = vmul.f32 %v762, 0.015625
    %v771 = vsub.f32 %v653, %v763
    %v772 = vsub.f32 %v655, %v764
    %v773 = vsub.f32 %v659, %v765
    %v774 = vsub.f32 %v661, %v766
    %v775 = vsub.f32 %v665, %v767
    %v776 = vsub.f32 %v667, %v768
    %v777 = vsub.f32 %v671, %v769
    %v778 = vsub.f32 %v673, %v770
    %v779 = vmul.f32 %v629, %v629
    %v780 = vmul.f32 %v631, %v631
    %v781 = vmul.f32 %v635, %v635
    %v782 = vmul.f32 %v637, %v637
    %v783 = vmul.f32 %v641, %v641
    %v784 = vmul.f32 %v643, %v643
    %v785 = vmul.f32 %v647, %v647
    %v786 = vmul.f32 %v649, %v649
    %v787 = vmul.f32 %v779, 0.015625
    %v788 = vmul.f32 %v780, 0.015625
    %v789 = vmul.f32 %v781, 0.015625
    %v790 = vmul.f32 %v782, 0.015625
    %v791 = vmul.f32 %v783, 0.015625
    %v792 = vmul.f32 %v784, 0.015625
    %v793 = vmul.f32 %v785, 0.015625
    %v794 = vmul.f32 %v786, 0.015625
    %v795 = vsub.f32 %v677, %v787
    %v796 = vsub.f32 %v679, %v788
    %v797 = vsub.f32 %v683, %v789
    %v798 = vsub.f32 %v685, %v790
    %v799 = vsub.f32 %v689, %v791
    %v800 = vsub.f32 %v691, %v792
    %v801 = vsub.f32 %v695, %v793
    %v802 = vsub.f32 %v697, %v794
    %v803 = vmul.f32 %v771, %v795
    %v804 = vmul.f32 %v772, %v796
    %v805 = vmul.f32 %v773, %v797
    %v806 = vmul.f32 %v774, %v798
    %v807 = vmul.f32 %v775, %v799
    %v808 = vmul.f32 %v776, %v800
    %v809 = vmul.f32 %v777, %v801
    %v810 = vmul.f32 %v778, %v802
    %v811 = vadd.f32 %v803, 1e-05
    %v812 = vadd.f32 %v804, 1e-05
    %v813 = vadd.f32 %v805, 1e-05
    %v814 = vadd.f32 %v806, 1e-05
    %v815 = vadd.f32 %v807, 1e-05
    %v816 = vadd.f32 %v808, 1e-05
    %v817 = vadd.f32 %v809, 1e-05
    %v818 = vadd.f32 %v810, 1e-05
    %v819 = vrcp.pop %v811
    %v820 = vrcp.pop %v812
    %v821 = vrcp.pop %v813
    %v822 = vrcp.pop %v814
    %v823 = vrcp.pop %v815
    %v824 = vrcp.pop %v816
    %v825 = vrcp.pop %v817
    %v826 = vrcp.pop %v818
    %v827 = vmul.f32 %v811, %v819
    %v828 = vmul.f32 %v812, %v820
    %v829 = vmul.f32 %v813, %v821
    %v830 = vmul.f32 %v814, %v822
    %v831 = vmul.f32 %v815, %v823
    %v832 = vmul.f32 %v816, %v824
    %v833 = vmul.f32 %v817, %v825
    %v834 = vmul.f32 %v818, %v826
    %v835 = vsub.f32 2.0, %v827
    %v836 = vsub.f32 2.0, %v828
    %v837 = vsub.f32 2.0, %v829
    %v838 = vsub.f32 2.0, %v830
    %v839 = vsub.f32 2.0, %v831
    %v840 = vsub.f32 2.0, %v832
    %v841 = vsub.f32 2.0, %v833
    %v842 = vsub.f32 2.0, %v834
    %v843 = vmul.f32 %v819, %v835
    %v844 = vmul.f32 %v820, %v836
    %v845 = vmul.f32 %v821, %v837
    %v846 = vmul.f32 %v822, %v838
    %v847 = vmul.f32 %v823, %v839
    %v848 = vmul.f32 %v824, %v840
    %v849 = vmul.f32 %v825, %v841
    %v850 = vmul.f32 %v826, %v842
    %v851 = vmul.f32 %v747, %v843
    %v852 = vmul.f32 %v748, %v844
    %v853 = vmul.f32 %v749, %v845
    %v854 = vmul.f32 %v750, %v846
    %v855 = vmul.f32 %v751, %v847
    %v856 = vmul.f32 %v752, %v848
    %v857 = vmul.f32 %v753, %v849
    %v858 = vmul.f32 %v754, %v850
    %v859 = vadd.f32 %v851, %v852
    %v860 = vadd.f32 %v859, %v853
    %v861 = vadd.f32 %v860, %v854
    %v862 = vadd.f32 %v861, %v855
    %v863 = vadd.f32 %v862, %v856
    %v864 = vadd.f32 %v863, %v857
    %v865 = vadd.f32 %v864, %v858
    %866 = vadd.xlane.f32.xlu0 %v865
    %v867 = vpop.xlane.xlu0 %866
    %v868 = vrot.slane %v867, 4
    %v869 = vadd.f32 %v867, %v868
    %v870 = vrot.slane %v869, 2
    %v871 = vadd.f32 %v869, %v870
    %v872 = vrot.slane %v871, 1
    %v873 = vadd.f32 %v871, %v872
    %s874 = vtos %v873
    %s875 = ssub.f32 0.0, %s874
    %s876 = smul.f32 %s875, 0.00014814814
    %s877 = scalar_lea.smem [#allocation2], 0
    %878 = sst [smem:[%s877]] %s876
    // Predicated region
    $region18: #{cc_loss_pallas.1} parent=1 // pred_check
      _
    $region19: #{cc_loss_pallas.1} parent=1 // pred_check_branch
      %880 = sbr.rel (0) target = $region21
    $region20: #{cc_loss_pallas.1} parent=1 // pred_region
      %s882 = ssub.s32 16, 16
      %883 = vsyncadd [#allocation3], %s882
      %886 = dma.smem_to_hbm [#allocation2], 16, %s4, [#allocation3]
    $region21: #{cc_loss_pallas.1} parent=1 // pred_fallthru
      _
    // Predicated region
    $region22: #{cc_loss_pallas.1} parent=1 // pred_check
      _
    $region23: #{cc_loss_pallas.1} parent=1 // pred_check_branch
      %888 = sbr.rel (0) target = $region25
    $region24: #{cc_loss_pallas.1} parent=1 // pred_region
      %889 = dma.done [#allocation3], 16
    $region25: #{cc_loss_pallas.1} parent=1 // pred_fallthru
      _
    %890 = sfence
    %891 = vsyncpa [#allocation3], 1

</llo_original>
